<compile_context>
chip_gen: v5e
topology: v5e:2x2
jax: 0.10.0
libtpu: 0.0.40
codegen_flags: <defaults>
</compile_context>

<pallas_src>
import functools

import jax
import jax.numpy as jnp
from jax.experimental import pallas as pl
from jax.experimental.pallas import tpu as pltpu


# ----------------------------------------------------------------------------- helpers
def _round_up(x, m):
    return (x + m - 1) // m * m


def _vmem_limit_bytes():
    """Generation-aware VMEM limit: ~3/4 of physical per-core VMEM
    (v5e/v6e: 128 MiB -> 96 MiB, v7x: 64 MiB -> 48 MiB)."""
    try:
        cap = int(pltpu.get_tpu_info().vmem_capacity_bytes)
    except Exception:
        cap = 64 * 1024 * 1024          # conservative fallback
    return max(32 * 1024 * 1024, (cap * 3) // 4)


def _pick_batch_block(n, h, w, c, cp, coutp, kh, kw, pad, vmem_budget_bytes):
    """Largest nb dividing n whose per-grid-step VMEM footprint fits the budget,
    while keeping >= 2 grid steps (v7x shards the 'parallel' axis over 2 TCs;
    a length-1 grid would idle one of them)."""
    hw = h * w

    def step_bytes(nb):
        b = 2 * (nb * hw * c * 4) * 2                      # x, yz f32 blocks, double-buffered
        b += (nb * hw * coutp * 4) * 2                     # f32 output block, double-buffered
        b += nb * (h + 2 * pad) * (w + 2 * pad) * cp * 4   # padded staging scratch (f32)
        b += 2 * (nb * hw * kw * cp * 2)                   # ~2 live bf16 im2col patches
        b += nb * hw * coutp * 4                           # value-carried f32 accumulator
        b += 2 * (kh * kw * cp * coutp * 2 + coutp * 4)    # weights + shift (double-buffered)
        return b

    best = 1
    for nb in range(1, n + 1):
        if n % nb:
            continue
        if n >= 2 and (n // nb) < 2:
            continue
        if step_bytes(nb) <= vmem_budget_bytes:
            best = nb
    return best


# ----------------------------------------------------------------------------- kernel
def _afb_fused_kernel(x_ref, yz_ref, w_ref, shift_ref, o_ref, xpad_ref,
                      *, e, pad, kh, kw):
    """Fused Simam re-weighting + 3x3 conv + folded BN + ReLU.

    x_ref:     (nb, H, W, C)          f32   original-resolution input
    yz_ref:    (nb, H, W, C)          f32   pre-summed upsampled y + z
    w_ref:     (KH, KW*Cp, Coutp)     bf16  conv weights, BN scale folded, tap-fused
    shift_ref: (1, Coutp)             f32   folded BN shift
    o_ref:     (nb, H, W, Coutp)      f32   output (lane-dense, Cout padded to 128)
    xpad_ref:  (nb, H+2p, W+2p, Cp)   f32   VMEM staging buffer (zero halo + lane pad)
    """
    nb, h, w, c = x_ref.shape
    cp = xpad_ref.shape[-1]
    coutp = o_ref.shape[-1]
    hw = h * w
    m = nb * hw

    # ---- stage 1: xyz = x + (y_up + z_up), Simam, re-weighted blend (f32) ----
    x = x_ref[...]
    yz = yz_ref[...]
    xyz = (x + yz).reshape(nb, hw, c)

    mu = jnp.mean(xyz, axis=1, keepdims=True)                  # (nb, 1, C)
    d2 = (xyz - mu) ** 2
    ssum = jnp.sum(d2, axis=1, keepdims=True)                  # (nb, 1, C)
    # Reciprocal of the tiny per-channel denom -> the full-size op is a multiply.
    inv_denom = 1.0 / (4.0 * (ssum * (1.0 / float(hw - 1)) + e))
    ys = d2 * inv_denom + 0.5
    sig = 1.0 / (1.0 + jnp.exp(-ys))                           # sigmoid (EUP exp)
    wei = xyz * sig
    xo = (x.reshape(nb, hw, c) * wei
          + yz.reshape(nb, hw, c) * ((1.0 - wei) * 0.5))       # (nb, H*W, C)

    # ---- stage 2: stage xo into the zero-halo / zero-lane-padded VMEM buffer ----
    # Re-zeroed every step (scratch is per-core and 'parallel' steps may be
    # sharded, so a program_id==0 init would be unsafe); cheap VMEM-only pass.
    xpad_ref[...] = jnp.zeros_like(xpad_ref)
    xpad_ref[:, pad:pad + h, pad:pad + w, :c] = xo.reshape(nb, h, w, c)

    # ---- stage 3: 3x3 conv, KW taps fused into the contraction, bf16 MXU ----
    acc = None
    for dy in range(kh):
        cols = [
            xpad_ref[:, dy:dy + h, dx:dx + w, :].reshape(m, cp)
            for dx in range(kw)
        ]
        patch = jnp.concatenate(cols, axis=-1).astype(jnp.bfloat16)   # (m, KW*Cp)
        part = jnp.dot(patch, w_ref[dy], preferred_element_type=jnp.float32)
        acc = part if acc is None else acc + part

    # Eval-mode BN: scale already folded into the weights; add shift, then ReLU.
    yv = jnp.maximum(acc + shift_ref[0], 0.0)
    o_ref[...] = yv.reshape(nb, h, w, coutp).astype(o_ref.dtype)


# ----------------------------------------------------------------------------- wrapper
def afb_forward(x, y, z, conv_weight, bn_gamma, bn_beta, bn_mean, bn_var,
                *, scale_factor1, scale_factor2, e=1e-4, bn_eps=1e-5):
    """AFB forward.  x,y,z NCHW f32; conv_weight (C,C,3,3); BN params (C,)."""
    n, c, h, w = x.shape
    cout, cin, kh, kw = conv_weight.shape
    assert cin == c and cout == c
    pad = (kh - 1) // 2                     # AFB conv: kernel 3, stride 1, pad 1

    f32 = jnp.float32
    # Single boundary transposes: NCHW -> NHWC (channels on the 128-lane axis).
    x_nhwc = jnp.transpose(x, (0, 2, 3, 1)).astype(f32)
    y_nhwc = jnp.transpose(y, (0, 2, 3, 1)).astype(f32)
    z_nhwc = jnp.transpose(z, (0, 2, 3, 1)).astype(f32)

    # Bilinear upsample (matches F.interpolate(..., align_corners=False) for
    # integer up-scales; antialias has no effect when upsampling).  The two
    # resized tensors are summed once so the kernel reads a single tensor.
    assert int(y.shape[2] * scale_factor1) == h and int(y.shape[3] * scale_factor1) == w
    assert int(z.shape[2] * scale_factor2) == h and int(z.shape[3] * scale_factor2) == w
    yz_up = (jax.image.resize(y_nhwc, (n, h, w, c), method="bilinear")
             + jax.image.resize(z_nhwc, (n, h, w, c), method="bilinear"))

    # Lane-dense channel padding for the MXU operands / output stores.
    LANE = 128
    cp = _round_up(c, LANE)
    coutp = _round_up(cout, LANE)

    # Fold eval-mode BN scale into the conv weights (f32), lay out as
    # (KH, KW*Cin_pad, Cout_pad): each dy tap is a single deep matmul.
    scale = bn_gamma.astype(f32) / jnp.sqrt(bn_var.astype(f32) + bn_eps)
    shift = bn_beta.astype(f32) - bn_mean.astype(f32) * scale
    w_f = conv_weight.astype(f32) * scale[:, None, None, None]       # (Cout,Cin,KH,KW)
    w_hwio = jnp.transpose(w_f, (2, 3, 1, 0))                        # (KH,KW,Cin,Cout)
    w_hwio = jnp.pad(w_hwio, ((0, 0), (0, 0), (0, cp - c), (0, coutp - cout)))
    w_fused = w_hwio.reshape(kh, kw * cp, coutp).astype(jnp.bfloat16)
    shift_p = jnp.pad(shift, (0, coutp - cout)).reshape(1, coutp)

    vmem_limit = _vmem_limit_bytes()
    nb = _pick_batch_block(n, h, w, c, cp, coutp, kh, kw, pad,
                           vmem_budget_bytes=int(0.7 * vmem_limit))

    kern = functools.partial(_afb_fused_kernel, e=e, pad=pad, kh=kh, kw=kw)
    out_nhwc = pl.pallas_call(
        kern,
        out_shape=jax.ShapeDtypeStruct((n, h, w, coutp), f32),
        grid_spec=pltpu.PrefetchScalarGridSpec(
            num_scalar_prefetch=0,
            grid=(n // nb,),
            in_specs=[
                pl.BlockSpec((nb, h, w, c), lambda b: (b, 0, 0, 0)),       # x
                pl.BlockSpec((nb, h, w, c), lambda b: (b, 0, 0, 0)),       # y_up + z_up
                pl.BlockSpec((kh, kw * cp, coutp), lambda b: (0, 0, 0)),   # weights
                pl.BlockSpec((1, coutp), lambda b: (0, 0)),                # BN shift
            ],
            out_specs=pl.BlockSpec((nb, h, w, coutp), lambda b: (b, 0, 0, 0)),
            scratch_shapes=[
                pltpu.VMEM((nb, h + 2 * pad, w + 2 * pad, cp), f32),       # padded xo
            ],
        ),
        compiler_params=pltpu.CompilerParams(
            dimension_semantics=("parallel",),
            vmem_limit_bytes=vmem_limit),
    )(x_nhwc, yz_up, w_fused, shift_p)

    # Drop channel padding, back to PyTorch NCHW layout.
    return jnp.transpose(out_nhwc[..., :cout], (0, 3, 1, 2))


# ----------------------------------------------------------------------------- reference
def _reference(x, y, z, weight, gamma, beta, rmean, rvar, *,
               scale_factor1, scale_factor2, e=1e-4, bn_eps=1e-5):
    n, c, h, w = x.shape
    y_up = jax.image.resize(
        y, (n, c, int(y.shape[2] * scale_factor1), int(y.shape[3] * scale_factor1)),
        method="bilinear")
    z_up = jax.image.resize(
        z, (n, c, int(z.shape[2] * scale_factor2), int(z.shape[3] * scale_factor2)),
        method="bilinear")
    xyz = x + y_up + z_up
    nn = h * w - 1
    mu = jnp.mean(xyz, axis=(2, 3), keepdims=True)
    d2 = (xyz - mu) ** 2
    ys = d2 / (4.0 * (jnp.sum(d2, axis=(2, 3), keepdims=True) / nn + e)) + 0.5
    wei = xyz * jax.nn.sigmoid(ys)
    xo = x * wei + y_up * ((1.0 - wei) / 2.0) + z_up * ((1.0 - wei) / 2.0)

    # conv(3x3, stride 1, pad 1, no bias) + eval-mode BN + ReLU,
    # mirroring the kernel's precision: bf16 operands, f32 accumulation.
    scale = gamma / jnp.sqrt(rvar + bn_eps)
    shift = beta - rmean * scale
    w_f = weight * scale[:, None, None, None]
    xo_b = xo.astype(jnp.bfloat16).astype(jnp.float32)
    w_b = w_f.astype(jnp.bfloat16).astype(jnp.float32)
    out = jax.lax.conv_general_dilated(
        xo_b, w_b, window_strides=(1, 1), padding=((1, 1), (1, 1)),
        dimension_numbers=("NCHW", "OIHW", "NCHW"),
        precision=jax.lax.Precision.HIGHEST)
    out = out + shift[None, :, None, None]
    return jnp.maximum(out, 0.0)


# ----------------------------------------------------------------------------- test
if __name__ == "__main__":
    key = jax.random.PRNGKey(0)
    ks = jax.random.split(key, 8)

    # AFB(scale_factor1=2, scale_factor2=4, channel=64); small spatial sizes.
    N, C, H, W = 2, 64, 16, 16
    s1, s2 = 2, 4

    x = jax.random.normal(ks[0], (N, C, H, W), dtype=jnp.float32)
    y = jax.random.normal(ks[1], (N, C, H // s1, W // s1), dtype=jnp.float32)
    z = jax.random.normal(ks[2], (N, C, H // s2, W // s2), dtype=jnp.float32)
    weight = 0.1 * jax.random.normal(ks[3], (C, C, 3, 3), dtype=jnp.float32)
    gamma = 1.0 + 0.1 * jax.random.normal(ks[4], (C,), dtype=jnp.float32)
    beta = 0.1 * jax.random.normal(ks[5], (C,), dtype=jnp.float32)
    rmean = 0.1 * jax.random.normal(ks[6], (C,), dtype=jnp.float32)
    rvar = jnp.abs(1.0 + 0.1 * jax.random.normal(ks[7], (C,), dtype=jnp.float32))

    out = afb_forward(x, y, z, weight, gamma, beta, rmean, rvar,
                      scale_factor1=s1, scale_factor2=s2)
    out = jax.block_until_ready(out)

    ref = _reference(x, y, z, weight, gamma, beta, rmean, rvar,
                     scale_factor1=s1, scale_factor2=s2)

    assert out.shape == (N, C, H, W), out.shape
    err = float(jnp.max(jnp.abs(out - ref)))
    assert err < 2e-2, err
    print("KERNEL_OK")
</pallas_src>

<mosaic_0001>
module attributes {stable_mosaic.version = 11 : i64} {
  func.func @_afb_fused_kernel(%arg0: i32, %arg1: memref<1x16x16x64xf32, #tpu.memory_space<vmem>>, %arg2: memref<1x16x16x64xf32, #tpu.memory_space<vmem>>, %arg3: memref<3x384x128xbf16, #tpu.memory_space<vmem>>, %arg4: memref<1x128xf32, #tpu.memory_space<vmem>>, %arg5: memref<1x16x16x128xf32, #tpu.memory_space<vmem>>, %arg6: memref<1x18x18x128xf32, #tpu.memory_space<vmem>>) attributes {dimension_semantics = [#tpu.dimension_semantics<parallel>], iteration_bounds = array<i64: 2>, scalar_prefetch = 0 : i64, scratch_operands = 1 : i64, tpu.core_type = #tpu.core_type<tc>, window_params = [{transform_indices = @transform_0, window_bounds = array<i64: 1, 16, 16, 64>}, {transform_indices = @transform_1, window_bounds = array<i64: 1, 16, 16, 64>}, {pipeline_mode = #tpu.pipeline_mode<synchronous>, transform_indices = @transform_2, window_bounds = array<i64: 3, 384, 128>}, {pipeline_mode = #tpu.pipeline_mode<synchronous>, transform_indices = @transform_3, window_bounds = array<i64: 1, 128>}, {transform_indices = @transform_4, window_bounds = array<i64: 1, 16, 16, 128>}]} {
    %c0 = arith.constant 0 : index
    %c0_0 = arith.constant 0 : index
    %c0_1 = arith.constant 0 : index
    %c0_2 = arith.constant 0 : index
    %0 = vector.load %arg1[%c0, %c0_0, %c0_1, %c0_2] : memref<1x16x16x64xf32, #tpu.memory_space<vmem>>, vector<1x16x16x64xf32>
    %c0_3 = arith.constant 0 : index
    %c0_4 = arith.constant 0 : index
    %c0_5 = arith.constant 0 : index
    %c0_6 = arith.constant 0 : index
    %1 = vector.load %arg2[%c0_3, %c0_4, %c0_5, %c0_6] : memref<1x16x16x64xf32, #tpu.memory_space<vmem>>, vector<1x16x16x64xf32>
    %2 = arith.addf %0, %1 : vector<1x16x16x64xf32>
    %3 = vector.shape_cast %2 : vector<1x16x16x64xf32> to vector<1x256x64xf32>
    %cst = arith.constant dense<0.000000e+00> : vector<1x64xf32>
    %4 = vector.multi_reduction <add>, %3, %cst [1] : vector<1x256x64xf32> to vector<1x64xf32>
    %5 = vector.shape_cast %4 : vector<1x64xf32> to vector<1x1x64xf32>
    %cst_7 = arith.constant 2.560000e+02 : f32
    %6 = vector.broadcast %cst_7 : f32 to vector<1x1x64xf32>
    %7 = arith.divf %5, %6 : vector<1x1x64xf32>
    %8 = vector.broadcast %7 : vector<1x1x64xf32> to vector<1x256x64xf32>
    %9 = arith.subf %3, %8 : vector<1x256x64xf32>
    %10 = arith.mulf %9, %9 : vector<1x256x64xf32>
    %cst_8 = arith.constant dense<0.000000e+00> : vector<1x64xf32>
    %11 = vector.multi_reduction <add>, %10, %cst_8 [1] : vector<1x256x64xf32> to vector<1x64xf32>
    %12 = vector.shape_cast %11 : vector<1x64xf32> to vector<1x1x64xf32>
    %cst_9 = arith.constant 0.00392156886 : f32
    %13 = vector.broadcast %cst_9 : f32 to vector<1x1x64xf32>
    %14 = arith.mulf %12, %13 : vector<1x1x64xf32>
    %cst_10 = arith.constant 9.99999974E-5 : f32
    %15 = vector.broadcast %cst_10 : f32 to vector<1x1x64xf32>
    %16 = arith.addf %14, %15 : vector<1x1x64xf32>
    %cst_11 = arith.constant 4.000000e+00 : f32
    %17 = vector.broadcast %cst_11 : f32 to vector<1x1x64xf32>
    %18 = arith.mulf %17, %16 : vector<1x1x64xf32>
    %cst_12 = arith.constant 1.000000e+00 : f32
    %19 = vector.broadcast %cst_12 : f32 to vector<1x1x64xf32>
    %20 = arith.divf %19, %18 : vector<1x1x64xf32>
    %21 = vector.broadcast %20 : vector<1x1x64xf32> to vector<1x256x64xf32>
    %22 = arith.mulf %10, %21 : vector<1x256x64xf32>
    %cst_13 = arith.constant 5.000000e-01 : f32
    %23 = vector.broadcast %cst_13 : f32 to vector<1x256x64xf32>
    %24 = arith.addf %22, %23 : vector<1x256x64xf32>
    %cst_14 = arith.constant 0.000000e+00 : f32
    %25 = vector.broadcast %cst_14 : f32 to vector<1x256x64xf32>
    %26 = arith.subf %25, %24 : vector<1x256x64xf32>
    %27 = math.exp %26 : vector<1x256x64xf32>
    %cst_15 = arith.constant 1.000000e+00 : f32
    %28 = vector.broadcast %cst_15 : f32 to vector<1x256x64xf32>
    %29 = arith.addf %28, %27 : vector<1x256x64xf32>
    %cst_16 = arith.constant 1.000000e+00 : f32
    %30 = vector.broadcast %cst_16 : f32 to vector<1x256x64xf32>
    %31 = arith.divf %30, %29 : vector<1x256x64xf32>
    %32 = arith.mulf %3, %31 : vector<1x256x64xf32>
    %33 = vector.shape_cast %0 : vector<1x16x16x64xf32> to vector<1x256x64xf32>
    %34 = arith.mulf %33, %32 : vector<1x256x64xf32>
    %35 = vector.shape_cast %1 : vector<1x16x16x64xf32> to vector<1x256x64xf32>
    %cst_17 = arith.constant 1.000000e+00 : f32
    %36 = vector.broadcast %cst_17 : f32 to vector<1x256x64xf32>
    %37 = arith.subf %36, %32 : vector<1x256x64xf32>
    %cst_18 = arith.constant 5.000000e-01 : f32
    %38 = vector.broadcast %cst_18 : f32 to vector<1x256x64xf32>
    %39 = arith.mulf %37, %38 : vector<1x256x64xf32>
    %40 = arith.mulf %35, %39 : vector<1x256x64xf32>
    %41 = arith.addf %34, %40 : vector<1x256x64xf32>
    %cst_19 = arith.constant 0.000000e+00 : f32
    %42 = vector.broadcast %cst_19 : f32 to vector<1x18x18x128xf32>
    %c0_20 = arith.constant 0 : index
    %c0_21 = arith.constant 0 : index
    %c0_22 = arith.constant 0 : index
    %c0_23 = arith.constant 0 : index
    %43 = vector.load %arg6[%c0_20, %c0_21, %c0_22, %c0_23] : memref<1x18x18x128xf32, #tpu.memory_space<vmem>>, vector<1x18x18x128xf32>
    tpu.vector_store %arg6[%c0_20, %c0_21, %c0_22, %c0_23], %42 {strides = array<i32>} : memref<1x18x18x128xf32, #tpu.memory_space<vmem>>, vector<1x18x18x128xf32>,
    %44 = vector.shape_cast %41 : vector<1x256x64xf32> to vector<1x16x16x64xf32>
    %c0_24 = arith.constant 0 : index
    %c1 = arith.constant 1 : index
    %c1_25 = arith.constant 1 : index
    %c0_26 = arith.constant 0 : index
    %45 = vector.load %arg6[%c0_24, %c1, %c1_25, %c0_26] : memref<1x18x18x128xf32, #tpu.memory_space<vmem>>, vector<1x16x16x64xf32>
    tpu.vector_store %arg6[%c0_24, %c1, %c1_25, %c0_26], %44 {strides = array<i32>} : memref<1x18x18x128xf32, #tpu.memory_space<vmem>>, vector<1x16x16x64xf32>,
    %c0_27 = arith.constant 0 : index
    %c0_28 = arith.constant 0 : index
    %c0_29 = arith.constant 0 : index
    %c0_30 = arith.constant 0 : index
    %46 = vector.load %arg6[%c0_27, %c0_28, %c0_29, %c0_30] : memref<1x18x18x128xf32, #tpu.memory_space<vmem>>, vector<1x16x16x128xf32>
    %47 = vector.shape_cast %46 : vector<1x16x16x128xf32> to vector<256x128xf32>
    %c0_31 = arith.constant 0 : index
    %c0_32 = arith.constant 0 : index
    %c1_33 = arith.constant 1 : index
    %c0_34 = arith.constant 0 : index
    %48 = vector.load %arg6[%c0_31, %c0_32, %c1_33, %c0_34] : memref<1x18x18x128xf32, #tpu.memory_space<vmem>>, vector<1x16x16x128xf32>
    %49 = vector.shape_cast %48 : vector<1x16x16x128xf32> to vector<256x128xf32>
    %c0_35 = arith.constant 0 : index
    %c0_36 = arith.constant 0 : index
    %c2 = arith.constant 2 : index
    %c0_37 = arith.constant 0 : index
    %50 = vector.load %arg6[%c0_35, %c0_36, %c2, %c0_37] : memref<1x18x18x128xf32, #tpu.memory_space<vmem>>, vector<1x16x16x128xf32>
    %51 = vector.shape_cast %50 : vector<1x16x16x128xf32> to vector<256x128xf32>
    %52 = tpu.concatenate %47, %49, %51 in 1 : vector<256x128xf32>, vector<256x128xf32>, vector<256x128xf32> -> vector<256x384xf32>
    %53 = arith.truncf %52 : vector<256x384xf32> to vector<256x384xbf16>
    %c0_38 = arith.constant 0 : index
    %c0_39 = arith.constant 0 : index
    %c0_40 = arith.constant 0 : index
    %54 = vector.load %arg3[%c0_38, %c0_39, %c0_40] : memref<3x384x128xbf16, #tpu.memory_space<vmem>>, vector<1x384x128xbf16>
    %55 = vector.shape_cast %54 : vector<1x384x128xbf16> to vector<384x128xbf16>
    %cst_41 = arith.constant dense<0.000000e+00> : vector<256x128xf32>
    %56 = tpu.matmul %53, %55, %cst_41 {dimension_numbers = #tpu.dot_dimension_numbers<[1], [0], [0], [1], [0, 0, 1, 1], [], []>} : vector<256x384xbf16>, vector<384x128xbf16>, vector<256x128xf32> -> vector<256x128xf32>
    %c0_42 = arith.constant 0 : index
    %c1_43 = arith.constant 1 : index
    %c0_44 = arith.constant 0 : index
    %c0_45 = arith.constant 0 : index
    %57 = vector.load %arg6[%c0_42, %c1_43, %c0_44, %c0_45] : memref<1x18x18x128xf32, #tpu.memory_space<vmem>>, vector<1x16x16x128xf32>
    %58 = vector.shape_cast %57 : vector<1x16x16x128xf32> to vector<256x128xf32>
    %c0_46 = arith.constant 0 : index
    %c1_47 = arith.constant 1 : index
    %c1_48 = arith.constant 1 : index
    %c0_49 = arith.constant 0 : index
    %59 = vector.load %arg6[%c0_46, %c1_47, %c1_48, %c0_49] : memref<1x18x18x128xf32, #tpu.memory_space<vmem>>, vector<1x16x16x128xf32>
    %60 = vector.shape_cast %59 : vector<1x16x16x128xf32> to vector<256x128xf32>
    %c0_50 = arith.constant 0 : index
    %c1_51 = arith.constant 1 : index
    %c2_52 = arith.constant 2 : index
    %c0_53 = arith.constant 0 : index
    %61 = vector.load %arg6[%c0_50, %c1_51, %c2_52, %c0_53] : memref<1x18x18x128xf32, #tpu.memory_space<vmem>>, vector<1x16x16x128xf32>
    %62 = vector.shape_cast %61 : vector<1x16x16x128xf32> to vector<256x128xf32>
    %63 = tpu.concatenate %58, %60, %62 in 1 : vector<256x128xf32>, vector<256x128xf32>, vector<256x128xf32> -> vector<256x384xf32>
    %64 = arith.truncf %63 : vector<256x384xf32> to vector<256x384xbf16>
    %c1_54 = arith.constant 1 : index
    %c0_55 = arith.constant 0 : index
    %c0_56 = arith.constant 0 : index
    %65 = vector.load %arg3[%c1_54, %c0_55, %c0_56] : memref<3x384x128xbf16, #tpu.memory_space<vmem>>, vector<1x384x128xbf16>
    %66 = vector.shape_cast %65 : vector<1x384x128xbf16> to vector<384x128xbf16>
    %cst_57 = arith.constant dense<0.000000e+00> : vector<256x128xf32>
    %67 = tpu.matmul %64, %66, %cst_57 {dimension_numbers = #tpu.dot_dimension_numbers<[1], [0], [0], [1], [0, 0, 1, 1], [], []>} : vector<256x384xbf16>, vector<384x128xbf16>, vector<256x128xf32> -> vector<256x128xf32>
    %68 = arith.addf %56, %67 : vector<256x128xf32>
    %c0_58 = arith.constant 0 : index
    %c2_59 = arith.constant 2 : index
    %c0_60 = arith.constant 0 : index
    %c0_61 = arith.constant 0 : index
    %69 = vector.load %arg6[%c0_58, %c2_59, %c0_60, %c0_61] : memref<1x18x18x128xf32, #tpu.memory_space<vmem>>, vector<1x16x16x128xf32>
    %70 = vector.shape_cast %69 : vector<1x16x16x128xf32> to vector<256x128xf32>
    %c0_62 = arith.constant 0 : index
    %c2_63 = arith.constant 2 : index
    %c1_64 = arith.constant 1 : index
    %c0_65 = arith.constant 0 : index
    %71 = vector.load %arg6[%c0_62, %c2_63, %c1_64, %c0_65] : memref<1x18x18x128xf32, #tpu.memory_space<vmem>>, vector<1x16x16x128xf32>
    %72 = vector.shape_cast %71 : vector<1x16x16x128xf32> to vector<256x128xf32>
    %c0_66 = arith.constant 0 : index
    %c2_67 = arith.constant 2 : index
    %c2_68 = arith.constant 2 : index
    %c0_69 = arith.constant 0 : index
    %73 = vector.load %arg6[%c0_66, %c2_67, %c2_68, %c0_69] : memref<1x18x18x128xf32, #tpu.memory_space<vmem>>, vector<1x16x16x128xf32>
    %74 = vector.shape_cast %73 : vector<1x16x16x128xf32> to vector<256x128xf32>
    %75 = tpu.concatenate %70, %72, %74 in 1 : vector<256x128xf32>, vector<256x128xf32>, vector<256x128xf32> -> vector<256x384xf32>
    %76 = arith.truncf %75 : vector<256x384xf32> to vector<256x384xbf16>
    %c2_70 = arith.constant 2 : index
    %c0_71 = arith.constant 0 : index
    %c0_72 = arith.constant 0 : index
    %77 = vector.load %arg3[%c2_70, %c0_71, %c0_72] : memref<3x384x128xbf16, #tpu.memory_space<vmem>>, vector<1x384x128xbf16>
    %78 = vector.shape_cast %77 : vector<1x384x128xbf16> to vector<384x128xbf16>
    %cst_73 = arith.constant dense<0.000000e+00> : vector<256x128xf32>
    %79 = tpu.matmul %76, %78, %cst_73 {dimension_numbers = #tpu.dot_dimension_numbers<[1], [0], [0], [1], [0, 0, 1, 1], [], []>} : vector<256x384xbf16>, vector<384x128xbf16>, vector<256x128xf32> -> vector<256x128xf32>
    %80 = arith.addf %68, %79 : vector<256x128xf32>
    %c0_74 = arith.constant 0 : index
    %c0_75 = arith.constant 0 : index
    %81 = vector.load %arg4[%c0_74, %c0_75] : memref<1x128xf32, #tpu.memory_space<vmem>>, vector<1x128xf32>
    %82 = vector.shape_cast %81 : vector<1x128xf32> to vector<128xf32>
    %83 = vector.shape_cast %82 : vector<128xf32> to vector<1x128xf32>
    %84 = vector.broadcast %83 : vector<1x128xf32> to vector<256x128xf32>
    %85 = arith.addf %80, %84 : vector<256x128xf32>
    %cst_76 = arith.constant 0.000000e+00 : f32
    %86 = vector.broadcast %cst_76 : f32 to vector<256x128xf32>
    %87 = arith.maximumf %85, %86 : vector<256x128xf32>
    %88 = vector.shape_cast %87 : vector<256x128xf32> to vector<1x16x16x128xf32>
    %c0_77 = arith.constant 0 : index
    %c0_78 = arith.constant 0 : index
    %c0_79 = arith.constant 0 : index
    %c0_80 = arith.constant 0 : index
    %89 = vector.load %arg5[%c0_77, %c0_78, %c0_79, %c0_80] : memref<1x16x16x128xf32, #tpu.memory_space<vmem>>, vector<1x16x16x128xf32>
    tpu.vector_store %arg5[%c0_77, %c0_78, %c0_79, %c0_80], %88 {strides = array<i32>} : memref<1x16x16x128xf32, #tpu.memory_space<vmem>>, vector<1x16x16x128xf32>,
    return
  }
  func.func @transform_0(%arg0: i32) -> (i32, i32, i32, i32) {
    %c0_i32 = arith.constant 0 : i32
    %c0_i32_0 = arith.constant 0 : i32
    %c0_i32_1 = arith.constant 0 : i32
    %c0_i32_2 = arith.constant 0 : i32
    return %arg0, %c0_i32, %c0_i32_0, %c0_i32_1 : i32, i32, i32, i32
  }
  func.func @transform_1(%arg0: i32) -> (i32, i32, i32, i32) {
    %c0_i32 = arith.constant 0 : i32
    %c0_i32_0 = arith.constant 0 : i32
    %c0_i32_1 = arith.constant 0 : i32
    %c0_i32_2 = arith.constant 0 : i32
    return %arg0, %c0_i32, %c0_i32_0, %c0_i32_1 : i32, i32, i32, i32
  }
  func.func @transform_2(%arg0: i32) -> (i32, i32, i32) {
    %c0_i32 = arith.constant 0 : i32
    %c0_i32_0 = arith.constant 0 : i32
    %c0_i32_1 = arith.constant 0 : i32
    %c0_i32_2 = arith.constant 0 : i32
    return %c0_i32, %c0_i32_0, %c0_i32_1 : i32, i32, i32
  }
  func.func @transform_3(%arg0: i32) -> (i32, i32) {
    %c0_i32 = arith.constant 0 : i32
    %c0_i32_0 = arith.constant 0 : i32
    %c0_i32_1 = arith.constant 0 : i32
    return %c0_i32, %c0_i32_0 : i32, i32
  }
  func.func @transform_4(%arg0: i32) -> (i32, i32, i32, i32) {
    %c0_i32 = arith.constant 0 : i32
    %c0_i32_0 = arith.constant 0 : i32
    %c0_i32_1 = arith.constant 0 : i32
    %c0_i32_2 = arith.constant 0 : i32
    return %arg0, %c0_i32, %c0_i32_0, %c0_i32_1 : i32, i32, i32, i32
  }
}

</mosaic_0001>

<llo_original>
// kernel: tpu_custom_call.1
$region0: #{tpu_custom_call.1}
  #allocation0 [shape = 'u32[]', space=smem, size = 0x4, offset = 0x4, fixed_abs, tag = 'smem constant byte address 0x4 - core index']
  #allocation1 [shape = 'u32[72,128]{1,0:T(1,128)}', space=vmem, size = 0x9000, scoped, tag = 'internal scratch']
  #allocation2 [shape = 'f32[1,18,18,128]{3,2,1,0:T(8,128)}', space=vmem, size = 0x36000, scoped, tag = 'scratch operand']
  %s0 = inlined_call_operand.hbm [shape: f32[2,16,16,64], index: 0, kind: input, shape index: {}]
  %s1 = inlined_call_operand.hbm [shape: f32[2,16,16,64], index: 1, kind: input, shape index: {}]
  %s2 = inlined_call_operand.hbm [shape: bf16[3,384,128], index: 2, kind: input, shape index: {}]
  %s3 = inlined_call_operand.vmem [shape: f32[1,128], index: 3, kind: input, shape index: {}]
  %s4 = inlined_call_operand.hbm [shape: f32[2,16,16,128], index: 4, kind: output, shape index: {}]
  %s5 = sld [smem:[#allocation0]]
  $region61: #{tpu_custom_call.1} parent=0
    _
  %s7 = ssub.s32 1, %s5
  %s8 = scalar_select 0, %s7, %s5
  $region1: #{tpu_custom_call.1} parent=0
    #allocation3 [shape = 'u8[262144]{0}', space=vmem, size = 0x40000, scoped, tag = 'input window, operand 0']
    #allocation4 [shape = 's32[2]{0}', space=sflag, size = 0x8, scoped, tag = 'scoped memory for tpu_custom_call.1']
    #allocation5 [shape = 's32[2]{0}', space=sflag, size = 0x8, scoped, tag = 'scoped memory for tpu_custom_call.1']
    #allocation6 [shape = 'u8[262144]{0}', space=vmem, size = 0x40000, scoped, tag = 'input window, operand 1']
    #allocation7 [shape = 's32[2]{0}', space=sflag, size = 0x8, scoped, tag = 'scoped memory for tpu_custom_call.1']
    #allocation8 [shape = 'u8[294912]{0}', space=vmem, size = 0x48000, scoped, tag = 'input window, operand 2, single buffered']
    #allocation9 [shape = 'u8[262144]{0}', space=vmem, size = 0x40000, scoped, tag = 'output window, operand 0']
    %9 = vsyncpa [#allocation4], 0
    %s10 = scalar_lea.sflag [#allocation4], 1
    %11 = vsyncpa %s10, 0
    %12 = vsyncpa [#allocation7], 0
    %s13 = scalar_lea.sflag [#allocation7], 1
    %14 = vsyncpa %s13, 0
    %15 = vsyncpa [#allocation5], 0
    %s16 = scalar_lea.sflag [#allocation5], 1
    %17 = vsyncpa %s16, 0
    loop: start=0, step=1, limit=4
    $region2: #{tpu_custom_call.1} parent=1 // loop_pre_header
      _
    $region3: #{tpu_custom_call.1} parent=1 // loop_header
      %s19 = sphi 0, %s23
      %p20 = scmp.ge.s32.totalorder %s19, 4
      %s29 = sphi 0, %s31
      %s32 = sphi 0, %s29
      %s33 = sphi 0, %s32
      %s49 = sphi 0, %s33
      %s55 = sphi 0, %s57
      %s58 = sphi 0, %s55
      %s59 = sphi 0, %s58
      %s75 = sphi 0, %s59
      %s79 = sphi 0, %s79
      %s81 = sphi 0, %s79
      %s82 = sphi 0, %s81
      %s96 = sphi 0, %s82
      %s100 = sphi 0, %s100
      %s102 = sphi 0, %s100
      %s103 = sphi 0, %s102
      %s117 = sphi 0, %s103
      %s123 = sphi 0, %s125
      %s126 = sphi 0, %s123
      %s127 = sphi 0, %s126
      %s143 = sphi 0, %s127
    $region4: #{tpu_custom_call.1} parent=1 // loop_header_branch
      %22 = sbr.rel (%p20) target = $region8
    $region5: #{tpu_custom_call.1} parent=1 // loop_body
      %s24 = ssub.s32 %s19, 1
      %s25 = ssub.s32 %s19, 2
      %s26 = sadd.s32 %s19, 1
      %s27 = ssub.s32 %s19, %s26
      %p28 = scmp.eq.s32.totalorder %s27, 0
      %s30 = sadd.s32 %s29, 1
      %s31 = scalar_select %p28, %s29, %s30
      %p34 = pneg %p28
      %p35 = scmp.eq.s32.totalorder %s19, 1
      %p36 = por %p34, %p35
      %p37 = scmp.ne.s32.totalorder %s29, %s32
      %p38 = scmp.eq.s32.totalorder %s19, 0
      %p39 = por %p37, %p38
      %p40 = scmp.ne.s32.totalorder %s29, %s32
      %p41 = scmp.eq.s32.totalorder %s24, 1
      %p42 = por %p40, %p41
      %p43 = scmp.ne.s32.totalorder %s32, %s33
      %p44 = scmp.eq.s32.totalorder %s24, 0
      %p45 = por %p43, %p44
      %p46 = scmp.ne.s32.totalorder %s32, %s33
      %p47 = scmp.eq.s32.totalorder %s25, 1
      %p48 = por %p46, %p47
      %p50 = scmp.ne.s32.totalorder %s33, %s49
      %p51 = scmp.eq.s32.totalorder %s25, 0
      %p52 = por %p50, %p51
      %s53 = ssub.s32 %s19, %s26
      %p54 = scmp.eq.s32.totalorder %s53, 0
      %s56 = sadd.s32 %s55, 1
      %s57 = scalar_select %p54, %s55, %s56
      %p60 = pneg %p54
      %p61 = scmp.eq.s32.totalorder %s19, 1
      %p62 = por %p60, %p61
      %p63 = scmp.ne.s32.totalorder %s55, %s58
      %p64 = scmp.eq.s32.totalorder %s19, 0
      %p65 = por %p63, %p64
      %p66 = scmp.ne.s32.totalorder %s55, %s58
      %p67 = scmp.eq.s32.totalorder %s24, 1
      %p68 = por %p66, %p67
      %p69 = scmp.ne.s32.totalorder %s58, %s59
      %p70 = scmp.eq.s32.totalorder %s24, 0
      %p71 = por %p69, %p70
      %p72 = scmp.ne.s32.totalorder %s58, %s59
      %p73 = scmp.eq.s32.totalorder %s25, 1
      %p74 = por %p72, %p73
      %p76 = scmp.ne.s32.totalorder %s59, %s75
      %p77 = scmp.eq.s32.totalorder %s25, 0
      %p78 = por %p76, %p77
      %s80 = sadd.s32 %s79, 1
      %p83 = scmp.eq.s32.totalorder %s19, 1
      %p84 = scmp.ne.s32.totalorder %s79, %s81
      %p85 = scmp.eq.s32.totalorder %s19, 0
      %p86 = por %p84, %p85
      %p87 = scmp.ne.s32.totalorder %s79, %s81
      %p88 = scmp.eq.s32.totalorder %s24, 1
      %p89 = por %p87, %p88
      %p90 = scmp.ne.s32.totalorder %s81, %s82
      %p91 = scmp.eq.s32.totalorder %s24, 0
      %p92 = por %p90, %p91
      %p93 = scmp.ne.s32.totalorder %s81, %s82
      %p94 = scmp.eq.s32.totalorder %s25, 1
      %p95 = por %p93, %p94
      %p97 = scmp.ne.s32.totalorder %s82, %s96
      %p98 = scmp.eq.s32.totalorder %s25, 0
      %p99 = por %p97, %p98
      %s101 = sadd.s32 %s100, 1
      %p104 = scmp.eq.s32.totalorder %s19, 1
      %p105 = scmp.ne.s32.totalorder %s100, %s102
      %p106 = scmp.eq.s32.totalorder %s19, 0
      %p107 = por %p105, %p106
      %p108 = scmp.ne.s32.totalorder %s100, %s102
      %p109 = scmp.eq.s32.totalorder %s24, 1
      %p110 = por %p108, %p109
      %p111 = scmp.ne.s32.totalorder %s102, %s103
      %p112 = scmp.eq.s32.totalorder %s24, 0
      %p113 = por %p111, %p112
      %p114 = scmp.ne.s32.totalorder %s102, %s103
      %p115 = scmp.eq.s32.totalorder %s25, 1
      %p116 = por %p114, %p115
      %p118 = scmp.ne.s32.totalorder %s103, %s117
      %p119 = scmp.eq.s32.totalorder %s25, 0
      %p120 = por %p118, %p119
      %s121 = ssub.s32 %s19, %s26
      %p122 = scmp.eq.s32.totalorder %s121, 0
      %s124 = sadd.s32 %s123, 1
      %s125 = scalar_select %p122, %s123, %s124
      %p128 = pneg %p122
      %p129 = scmp.eq.s32.totalorder %s19, 1
      %p130 = por %p128, %p129
      %p131 = scmp.ne.s32.totalorder %s123, %s126
      %p132 = scmp.eq.s32.totalorder %s19, 0
      %p133 = por %p131, %p132
      %p134 = scmp.ne.s32.totalorder %s123, %s126
      %p135 = scmp.eq.s32.totalorder %s24, 1
      %p136 = por %p134, %p135
      %p137 = scmp.ne.s32.totalorder %s126, %s127
      %p138 = scmp.eq.s32.totalorder %s24, 0
      %p139 = por %p137, %p138
      %p140 = scmp.ne.s32.totalorder %s126, %s127
      %p141 = scmp.eq.s32.totalorder %s25, 1
      %p142 = por %p140, %p141
      %p144 = scmp.ne.s32.totalorder %s127, %s143
      %p145 = scmp.eq.s32.totalorder %s25, 0
      %p146 = por %p144, %p145
      %p147 = scmp.le.s32.totalorder 1, %s19
      %p148 = scmp.lt.s32.totalorder %s19, 3
      %p149 = pnand %p147, %p148
      %p150 = pneg %p149
      // Predicated region
      $region9: #{tpu_custom_call.1} parent=5 // pred_check
        _
      $region10: #{tpu_custom_call.1} parent=5 // pred_check_branch
        %152 = sbr.rel (%p149) target = $region12
      $region11: #{tpu_custom_call.1} parent=5 // pred_region
        %s153 = ssub.s32 %s19, 1
        // Predicated region
        $region13: #{tpu_custom_call.1} parent=11 // pred_check
          %p154 = pneg %p92
        $region14: #{tpu_custom_call.1} parent=11 // pred_check_branch
          %156 = sbr.rel (%p154) target = $region16
        $region15: #{tpu_custom_call.1} parent=11 // pred_region
          %158 = vsyncadd [#allocation7], 0
          %s159 = sshll.u32 %s2, 4
          %s160 = int_to_ptr.hbm [resolvable:$true] %s159
          %s161 = sshll.u32 [#allocation8], 4
          %s162 = int_to_ptr.vmem [resolvable:$true] %s161
          %167 = dma.hbm_to_vmem [thread:$0]  %s160, 9216, %s162, [#allocation7], 64, 64, 4
        $region16: #{tpu_custom_call.1} parent=11 // pred_fallthru
          _
        // Predicated region
        $region17: #{tpu_custom_call.1} parent=11 // pred_check
          %p168 = pneg %p113
        $region18: #{tpu_custom_call.1} parent=11 // pred_check_branch
          %170 = sbr.rel (%p168) target = $region20
        $region19: #{tpu_custom_call.1} parent=11 // pred_region
          _
        $region20: #{tpu_custom_call.1} parent=11 // pred_fallthru
          _
      $region12: #{tpu_custom_call.1} parent=5 // pred_fallthru
        _
      %p171 = scmp.lt.s32.totalorder %s19, 2
      // Predicated region
      $region21: #{tpu_custom_call.1} parent=5 // pred_check
        %p172 = pneg %p171
      $region22: #{tpu_custom_call.1} parent=5 // pred_check_branch
        %174 = sbr.rel (%p172) target = $region24
      $region23: #{tpu_custom_call.1} parent=5 // pred_region
        // Predicated region
        $region25: #{tpu_custom_call.1} parent=23 // pred_check
          %p175 = pneg %p39
        $region26: #{tpu_custom_call.1} parent=23 // pred_check_branch
          %177 = sbr.rel (%p175) target = $region28
        $region27: #{tpu_custom_call.1} parent=23 // pred_region
          %s178 = sand.u32 %s29, 1
          %s179 = scalar_lea.sflag [#allocation4], %s178
          %s180 = sand.u32 %s29, 1
          %s181 = smul.addr %s180, 256
          %s182 = scalar_lea.vmem [#allocation3], %s181
          %184 = vsyncadd %s179, 0
          %s185 = smul.addr %s19, 32
          %s186 = smul.addr %s185, 8
          %s187 = scalar_lea.hbm %s0, %s186
          %s188 = sshll.u32 %s187, 4
          %s189 = int_to_ptr.hbm [resolvable:$true] %s188
          %s190 = sshll.u32 %s182, 4
          %s191 = int_to_ptr.vmem [resolvable:$true] %s190
          %196 = dma.hbm_to_vmem [thread:$0]  %s189, 4096, %s191, %s179, 128, 128, 8
        $region28: #{tpu_custom_call.1} parent=23 // pred_fallthru
          _
        // Predicated region
        $region29: #{tpu_custom_call.1} parent=23 // pred_check
          %p197 = pneg %p65
        $region30: #{tpu_custom_call.1} parent=23 // pred_check_branch
          %199 = sbr.rel (%p197) target = $region32
        $region31: #{tpu_custom_call.1} parent=23 // pred_region
          %s200 = sand.u32 %s19, 1
          %s201 = scalar_lea.sflag [#allocation7], %s200
          %s202 = sand.u32 %s55, 1
          %s203 = smul.addr %s202, 256
          %s204 = scalar_lea.vmem [#allocation6], %s203
          %206 = vsyncadd %s201, 0
          %s207 = smul.addr %s19, 32
          %s208 = smul.addr %s207, 8
          %s209 = scalar_lea.hbm %s1, %s208
          %s210 = sshll.u32 %s209, 4
          %s211 = int_to_ptr.hbm [resolvable:$true] %s210
          %s212 = sshll.u32 %s204, 4
          %s213 = int_to_ptr.vmem [resolvable:$true] %s212
          %218 = dma.hbm_to_vmem [thread:$0]  %s211, 4096, %s213, %s201, 128, 128, 8
        $region32: #{tpu_custom_call.1} parent=23 // pred_fallthru
          _
      $region24: #{tpu_custom_call.1} parent=5 // pred_fallthru
        _
      %p219 = scmp.le.s32.totalorder 1, %s19
      %p220 = scmp.lt.s32.totalorder %s19, 3
      %p221 = pnand %p219, %p220
      %p222 = pneg %p221
      // Predicated region
      $region33: #{tpu_custom_call.1} parent=5 // pred_check
        _
      $region34: #{tpu_custom_call.1} parent=5 // pred_check_branch
        %224 = sbr.rel (%p221) target = $region36
      $region35: #{tpu_custom_call.1} parent=5 // pred_region
        %s225 = ssub.s32 %s19, 1
        %s226 = sand.u32 %s32, 1
        %s227 = scalar_lea.sflag [#allocation4], %s226
        %s228 = sand.u32 %s32, 1
        %s229 = smul.addr %s228, 256
        %s230 = scalar_lea.vmem [#allocation3], %s229
        // Predicated region
        $region37: #{tpu_custom_call.1} parent=35 // pred_check
          %p231 = pneg %p45
        $region38: #{tpu_custom_call.1} parent=35 // pred_check_branch
          %233 = sbr.rel (%p231) target = $region40
        $region39: #{tpu_custom_call.1} parent=35 // pred_region
          %235 = dma.done %s227, 4096
        $region40: #{tpu_custom_call.1} parent=35 // pred_fallthru
          _
        %s236 = sand.u32 %s24, 1
        %s237 = scalar_lea.sflag [#allocation7], %s236
        %s238 = sand.u32 %s58, 1
        %s239 = smul.addr %s238, 256
        %s240 = scalar_lea.vmem [#allocation6], %s239
        // Predicated region
        $region41: #{tpu_custom_call.1} parent=35 // pred_check
          %p241 = pneg %p71
        $region42: #{tpu_custom_call.1} parent=35 // pred_check_branch
          %243 = sbr.rel (%p241) target = $region44
        $region43: #{tpu_custom_call.1} parent=35 // pred_region
          %245 = dma.done %s237, 4096
        $region44: #{tpu_custom_call.1} parent=35 // pred_fallthru
          _
        // Predicated region
        $region45: #{tpu_custom_call.1} parent=35 // pred_check
          %p246 = pneg %p92
        $region46: #{tpu_custom_call.1} parent=35 // pred_check_branch
          %248 = sbr.rel (%p246) target = $region48
        $region47: #{tpu_custom_call.1} parent=35 // pred_region
          %250 = dma.done [#allocation7], 9216
        $region48: #{tpu_custom_call.1} parent=35 // pred_fallthru
          _
        %s251 = sand.u32 %s32, 1
        %s252 = scalar_lea.sflag [#allocation4], %s251
        %s253 = sand.u32 %s32, 1
        %s254 = smul.addr %s253, 256
        %s255 = scalar_lea.vmem [#allocation3], %s254
        %p256 = pneg %p45
        %p257 = pneg %p42
        %s258 = sand.u32 %s24, 1
        %s259 = scalar_lea.sflag [#allocation7], %s258
        %s260 = sand.u32 %s58, 1
        %s261 = smul.addr %s260, 256
        %s262 = scalar_lea.vmem [#allocation6], %s261
        %p263 = pneg %p71
        %p264 = pneg %p68
        %p265 = pneg %p92
        %p266 = pneg %p89
        %p267 = pneg %p113
        %p268 = pneg %p110
        %p269 = pneg %p139
        %p270 = pneg %p136
        %s271 = sand.u32 %s126, 1
        %s272 = scalar_lea.sflag [#allocation5], %s271
        %s273 = sand.u32 %s126, 1
        %s274 = smul.addr %s273, 256
        %s275 = scalar_lea.vmem [#allocation9], %s274
        %v276 = vld [vmem:[%s230] sm:$0xff]
        %v277 = vld [vmem:[%s230 + $0x8] sm:$0xff]
        %v278 = vld [vmem:[%s230 + $0x10] sm:$0xff]
        %v279 = vld [vmem:[%s230 + $0x18] sm:$0xff]
        %v280 = vld [vmem:[%s230 + $0x20] sm:$0xff]
        %v281 = vld [vmem:[%s230 + $0x28] sm:$0xff]
        %v282 = vld [vmem:[%s230 + $0x30] sm:$0xff]
        %v283 = vld [vmem:[%s230 + $0x38] sm:$0xff]
        %v284 = vld [vmem:[%s230 + $0x40] sm:$0xff]
        %v285 = vld [vmem:[%s230 + $0x48] sm:$0xff]
        %v286 = vld [vmem:[%s230 + $0x50] sm:$0xff]
        %v287 = vld [vmem:[%s230 + $0x58] sm:$0xff]
        %v288 = vld [vmem:[%s230 + $0x60] sm:$0xff]
        %v289 = vld [vmem:[%s230 + $0x68] sm:$0xff]
        %v290 = vld [vmem:[%s230 + $0x70] sm:$0xff]
        %v291 = vld [vmem:[%s230 + $0x78] sm:$0xff]
        %v292 = vld [vmem:[%s230 + $0x80] sm:$0xff]
        %v293 = vld [vmem:[%s230 + $0x88] sm:$0xff]
        %v294 = vld [vmem:[%s230 + $0x90] sm:$0xff]
        %v295 = vld [vmem:[%s230 + $0x98] sm:$0xff]
        %v296 = vld [vmem:[%s230 + $0xa0] sm:$0xff]
        %v297 = vld [vmem:[%s230 + $0xa8] sm:$0xff]
        %v298 = vld [vmem:[%s230 + $0xb0] sm:$0xff]
        %v299 = vld [vmem:[%s230 + $0xb8] sm:$0xff]
        %v300 = vld [vmem:[%s230 + $0xc0] sm:$0xff]
        %v301 = vld [vmem:[%s230 + $0xc8] sm:$0xff]
        %v302 = vld [vmem:[%s230 + $0xd0] sm:$0xff]
        %v303 = vld [vmem:[%s230 + $0xd8] sm:$0xff]
        %v304 = vld [vmem:[%s230 + $0xe0] sm:$0xff]
        %v305 = vld [vmem:[%s230 + $0xe8] sm:$0xff]
        %v306 = vld [vmem:[%s230 + $0xf0] sm:$0xff]
        %v307 = vld [vmem:[%s230 + $0xf8] sm:$0xff]
        %v308 = vld [vmem:[%s240] sm:$0xff]
        %v309 = vld [vmem:[%s240 + $0x8] sm:$0xff]
        %v310 = vld [vmem:[%s240 + $0x10] sm:$0xff]
        %v311 = vld [vmem:[%s240 + $0x18] sm:$0xff]
        %v312 = vld [vmem:[%s240 + $0x20] sm:$0xff]
        %v313 = vld [vmem:[%s240 + $0x28] sm:$0xff]
        %v314 = vld [vmem:[%s240 + $0x30] sm:$0xff]
        %v315 = vld [vmem:[%s240 + $0x38] sm:$0xff]
        %v316 = vld [vmem:[%s240 + $0x40] sm:$0xff]
        %v317 = vld [vmem:[%s240 + $0x48] sm:$0xff]
        %v318 = vld [vmem:[%s240 + $0x50] sm:$0xff]
        %v319 = vld [vmem:[%s240 + $0x58] sm:$0xff]
        %v320 = vld [vmem:[%s240 + $0x60] sm:$0xff]
        %v321 = vld [vmem:[%s240 + $0x68] sm:$0xff]
        %v322 = vld [vmem:[%s240 + $0x70] sm:$0xff]
        %v323 = vld [vmem:[%s240 + $0x78] sm:$0xff]
        %v324 = vld [vmem:[%s240 + $0x80] sm:$0xff]
        %v325 = vld [vmem:[%s240 + $0x88] sm:$0xff]
        %v326 = vld [vmem:[%s240 + $0x90] sm:$0xff]
        %v327 = vld [vmem:[%s240 + $0x98] sm:$0xff]
        %v328 = vld [vmem:[%s240 + $0xa0] sm:$0xff]
        %v329 = vld [vmem:[%s240 + $0xa8] sm:$0xff]
        %v330 = vld [vmem:[%s240 + $0xb0] sm:$0xff]
        %v331 = vld [vmem:[%s240 + $0xb8] sm:$0xff]
        %v332 = vld [vmem:[%s240 + $0xc0] sm:$0xff]
        %v333 = vld [vmem:[%s240 + $0xc8] sm:$0xff]
        %v334 = vld [vmem:[%s240 + $0xd0] sm:$0xff]
        %v335 = vld [vmem:[%s240 + $0xd8] sm:$0xff]
        %v336 = vld [vmem:[%s240 + $0xe0] sm:$0xff]
        %v337 = vld [vmem:[%s240 + $0xe8] sm:$0xff]
        %v338 = vld [vmem:[%s240 + $0xf0] sm:$0xff]
        %v339 = vld [vmem:[%s240 + $0xf8] sm:$0xff]
        %v340 = vadd.f32 %v276, %v308
        %v341 = vadd.f32 %v277, %v309
        %v342 = vadd.f32 %v278, %v310
        %v343 = vadd.f32 %v279, %v311
        %v344 = vadd.f32 %v280, %v312
        %v345 = vadd.f32 %v281, %v313
        %v346 = vadd.f32 %v282, %v314
        %v347 = vadd.f32 %v283, %v315
        %v348 = vadd.f32 %v284, %v316
        %v349 = vadd.f32 %v285, %v317
        %v350 = vadd.f32 %v286, %v318
        %v351 = vadd.f32 %v287, %v319
        %v352 = vadd.f32 %v288, %v320
        %v353 = vadd.f32 %v289, %v321
        %v354 = vadd.f32 %v290, %v322
        %v355 = vadd.f32 %v291, %v323
        %v356 = vadd.f32 %v292, %v324
        %v357 = vadd.f32 %v293, %v325
        %v358 = vadd.f32 %v294, %v326
        %v359 = vadd.f32 %v295, %v327
        %v360 = vadd.f32 %v296, %v328
        %v361 = vadd.f32 %v297, %v329
        %v362 = vadd.f32 %v298, %v330
        %v363 = vadd.f32 %v299, %v331
        %v364 = vadd.f32 %v300, %v332
        %v365 = vadd.f32 %v301, %v333
        %v366 = vadd.f32 %v302, %v334
        %v367 = vadd.f32 %v303, %v335
        %v368 = vadd.f32 %v304, %v336
        %v369 = vadd.f32 %v305, %v337
        %v370 = vadd.f32 %v306, %v338
        %v371 = vadd.f32 %v307, %v339
        %vm372 = vcmask 523264
        %v373 = vsel %vm372, %v340, 0.0
        %v374 = vsel %vm372, %v341, 0.0
        %v375 = vadd.f32 %v373, %v374
        %v376 = vsel %vm372, %v342, 0.0
        %v377 = vadd.f32 %v375, %v376
        %v378 = vsel %vm372, %v343, 0.0
        %v379 = vadd.f32 %v377, %v378
        %v380 = vsel %vm372, %v344, 0.0
        %v381 = vadd.f32 %v379, %v380
        %v382 = vsel %vm372, %v345, 0.0
        %v383 = vadd.f32 %v381, %v382
        %v384 = vsel %vm372, %v346, 0.0
        %v385 = vadd.f32 %v383, %v384
        %v386 = vsel %vm372, %v347, 0.0
        %v387 = vadd.f32 %v385, %v386
        %v388 = vsel %vm372, %v348, 0.0
        %v389 = vadd.f32 %v387, %v388
        %v390 = vsel %vm372, %v349, 0.0
        %v391 = vadd.f32 %v389, %v390
        %v392 = vsel %vm372, %v350, 0.0
        %v393 = vadd.f32 %v391, %v392
        %v394 = vsel %vm372, %v351, 0.0
        %v395 = vadd.f32 %v393, %v394
        %v396 = vsel %vm372, %v352, 0.0
        %v397 = vadd.f32 %v395, %v396
        %v398 = vsel %vm372, %v353, 0.0
        %v399 = vadd.f32 %v397, %v398
        %v400 = vsel %vm372, %v354, 0.0
        %v401 = vadd.f32 %v399, %v400
        %v402 = vsel %vm372, %v355, 0.0
        %v403 = vadd.f32 %v401, %v402
        %v404 = vsel %vm372, %v356, 0.0
        %v405 = vadd.f32 %v403, %v404
        %v406 = vsel %vm372, %v357, 0.0
        %v407 = vadd.f32 %v405, %v406
        %v408 = vsel %vm372, %v358, 0.0
        %v409 = vadd.f32 %v407, %v408
        %v410 = vsel %vm372, %v359, 0.0
        %v411 = vadd.f32 %v409, %v410
        %v412 = vsel %vm372, %v360, 0.0
        %v413 = vadd.f32 %v411, %v412
        %v414 = vsel %vm372, %v361, 0.0
        %v415 = vadd.f32 %v413, %v414
        %v416 = vsel %vm372, %v362, 0.0
        %v417 = vadd.f32 %v415, %v416
        %v418 = vsel %vm372, %v363, 0.0
        %v419 = vadd.f32 %v417, %v418
        %v420 = vsel %vm372, %v364, 0.0
        %v421 = vadd.f32 %v419, %v420
        %v422 = vsel %vm372, %v365, 0.0
        %v423 = vadd.f32 %v421, %v422
        %v424 = vsel %vm372, %v366, 0.0
        %v425 = vadd.f32 %v423, %v424
        %v426 = vsel %vm372, %v367, 0.0
        %v427 = vadd.f32 %v425, %v426
        %v428 = vsel %vm372, %v368, 0.0
        %v429 = vadd.f32 %v427, %v428
        %v430 = vsel %vm372, %v369, 0.0
        %v431 = vadd.f32 %v429, %v430
        %v432 = vsel %vm372, %v370, 0.0
        %v433 = vadd.f32 %v431, %v432
        %v434 = vsel %vm372, %v371, 0.0
        %v435 = vadd.f32 %v433, %v434
        %v436 = vrot.slane %v435, 4
        %v437 = vadd.f32 %v435, %v436
        %v438 = vrot.slane %v437, 2
        %v439 = vadd.f32 %v437, %v438
        %v440 = vrot.slane %v439, 1
        %v441 = vadd.f32 %v439, %v440
        %v442 = vrcp.pop 256.0
        %v443 = vmul.f32 256.0, %v442
        %v444 = vsub.f32 1.0, %v443
        %v445 = vmul.f32 %v442, %v444
        %v446 = vadd.f32 %v442, %v445
        %vm447 = vweird.f32 %v442
        %v448 = vsel %vm447, %v442, %v446
        %v449 = vmul.f32 %v441, %v448
        %v450 = vsub.f32 %v340, %v449
        %v451 = vsub.f32 %v341, %v449
        %v452 = vsub.f32 %v342, %v449
        %v453 = vsub.f32 %v343, %v449
        %v454 = vsub.f32 %v344, %v449
        %v455 = vsub.f32 %v345, %v449
        %v456 = vsub.f32 %v346, %v449
        %v457 = vsub.f32 %v347, %v449
        %v458 = vsub.f32 %v348, %v449
        %v459 = vsub.f32 %v349, %v449
        %v460 = vsub.f32 %v350, %v449
        %v461 = vsub.f32 %v351, %v449
        %v462 = vsub.f32 %v352, %v449
        %v463 = vsub.f32 %v353, %v449
        %v464 = vsub.f32 %v354, %v449
        %v465 = vsub.f32 %v355, %v449
        %v466 = vsub.f32 %v356, %v449
        %v467 = vsub.f32 %v357, %v449
        %v468 = vsub.f32 %v358, %v449
        %v469 = vsub.f32 %v359, %v449
        %v470 = vsub.f32 %v360, %v449
        %v471 = vsub.f32 %v361, %v449
        %v472 = vsub.f32 %v362, %v449
        %v473 = vsub.f32 %v363, %v449
        %v474 = vsub.f32 %v364, %v449
        %v475 = vsub.f32 %v365, %v449
        %v476 = vsub.f32 %v366, %v449
        %v477 = vsub.f32 %v367, %v449
        %v478 = vsub.f32 %v368, %v449
        %v479 = vsub.f32 %v369, %v449
        %v480 = vsub.f32 %v370, %v449
        %v481 = vsub.f32 %v371, %v449
        %v482 = vmul.f32 %v450, %v450
        %v483 = vmul.f32 %v451, %v451
        %v484 = vmul.f32 %v452, %v452
        %v485 = vmul.f32 %v453, %v453
        %v486 = vmul.f32 %v454, %v454
        %v487 = vmul.f32 %v455, %v455
        %v488 = vmul.f32 %v456, %v456
        %v489 = vmul.f32 %v457, %v457
        %v490 = vmul.f32 %v458, %v458
        %v491 = vmul.f32 %v459, %v459
        %v492 = vmul.f32 %v460, %v460
        %v493 = vmul.f32 %v461, %v461
        %v494 = vmul.f32 %v462, %v462
        %v495 = vmul.f32 %v463, %v463
        %v496 = vmul.f32 %v464, %v464
        %v497 = vmul.f32 %v465, %v465
        %v498 = vmul.f32 %v466, %v466
        %v499 = vmul.f32 %v467, %v467
        %v500 = vmul.f32 %v468, %v468
        %v501 = vmul.f32 %v469, %v469
        %v502 = vmul.f32 %v470, %v470
        %v503 = vmul.f32 %v471, %v471
        %v504 = vmul.f32 %v472, %v472
        %v505 = vmul.f32 %v473, %v473
        %v506 = vmul.f32 %v474, %v474
        %v507 = vmul.f32 %v475, %v475
        %v508 = vmul.f32 %v476, %v476
        %v509 = vmul.f32 %v477, %v477
        %v510 = vmul.f32 %v478, %v478
        %v511 = vmul.f32 %v479, %v479
        %v512 = vmul.f32 %v480, %v480
        %v513 = vmul.f32 %v481, %v481
        %v514 = vsel %vm372, %v482, 0.0
        %v515 = vsel %vm372, %v483, 0.0
        %v516 = vadd.f32 %v514, %v515
        %v517 = vsel %vm372, %v484, 0.0
        %v518 = vadd.f32 %v516, %v517
        %v519 = vsel %vm372, %v485, 0.0
        %v520 = vadd.f32 %v518, %v519
        %v521 = vsel %vm372, %v486, 0.0
        %v522 = vadd.f32 %v520, %v521
        %v523 = vsel %vm372, %v487, 0.0
        %v524 = vadd.f32 %v522, %v523
        %v525 = vsel %vm372, %v488, 0.0
        %v526 = vadd.f32 %v524, %v525
        %v527 = vsel %vm372, %v489, 0.0
        %v528 = vadd.f32 %v526, %v527
        %v529 = vsel %vm372, %v490, 0.0
        %v530 = vadd.f32 %v528, %v529
        %v531 = vsel %vm372, %v491, 0.0
        %v532 = vadd.f32 %v530, %v531
        %v533 = vsel %vm372, %v492, 0.0
        %v534 = vadd.f32 %v532, %v533
        %v535 = vsel %vm372, %v493, 0.0
        %v536 = vadd.f32 %v534, %v535
        %v537 = vsel %vm372, %v494, 0.0
        %v538 = vadd.f32 %v536, %v537
        %v539 = vsel %vm372, %v495, 0.0
        %v540 = vadd.f32 %v538, %v539
        %v541 = vsel %vm372, %v496, 0.0
        %v542 = vadd.f32 %v540, %v541
        %v543 = vsel %vm372, %v497, 0.0
        %v544 = vadd.f32 %v542, %v543
        %v545 = vsel %vm372, %v498, 0.0
        %v546 = vadd.f32 %v544, %v545
        %v547 = vsel %vm372, %v499, 0.0
        %v548 = vadd.f32 %v546, %v547
        %v549 = vsel %vm372, %v500, 0.0
        %v550 = vadd.f32 %v548, %v549
        %v551 = vsel %vm372, %v501, 0.0
        %v552 = vadd.f32 %v550, %v551
        %v553 = vsel %vm372, %v502, 0.0
        %v554 = vadd.f32 %v552, %v553
        %v555 = vsel %vm372, %v503, 0.0
        %v556 = vadd.f32 %v554, %v555
        %v557 = vsel %vm372, %v504, 0.0
        %v558 = vadd.f32 %v556, %v557
        %v559 = vsel %vm372, %v505, 0.0
        %v560 = vadd.f32 %v558, %v559
        %v561 = vsel %vm372, %v506, 0.0
        %v562 = vadd.f32 %v560, %v561
        %v563 = vsel %vm372, %v507, 0.0
        %v564 = vadd.f32 %v562, %v563
        %v565 = vsel %vm372, %v508, 0.0
        %v566 = vadd.f32 %v564, %v565
        %v567 = vsel %vm372, %v509, 0.0
        %v568 = vadd.f32 %v566, %v567
        %v569 = vsel %vm372, %v510, 0.0
        %v570 = vadd.f32 %v568, %v569
        %v571 = vsel %vm372, %v511, 0.0
        %v572 = vadd.f32 %v570, %v571
        %v573 = vsel %vm372, %v512, 0.0
        %v574 = vadd.f32 %v572, %v573
        %v575 = vsel %vm372, %v513, 0.0
        %v576 = vadd.f32 %v574, %v575
        %v577 = vrot.slane %v576, 4
        %v578 = vadd.f32 %v576, %v577
        %v579 = vrot.slane %v578, 2
        %v580 = vadd.f32 %v578, %v579
        %v581 = vrot.slane %v580, 1
        %v582 = vadd.f32 %v580, %v581
        %v583 = vmul.f32 %v582, 0.003921569
        %v584 = vadd.f32 %v583, 0.0001
        %v585 = vmul.f32 %v584, 4.0
        %v586 = vrcp.pop %v585
        %v587 = vmul.f32 %v585, %v586
        %v588 = vsub.f32 1.0, %v587
        %v589 = vmul.f32 %v586, %v588
        %v590 = vadd.f32 %v586, %v589
        %vm591 = vweird.f32 %v585
        %vm592 = vweird.f32 %v586
        %vm593 = vmor %vm591, %vm592
        %v594 = vsel %vm593, %v586, %v590
        %v595 = vand.u32 2147483647, %v585
        %vm596 = vcmp.eq.f32.partialorder %v595, 8.507059e+37
        %v597 = vand.u32 %v585, 2147483648
        %v598 = vor.u32 1.1754944e-38, %v597
        %v599 = vsel %vm596, %v598, %v594
        %v600 = vmul.f32 1.0, %v599
        %v601 = vmul.f32 %v482, %v600
        %v602 = vmul.f32 %v483, %v600
        %v603 = vmul.f32 %v484, %v600
        %v604 = vmul.f32 %v485, %v600
        %v605 = vmul.f32 %v486, %v600
        %v606 = vmul.f32 %v487, %v600
        %v607 = vmul.f32 %v488, %v600
        %v608 = vmul.f32 %v489, %v600
        %v609 = vmul.f32 %v490, %v600
        %v610 = vmul.f32 %v491, %v600
        %v611 = vmul.f32 %v492, %v600
        %v612 = vmul.f32 %v493, %v600
        %v613 = vmul.f32 %v494, %v600
        %v614 = vmul.f32 %v495, %v600
        %v615 = vmul.f32 %v496, %v600
        %v616 = vmul.f32 %v497, %v600
        %v617 = vmul.f32 %v498, %v600
        %v618 = vmul.f32 %v499, %v600
        %v619 = vmul.f32 %v500, %v600
        %v620 = vmul.f32 %v501, %v600
        %v621 = vmul.f32 %v502, %v600
        %v622 = vmul.f32 %v503, %v600
        %v623 = vmul.f32 %v504, %v600
        %v624 = vmul.f32 %v505, %v600
        %v625 = vmul.f32 %v506, %v600
        %v626 = vmul.f32 %v507, %v600
        %v627 = vmul.f32 %v508, %v600
        %v628 = vmul.f32 %v509, %v600
        %v629 = vmul.f32 %v510, %v600
        %v630 = vmul.f32 %v511, %v600
        %v631 = vmul.f32 %v512, %v600
        %v632 = vmul.f32 %v513, %v600
        %v633 = vadd.f32 %v601, 0.5
        %v634 = vadd.f32 %v602, 0.5
        %v635 = vadd.f32 %v603, 0.5
        %v636 = vadd.f32 %v604, 0.5
        %v637 = vadd.f32 %v605, 0.5
        %v638 = vadd.f32 %v606, 0.5
        %v639 = vadd.f32 %v607, 0.5
        %v640 = vadd.f32 %v608, 0.5
        %v641 = vadd.f32 %v609, 0.5
        %v642 = vadd.f32 %v610, 0.5
        %v643 = vadd.f32 %v611, 0.5
        %v644 = vadd.f32 %v612, 0.5
        %v645 = vadd.f32 %v613, 0.5
        %v646 = vadd.f32 %v614, 0.5
        %v647 = vadd.f32 %v615, 0.5
        %v648 = vadd.f32 %v616, 0.5
        %v649 = vadd.f32 %v617, 0.5
        %v650 = vadd.f32 %v618, 0.5
        %v651 = vadd.f32 %v619, 0.5
        %v652 = vadd.f32 %v620, 0.5
        %v653 = vadd.f32 %v621, 0.5
        %v654 = vadd.f32 %v622, 0.5
        %v655 = vadd.f32 %v623, 0.5
        %v656 = vadd.f32 %v624, 0.5
        %v657 = vadd.f32 %v625, 0.5
        %v658 = vadd.f32 %v626, 0.5
        %v659 = vadd.f32 %v627, 0.5
        %v660 = vadd.f32 %v628, 0.5
        %v661 = vadd.f32 %v629, 0.5
        %v662 = vadd.f32 %v630, 0.5
        %v663 = vadd.f32 %v631, 0.5
        %v664 = vadd.f32 %v632, 0.5
        %v665 = vsub.f32 0.0, %v633
        %v666 = vsub.f32 0.0, %v634
        %v667 = vsub.f32 0.0, %v635
        %v668 = vsub.f32 0.0, %v636
        %v669 = vsub.f32 0.0, %v637
        %v670 = vsub.f32 0.0, %v638
        %v671 = vsub.f32 0.0, %v639
        %v672 = vsub.f32 0.0, %v640
        %v673 = vsub.f32 0.0, %v641
        %v674 = vsub.f32 0.0, %v642
        %v675 = vsub.f32 0.0, %v643
        %v676 = vsub.f32 0.0, %v644
        %v677 = vsub.f32 0.0, %v645
        %v678 = vsub.f32 0.0, %v646
        %v679 = vsub.f32 0.0, %v647
        %v680 = vsub.f32 0.0, %v648
        %v681 = vsub.f32 0.0, %v649
        %v682 = vsub.f32 0.0, %v650
        %v683 = vsub.f32 0.0, %v651
        %v684 = vsub.f32 0.0, %v652
        %v685 = vsub.f32 0.0, %v653
        %v686 = vsub.f32 0.0, %v654
        %v687 = vsub.f32 0.0, %v655
        %v688 = vsub.f32 0.0, %v656
        %v689 = vsub.f32 0.0, %v657
        %v690 = vsub.f32 0.0, %v658
        %v691 = vsub.f32 0.0, %v659
        %v692 = vsub.f32 0.0, %v660
        %v693 = vsub.f32 0.0, %v661
        %v694 = vsub.f32 0.0, %v662
        %v695 = vsub.f32 0.0, %v663
        %v696 = vsub.f32 0.0, %v664
        %v697 = vmul.f32 %v665, 1.442695
        %v698 = vpow.pop %v697
        %v699 = vmul.f32 %v666, 1.442695
        %v700 = vpow.pop %v699
        %v701 = vmul.f32 %v667, 1.442695
        %v702 = vpow.pop %v701
        %v703 = vmul.f32 %v668, 1.442695
        %v704 = vpow.pop %v703
        %v705 = vmul.f32 %v669, 1.442695
        %v706 = vpow.pop %v705
        %v707 = vmul.f32 %v670, 1.442695
        %v708 = vpow.pop %v707
        %v709 = vmul.f32 %v671, 1.442695
        %v710 = vpow.pop %v709
        %v711 = vmul.f32 %v672, 1.442695
        %v712 = vpow.pop %v711
        %v713 = vmul.f32 %v673, 1.442695
        %v714 = vpow.pop %v713
        %v715 = vmul.f32 %v674, 1.442695
        %v716 = vpow.pop %v715
        %v717 = vmul.f32 %v675, 1.442695
        %v718 = vpow.pop %v717
        %v719 = vmul.f32 %v676, 1.442695
        %v720 = vpow.pop %v719
        %v721 = vmul.f32 %v677, 1.442695
        %v722 = vpow.pop %v721
        %v723 = vmul.f32 %v678, 1.442695
        %v724 = vpow.pop %v723
        %v725 = vmul.f32 %v679, 1.442695
        %v726 = vpow.pop %v725
        %v727 = vmul.f32 %v680, 1.442695
        %v728 = vpow.pop %v727
        %v729 = vmul.f32 %v681, 1.442695
        %v730 = vpow.pop %v729
        %v731 = vmul.f32 %v682, 1.442695
        %v732 = vpow.pop %v731
        %v733 = vmul.f32 %v683, 1.442695
        %v734 = vpow.pop %v733
        %v735 = vmul.f32 %v684, 1.442695
        %v736 = vpow.pop %v735
        %v737 = vmul.f32 %v685, 1.442695
        %v738 = vpow.pop %v737
        %v739 = vmul.f32 %v686, 1.442695
        %v740 = vpow.pop %v739
        %v741 = vmul.f32 %v687, 1.442695
        %v742 = vpow.pop %v741
        %v743 = vmul.f32 %v688, 1.442695
        %v744 = vpow.pop %v743
        %v745 = vmul.f32 %v689, 1.442695
        %v746 = vpow.pop %v745
        %v747 = vmul.f32 %v690, 1.442695
        %v748 = vpow.pop %v747
        %v749 = vmul.f32 %v691, 1.442695
        %v750 = vpow.pop %v749
        %v751 = vmul.f32 %v692, 1.442695
        %v752 = vpow.pop %v751
        %v753 = vmul.f32 %v693, 1.442695
        %v754 = vpow.pop %v753
        %v755 = vmul.f32 %v694, 1.442695
        %v756 = vpow.pop %v755
        %v757 = vmul.f32 %v695, 1.442695
        %v758 = vpow.pop %v757
        %v759 = vmul.f32 %v696, 1.442695
        %v760 = vpow.pop %v759
        %v761 = vadd.f32 %v698, 1.0
        %v762 = vadd.f32 %v700, 1.0
        %v763 = vadd.f32 %v702, 1.0
        %v764 = vadd.f32 %v704, 1.0
        %v765 = vadd.f32 %v706, 1.0
        %v766 = vadd.f32 %v708, 1.0
        %v767 = vadd.f32 %v710, 1.0
        %v768 = vadd.f32 %v712, 1.0
        %v769 = vadd.f32 %v714, 1.0
        %v770 = vadd.f32 %v716, 1.0
        %v771 = vadd.f32 %v718, 1.0
        %v772 = vadd.f32 %v720, 1.0
        %v773 = vadd.f32 %v722, 1.0
        %v774 = vadd.f32 %v724, 1.0
        %v775 = vadd.f32 %v726, 1.0
        %v776 = vadd.f32 %v728, 1.0
        %v777 = vadd.f32 %v730, 1.0
        %v778 = vadd.f32 %v732, 1.0
        %v779 = vadd.f32 %v734, 1.0
        %v780 = vadd.f32 %v736, 1.0
        %v781 = vadd.f32 %v738, 1.0
        %v782 = vadd.f32 %v740, 1.0
        %v783 = vadd.f32 %v742, 1.0
        %v784 = vadd.f32 %v744, 1.0
        %v785 = vadd.f32 %v746, 1.0
        %v786 = vadd.f32 %v748, 1.0
        %v787 = vadd.f32 %v750, 1.0
        %v788 = vadd.f32 %v752, 1.0
        %v789 = vadd.f32 %v754, 1.0
        %v790 = vadd.f32 %v756, 1.0
        %v791 = vadd.f32 %v758, 1.0
        %v792 = vadd.f32 %v760, 1.0
        %v793 = vrcp.pop %v761
        %v794 = vmul.f32 %v761, %v793
        %v795 = vsub.f32 1.0, %v794
        %v796 = vmul.f32 %v793, %v795
        %v797 = vadd.f32 %v793, %v796
        %vm798 = vweird.f32 %v761
        %vm799 = vweird.f32 %v793
        %vm800 = vmor %vm798, %vm799
        %v801 = vsel %vm800, %v793, %v797
        %v802 = vand.u32 2147483647, %v761
        %vm803 = vcmp.eq.f32.partialorder %v802, 8.507059e+37
        %v804 = vand.u32 %v761, 2147483648
        %v805 = vor.u32 1.1754944e-38, %v804
        %v806 = vsel %vm803, %v805, %v801
        %v807 = vmul.f32 1.0, %v806
        %v808 = vrcp.pop %v762
        %v809 = vmul.f32 %v762, %v808
        %v810 = vsub.f32 1.0, %v809
        %v811 = vmul.f32 %v808, %v810
        %v812 = vadd.f32 %v808, %v811
        %vm813 = vweird.f32 %v762
        %vm814 = vweird.f32 %v808
        %vm815 = vmor %vm813, %vm814
        %v816 = vsel %vm815, %v808, %v812
        %v817 = vand.u32 2147483647, %v762
        %vm818 = vcmp.eq.f32.partialorder %v817, 8.507059e+37
        %v819 = vand.u32 %v762, 2147483648
        %v820 = vor.u32 1.1754944e-38, %v819
        %v821 = vsel %vm818, %v820, %v816
        %v822 = vmul.f32 1.0, %v821
        %v823 = vrcp.pop %v763
        %v824 = vmul.f32 %v763, %v823
        %v825 = vsub.f32 1.0, %v824
        %v826 = vmul.f32 %v823, %v825
        %v827 = vadd.f32 %v823, %v826
        %vm828 = vweird.f32 %v763
        %vm829 = vweird.f32 %v823
        %vm830 = vmor %vm828, %vm829
        %v831 = vsel %vm830, %v823, %v827
        %v832 = vand.u32 2147483647, %v763
        %vm833 = vcmp.eq.f32.partialorder %v832, 8.507059e+37
        %v834 = vand.u32 %v763, 2147483648
        %v835 = vor.u32 1.1754944e-38, %v834
        %v836 = vsel %vm833, %v835, %v831
        %v837 = vmul.f32 1.0, %v836
        %v838 = vrcp.pop %v764
        %v839 = vmul.f32 %v764, %v838
        %v840 = vsub.f32 1.0, %v839
        %v841 = vmul.f32 %v838, %v840
        %v842 = vadd.f32 %v838, %v841
        %vm843 = vweird.f32 %v764
        %vm844 = vweird.f32 %v838
        %vm845 = vmor %vm843, %vm844
        %v846 = vsel %vm845, %v838, %v842
        %v847 = vand.u32 2147483647, %v764
        %vm848 = vcmp.eq.f32.partialorder %v847, 8.507059e+37
        %v849 = vand.u32 %v764, 2147483648
        %v850 = vor.u32 1.1754944e-38, %v849
        %v851 = vsel %vm848, %v850, %v846
        %v852 = vmul.f32 1.0, %v851
        %v853 = vrcp.pop %v765
        %v854 = vmul.f32 %v765, %v853
        %v855 = vsub.f32 1.0, %v854
        %v856 = vmul.f32 %v853, %v855
        %v857 = vadd.f32 %v853, %v856
        %vm858 = vweird.f32 %v765
        %vm859 = vweird.f32 %v853
        %vm860 = vmor %vm858, %vm859
        %v861 = vsel %vm860, %v853, %v857
        %v862 = vand.u32 2147483647, %v765
        %vm863 = vcmp.eq.f32.partialorder %v862, 8.507059e+37
        %v864 = vand.u32 %v765, 2147483648
        %v865 = vor.u32 1.1754944e-38, %v864
        %v866 = vsel %vm863, %v865, %v861
        %v867 = vmul.f32 1.0, %v866
        %v868 = vrcp.pop %v766
        %v869 = vmul.f32 %v766, %v868
        %v870 = vsub.f32 1.0, %v869
        %v871 = vmul.f32 %v868, %v870
        %v872 = vadd.f32 %v868, %v871
        %vm873 = vweird.f32 %v766
        %vm874 = vweird.f32 %v868
        %vm875 = vmor %vm873, %vm874
        %v876 = vsel %vm875, %v868, %v872
        %v877 = vand.u32 2147483647, %v766
        %vm878 = vcmp.eq.f32.partialorder %v877, 8.507059e+37
        %v879 = vand.u32 %v766, 2147483648
        %v880 = vor.u32 1.1754944e-38, %v879
        %v881 = vsel %vm878, %v880, %v876
        %v882 = vmul.f32 1.0, %v881
        %v883 = vrcp.pop %v767
        %v884 = vmul.f32 %v767, %v883
        %v885 = vsub.f32 1.0, %v884
        %v886 = vmul.f32 %v883, %v885
        %v887 = vadd.f32 %v883, %v886
        %vm888 = vweird.f32 %v767
        %vm889 = vweird.f32 %v883
        %vm890 = vmor %vm888, %vm889
        %v891 = vsel %vm890, %v883, %v887
        %v892 = vand.u32 2147483647, %v767
        %vm893 = vcmp.eq.f32.partialorder %v892, 8.507059e+37
        %v894 = vand.u32 %v767, 2147483648
        %v895 = vor.u32 1.1754944e-38, %v894
        %v896 = vsel %vm893, %v895, %v891
        %v897 = vmul.f32 1.0, %v896
        %v898 = vrcp.pop %v768
        %v899 = vmul.f32 %v768, %v898
        %v900 = vsub.f32 1.0, %v899
        %v901 = vmul.f32 %v898, %v900
        %v902 = vadd.f32 %v898, %v901
        %vm903 = vweird.f32 %v768
        %vm904 = vweird.f32 %v898
        %vm905 = vmor %vm903, %vm904
        %v906 = vsel %vm905, %v898, %v902
        %v907 = vand.u32 2147483647, %v768
        %vm908 = vcmp.eq.f32.partialorder %v907, 8.507059e+37
        %v909 = vand.u32 %v768, 2147483648
        %v910 = vor.u32 1.1754944e-38, %v909
        %v911 = vsel %vm908, %v910, %v906
        %v912 = vmul.f32 1.0, %v911
        %v913 = vrcp.pop %v769
        %v914 = vmul.f32 %v769, %v913
        %v915 = vsub.f32 1.0, %v914
        %v916 = vmul.f32 %v913, %v915
        %v917 = vadd.f32 %v913, %v916
        %vm918 = vweird.f32 %v769
        %vm919 = vweird.f32 %v913
        %vm920 = vmor %vm918, %vm919
        %v921 = vsel %vm920, %v913, %v917
        %v922 = vand.u32 2147483647, %v769
        %vm923 = vcmp.eq.f32.partialorder %v922, 8.507059e+37
        %v924 = vand.u32 %v769, 2147483648
        %v925 = vor.u32 1.1754944e-38, %v924
        %v926 = vsel %vm923, %v925, %v921
        %v927 = vmul.f32 1.0, %v926
        %v928 = vrcp.pop %v770
        %v929 = vmul.f32 %v770, %v928
        %v930 = vsub.f32 1.0, %v929
        %v931 = vmul.f32 %v928, %v930
        %v932 = vadd.f32 %v928, %v931
        %vm933 = vweird.f32 %v770
        %vm934 = vweird.f32 %v928
        %vm935 = vmor %vm933, %vm934
        %v936 = vsel %vm935, %v928, %v932
        %v937 = vand.u32 2147483647, %v770
        %vm938 = vcmp.eq.f32.partialorder %v937, 8.507059e+37
        %v939 = vand.u32 %v770, 2147483648
        %v940 = vor.u32 1.1754944e-38, %v939
        %v941 = vsel %vm938, %v940, %v936
        %v942 = vmul.f32 1.0, %v941
        %v943 = vrcp.pop %v771
        %v944 = vmul.f32 %v771, %v943
        %v945 = vsub.f32 1.0, %v944
        %v946 = vmul.f32 %v943, %v945
        %v947 = vadd.f32 %v943, %v946
        %vm948 = vweird.f32 %v771
        %vm949 = vweird.f32 %v943
        %vm950 = vmor %vm948, %vm949
        %v951 = vsel %vm950, %v943, %v947
        %v952 = vand.u32 2147483647, %v771
        %vm953 = vcmp.eq.f32.partialorder %v952, 8.507059e+37
        %v954 = vand.u32 %v771, 2147483648
        %v955 = vor.u32 1.1754944e-38, %v954
        %v956 = vsel %vm953, %v955, %v951
        %v957 = vmul.f32 1.0, %v956
        %v958 = vrcp.pop %v772
        %v959 = vmul.f32 %v772, %v958
        %v960 = vsub.f32 1.0, %v959
        %v961 = vmul.f32 %v958, %v960
        %v962 = vadd.f32 %v958, %v961
        %vm963 = vweird.f32 %v772
        %vm964 = vweird.f32 %v958
        %vm965 = vmor %vm963, %vm964
        %v966 = vsel %vm965, %v958, %v962
        %v967 = vand.u32 2147483647, %v772
        %vm968 = vcmp.eq.f32.partialorder %v967, 8.507059e+37
        %v969 = vand.u32 %v772, 2147483648
        %v970 = vor.u32 1.1754944e-38, %v969
        %v971 = vsel %vm968, %v970, %v966
        %v972 = vmul.f32 1.0, %v971
        %v973 = vrcp.pop %v773
        %v974 = vmul.f32 %v773, %v973
        %v975 = vsub.f32 1.0, %v974
        %v976 = vmul.f32 %v973, %v975
        %v977 = vadd.f32 %v973, %v976
        %vm978 = vweird.f32 %v773
        %vm979 = vweird.f32 %v973
        %vm980 = vmor %vm978, %vm979
        %v981 = vsel %vm980, %v973, %v977
        %v982 = vand.u32 2147483647, %v773
        %vm983 = vcmp.eq.f32.partialorder %v982, 8.507059e+37
        %v984 = vand.u32 %v773, 2147483648
        %v985 = vor.u32 1.1754944e-38, %v984
        %v986 = vsel %vm983, %v985, %v981
        %v987 = vmul.f32 1.0, %v986
        %v988 = vrcp.pop %v774
        %v989 = vmul.f32 %v774, %v988
        %v990 = vsub.f32 1.0, %v989
        %v991 = vmul.f32 %v988, %v990
        %v992 = vadd.f32 %v988, %v991
        %vm993 = vweird.f32 %v774
        %vm994 = vweird.f32 %v988
        %vm995 = vmor %vm993, %vm994
        %v996 = vsel %vm995, %v988, %v992
        %v997 = vand.u32 2147483647, %v774
        %vm998 = vcmp.eq.f32.partialorder %v997, 8.507059e+37
        %v999 = vand.u32 %v774, 2147483648
        %v1000 = vor.u32 1.1754944e-38, %v999
        %v1001 = vsel %vm998, %v1000, %v996
        %v1002 = vmul.f32 1.0, %v1001
        %v1003 = vrcp.pop %v775
        %v1004 = vmul.f32 %v775, %v1003
        %v1005 = vsub.f32 1.0, %v1004
        %v1006 = vmul.f32 %v1003, %v1005
        %v1007 = vadd.f32 %v1003, %v1006
        %vm1008 = vweird.f32 %v775
        %vm1009 = vweird.f32 %v1003
        %vm1010 = vmor %vm1008, %vm1009
        %v1011 = vsel %vm1010, %v1003, %v1007
        %v1012 = vand.u32 2147483647, %v775
        %vm1013 = vcmp.eq.f32.partialorder %v1012, 8.507059e+37
        %v1014 = vand.u32 %v775, 2147483648
        %v1015 = vor.u32 1.1754944e-38, %v1014
        %v1016 = vsel %vm1013, %v1015, %v1011
        %v1017 = vmul.f32 1.0, %v1016
        %v1018 = vrcp.pop %v776
        %v1019 = vmul.f32 %v776, %v1018
        %v1020 = vsub.f32 1.0, %v1019
        %v1021 = vmul.f32 %v1018, %v1020
        %v1022 = vadd.f32 %v1018, %v1021
        %vm1023 = vweird.f32 %v776
        %vm1024 = vweird.f32 %v1018
        %vm1025 = vmor %vm1023, %vm1024
        %v1026 = vsel %vm1025, %v1018, %v1022
        %v1027 = vand.u32 2147483647, %v776
        %vm1028 = vcmp.eq.f32.partialorder %v1027, 8.507059e+37
        %v1029 = vand.u32 %v776, 2147483648
        %v1030 = vor.u32 1.1754944e-38, %v1029
        %v1031 = vsel %vm1028, %v1030, %v1026
        %v1032 = vmul.f32 1.0, %v1031
        %v1033 = vrcp.pop %v777
        %v1034 = vmul.f32 %v777, %v1033
        %v1035 = vsub.f32 1.0, %v1034
        %v1036 = vmul.f32 %v1033, %v1035
        %v1037 = vadd.f32 %v1033, %v1036
        %vm1038 = vweird.f32 %v777
        %vm1039 = vweird.f32 %v1033
        %vm1040 = vmor %vm1038, %vm1039
        %v1041 = vsel %vm1040, %v1033, %v1037
        %v1042 = vand.u32 2147483647, %v777
        %vm1043 = vcmp.eq.f32.partialorder %v1042, 8.507059e+37
        %v1044 = vand.u32 %v777, 2147483648
        %v1045 = vor.u32 1.1754944e-38, %v1044
        %v1046 = vsel %vm1043, %v1045, %v1041
        %v1047 = vmul.f32 1.0, %v1046
        %v1048 = vrcp.pop %v778
        %v1049 = vmul.f32 %v778, %v1048
        %v1050 = vsub.f32 1.0, %v1049
        %v1051 = vmul.f32 %v1048, %v1050
        %v1052 = vadd.f32 %v1048, %v1051
        %vm1053 = vweird.f32 %v778
        %vm1054 = vweird.f32 %v1048
        %vm1055 = vmor %vm1053, %vm1054
        %v1056 = vsel %vm1055, %v1048, %v1052
        %v1057 = vand.u32 2147483647, %v778
        %vm1058 = vcmp.eq.f32.partialorder %v1057, 8.507059e+37
        %v1059 = vand.u32 %v778, 2147483648
        %v1060 = vor.u32 1.1754944e-38, %v1059
        %v1061 = vsel %vm1058, %v1060, %v1056
        %v1062 = vmul.f32 1.0, %v1061
        %v1063 = vrcp.pop %v779
        %v1064 = vmul.f32 %v779, %v1063
        %v1065 = vsub.f32 1.0, %v1064
        %v1066 = vmul.f32 %v1063, %v1065
        %v1067 = vadd.f32 %v1063, %v1066
        %vm1068 = vweird.f32 %v779
        %vm1069 = vweird.f32 %v1063
        %vm1070 = vmor %vm1068, %vm1069
        %v1071 = vsel %vm1070, %v1063, %v1067
        %v1072 = vand.u32 2147483647, %v779
        %vm1073 = vcmp.eq.f32.partialorder %v1072, 8.507059e+37
        %v1074 = vand.u32 %v779, 2147483648
        %v1075 = vor.u32 1.1754944e-38, %v1074
        %v1076 = vsel %vm1073, %v1075, %v1071
        %v1077 = vmul.f32 1.0, %v1076
        %v1078 = vrcp.pop %v780
        %v1079 = vmul.f32 %v780, %v1078
        %v1080 = vsub.f32 1.0, %v1079
        %v1081 = vmul.f32 %v1078, %v1080
        %v1082 = vadd.f32 %v1078, %v1081
        %vm1083 = vweird.f32 %v780
        %vm1084 = vweird.f32 %v1078
        %vm1085 = vmor %vm1083, %vm1084
        %v1086 = vsel %vm1085, %v1078, %v1082
        %v1087 = vand.u32 2147483647, %v780
        %vm1088 = vcmp.eq.f32.partialorder %v1087, 8.507059e+37
        %v1089 = vand.u32 %v780, 2147483648
        %v1090 = vor.u32 1.1754944e-38, %v1089
        %v1091 = vsel %vm1088, %v1090, %v1086
        %v1092 = vmul.f32 1.0, %v1091
        %v1093 = vrcp.pop %v781
        %v1094 = vmul.f32 %v781, %v1093
        %v1095 = vsub.f32 1.0, %v1094
        %v1096 = vmul.f32 %v1093, %v1095
        %v1097 = vadd.f32 %v1093, %v1096
        %vm1098 = vweird.f32 %v781
        %vm1099 = vweird.f32 %v1093
        %vm1100 = vmor %vm1098, %vm1099
        %v1101 = vsel %vm1100, %v1093, %v1097
        %v1102 = vand.u32 2147483647, %v781
        %vm1103 = vcmp.eq.f32.partialorder %v1102, 8.507059e+37
        %v1104 = vand.u32 %v781, 2147483648
        %v1105 = vor.u32 1.1754944e-38, %v1104
        %v1106 = vsel %vm1103, %v1105, %v1101
        %v1107 = vmul.f32 1.0, %v1106
        %v1108 = vrcp.pop %v782
        %v1109 = vmul.f32 %v782, %v1108
        %v1110 = vsub.f32 1.0, %v1109
        %v1111 = vmul.f32 %v1108, %v1110
        %v1112 = vadd.f32 %v1108, %v1111
        %vm1113 = vweird.f32 %v782
        %vm1114 = vweird.f32 %v1108
        %vm1115 = vmor %vm1113, %vm1114
        %v1116 = vsel %vm1115, %v1108, %v1112
        %v1117 = vand.u32 2147483647, %v782
        %vm1118 = vcmp.eq.f32.partialorder %v1117, 8.507059e+37
        %v1119 = vand.u32 %v782, 2147483648
        %v1120 = vor.u32 1.1754944e-38, %v1119
        %v1121 = vsel %vm1118, %v1120, %v1116
        %v1122 = vmul.f32 1.0, %v1121
        %v1123 = vrcp.pop %v783
        %v1124 = vmul.f32 %v783, %v1123
        %v1125 = vsub.f32 1.0, %v1124
        %v1126 = vmul.f32 %v1123, %v1125
        %v1127 = vadd.f32 %v1123, %v1126
        %vm1128 = vweird.f32 %v783
        %vm1129 = vweird.f32 %v1123
        %vm1130 = vmor %vm1128, %vm1129
        %v1131 = vsel %vm1130, %v1123, %v1127
        %v1132 = vand.u32 2147483647, %v783
        %vm1133 = vcmp.eq.f32.partialorder %v1132, 8.507059e+37
        %v1134 = vand.u32 %v783, 2147483648
        %v1135 = vor.u32 1.1754944e-38, %v1134
        %v1136 = vsel %vm1133, %v1135, %v1131
        %v1137 = vmul.f32 1.0, %v1136
        %v1138 = vrcp.pop %v784
        %v1139 = vmul.f32 %v784, %v1138
        %v1140 = vsub.f32 1.0, %v1139
        %v1141 = vmul.f32 %v1138, %v1140
        %v1142 = vadd.f32 %v1138, %v1141
        %vm1143 = vweird.f32 %v784
        %vm1144 = vweird.f32 %v1138
        %vm1145 = vmor %vm1143, %vm1144
        %v1146 = vsel %vm1145, %v1138, %v1142
        %v1147 = vand.u32 2147483647, %v784
        %vm1148 = vcmp.eq.f32.partialorder %v1147, 8.507059e+37
        %v1149 = vand.u32 %v784, 2147483648
        %v1150 = vor.u32 1.1754944e-38, %v1149
        %v1151 = vsel %vm1148, %v1150, %v1146
        %v1152 = vmul.f32 1.0, %v1151
        %v1153 = vrcp.pop %v785
        %v1154 = vmul.f32 %v785, %v1153
        %v1155 = vsub.f32 1.0, %v1154
        %v1156 = vmul.f32 %v1153, %v1155
        %v1157 = vadd.f32 %v1153, %v1156
        %vm1158 = vweird.f32 %v785
        %vm1159 = vweird.f32 %v1153
        %vm1160 = vmor %vm1158, %vm1159
        %v1161 = vsel %vm1160, %v1153, %v1157
        %v1162 = vand.u32 2147483647, %v785
        %vm1163 = vcmp.eq.f32.partialorder %v1162, 8.507059e+37
        %v1164 = vand.u32 %v785, 2147483648
        %v1165 = vor.u32 1.1754944e-38, %v1164
        %v1166 = vsel %vm1163, %v1165, %v1161
        %v1167 = vmul.f32 1.0, %v1166
        %v1168 = vrcp.pop %v786
        %v1169 = vmul.f32 %v786, %v1168
        %v1170 = vsub.f32 1.0, %v1169
        %v1171 = vmul.f32 %v1168, %v1170
        %v1172 = vadd.f32 %v1168, %v1171
        %vm1173 = vweird.f32 %v786
        %vm1174 = vweird.f32 %v1168
        %vm1175 = vmor %vm1173, %vm1174
        %v1176 = vsel %vm1175, %v1168, %v1172
        %v1177 = vand.u32 2147483647, %v786
        %vm1178 = vcmp.eq.f32.partialorder %v1177, 8.507059e+37
        %v1179 = vand.u32 %v786, 2147483648
        %v1180 = vor.u32 1.1754944e-38, %v1179
        %v1181 = vsel %vm1178, %v1180, %v1176
        %v1182 = vmul.f32 1.0, %v1181
        %v1183 = vrcp.pop %v787
        %v1184 = vmul.f32 %v787, %v1183
        %v1185 = vsub.f32 1.0, %v1184
        %v1186 = vmul.f32 %v1183, %v1185
        %v1187 = vadd.f32 %v1183, %v1186
        %vm1188 = vweird.f32 %v787
        %vm1189 = vweird.f32 %v1183
        %vm1190 = vmor %vm1188, %vm1189
        %v1191 = vsel %vm1190, %v1183, %v1187
        %v1192 = vand.u32 2147483647, %v787
        %vm1193 = vcmp.eq.f32.partialorder %v1192, 8.507059e+37
        %v1194 = vand.u32 %v787, 2147483648
        %v1195 = vor.u32 1.1754944e-38, %v1194
        %v1196 = vsel %vm1193, %v1195, %v1191
        %v1197 = vmul.f32 1.0, %v1196
        %v1198 = vrcp.pop %v788
        %v1199 = vmul.f32 %v788, %v1198
        %v1200 = vsub.f32 1.0, %v1199
        %v1201 = vmul.f32 %v1198, %v1200
        %v1202 = vadd.f32 %v1198, %v1201
        %vm1203 = vweird.f32 %v788
        %vm1204 = vweird.f32 %v1198
        %vm1205 = vmor %vm1203, %vm1204
        %v1206 = vsel %vm1205, %v1198, %v1202
        %v1207 = vand.u32 2147483647, %v788
        %vm1208 = vcmp.eq.f32.partialorder %v1207, 8.507059e+37
        %v1209 = vand.u32 %v788, 2147483648
        %v1210 = vor.u32 1.1754944e-38, %v1209
        %v1211 = vsel %vm1208, %v1210, %v1206
        %v1212 = vmul.f32 1.0, %v1211
        %v1213 = vrcp.pop %v789
        %v1214 = vmul.f32 %v789, %v1213
        %v1215 = vsub.f32 1.0, %v1214
        %v1216 = vmul.f32 %v1213, %v1215
        %v1217 = vadd.f32 %v1213, %v1216
        %vm1218 = vweird.f32 %v789
        %vm1219 = vweird.f32 %v1213
        %vm1220 = vmor %vm1218, %vm1219
        %v1221 = vsel %vm1220, %v1213, %v1217
        %v1222 = vand.u32 2147483647, %v789
        %vm1223 = vcmp.eq.f32.partialorder %v1222, 8.507059e+37
        %v1224 = vand.u32 %v789, 2147483648
        %v1225 = vor.u32 1.1754944e-38, %v1224
        %v1226 = vsel %vm1223, %v1225, %v1221
        %v1227 = vmul.f32 1.0, %v1226
        %v1228 = vrcp.pop %v790
        %v1229 = vmul.f32 %v790, %v1228
        %v1230 = vsub.f32 1.0, %v1229
        %v1231 = vmul.f32 %v1228, %v1230
        %v1232 = vadd.f32 %v1228, %v1231
        %vm1233 = vweird.f32 %v790
        %vm1234 = vweird.f32 %v1228
        %vm1235 = vmor %vm1233, %vm1234
        %v1236 = vsel %vm1235, %v1228, %v1232
        %v1237 = vand.u32 2147483647, %v790
        %vm1238 = vcmp.eq.f32.partialorder %v1237, 8.507059e+37
        %v1239 = vand.u32 %v790, 2147483648
        %v1240 = vor.u32 1.1754944e-38, %v1239
        %v1241 = vsel %vm1238, %v1240, %v1236
        %v1242 = vmul.f32 1.0, %v1241
        %v1243 = vrcp.pop %v791
        %v1244 = vmul.f32 %v791, %v1243
        %v1245 = vsub.f32 1.0, %v1244
        %v1246 = vmul.f32 %v1243, %v1245
        %v1247 = vadd.f32 %v1243, %v1246
        %vm1248 = vweird.f32 %v791
        %vm1249 = vweird.f32 %v1243
        %vm1250 = vmor %vm1248, %vm1249
        %v1251 = vsel %vm1250, %v1243, %v1247
        %v1252 = vand.u32 2147483647, %v791
        %vm1253 = vcmp.eq.f32.partialorder %v1252, 8.507059e+37
        %v1254 = vand.u32 %v791, 2147483648
        %v1255 = vor.u32 1.1754944e-38, %v1254
        %v1256 = vsel %vm1253, %v1255, %v1251
        %v1257 = vmul.f32 1.0, %v1256
        %v1258 = vrcp.pop %v792
        %v1259 = vmul.f32 %v792, %v1258
        %v1260 = vsub.f32 1.0, %v1259
        %v1261 = vmul.f32 %v1258, %v1260
        %v1262 = vadd.f32 %v1258, %v1261
        %vm1263 = vweird.f32 %v792
        %vm1264 = vweird.f32 %v1258
        %vm1265 = vmor %vm1263, %vm1264
        %v1266 = vsel %vm1265, %v1258, %v1262
        %v1267 = vand.u32 2147483647, %v792
        %vm1268 = vcmp.eq.f32.partialorder %v1267, 8.507059e+37
        %v1269 = vand.u32 %v792, 2147483648
        %v1270 = vor.u32 1.1754944e-38, %v1269
        %v1271 = vsel %vm1268, %v1270, %v1266
        %v1272 = vmul.f32 1.0, %v1271
        %v1273 = vmul.f32 %v340, %v807
        %v1274 = vmul.f32 %v341, %v822
        %v1275 = vmul.f32 %v342, %v837
        %v1276 = vmul.f32 %v343, %v852
        %v1277 = vmul.f32 %v344, %v867
        %v1278 = vmul.f32 %v345, %v882
        %v1279 = vmul.f32 %v346, %v897
        %v1280 = vmul.f32 %v347, %v912
        %v1281 = vmul.f32 %v348, %v927
        %v1282 = vmul.f32 %v349, %v942
        %v1283 = vmul.f32 %v350, %v957
        %v1284 = vmul.f32 %v351, %v972
        %v1285 = vmul.f32 %v352, %v987
        %v1286 = vmul.f32 %v353, %v1002
        %v1287 = vmul.f32 %v354, %v1017
        %v1288 = vmul.f32 %v355, %v1032
        %v1289 = vmul.f32 %v356, %v1047
        %v1290 = vmul.f32 %v357, %v1062
        %v1291 = vmul.f32 %v358, %v1077
        %v1292 = vmul.f32 %v359, %v1092
        %v1293 = vmul.f32 %v360, %v1107
        %v1294 = vmul.f32 %v361, %v1122
        %v1295 = vmul.f32 %v362, %v1137
        %v1296 = vmul.f32 %v363, %v1152
        %v1297 = vmul.f32 %v364, %v1167
        %v1298 = vmul.f32 %v365, %v1182
        %v1299 = vmul.f32 %v366, %v1197
        %v1300 = vmul.f32 %v367, %v1212
        %v1301 = vmul.f32 %v368, %v1227
        %v1302 = vmul.f32 %v369, %v1242
        %v1303 = vmul.f32 %v370, %v1257
        %v1304 = vmul.f32 %v371, %v1272
        %v1305 = vmul.f32 %v276, %v1273
        %v1306 = vmul.f32 %v277, %v1274
        %v1307 = vmul.f32 %v278, %v1275
        %v1308 = vmul.f32 %v279, %v1276
        %v1309 = vmul.f32 %v280, %v1277
        %v1310 = vmul.f32 %v281, %v1278
        %v1311 = vmul.f32 %v282, %v1279
        %v1312 = vmul.f32 %v283, %v1280
        %v1313 = vmul.f32 %v284, %v1281
        %v1314 = vmul.f32 %v285, %v1282
        %v1315 = vmul.f32 %v286, %v1283
        %v1316 = vmul.f32 %v287, %v1284
        %v1317 = vmul.f32 %v288, %v1285
        %v1318 = vmul.f32 %v289, %v1286
        %v1319 = vmul.f32 %v290, %v1287
        %v1320 = vmul.f32 %v291, %v1288
        %v1321 = vmul.f32 %v292, %v1289
        %v1322 = vmul.f32 %v293, %v1290
        %v1323 = vmul.f32 %v294, %v1291
        %v1324 = vmul.f32 %v295, %v1292
        %v1325 = vmul.f32 %v296, %v1293
        %v1326 = vmul.f32 %v297, %v1294
        %v1327 = vmul.f32 %v298, %v1295
        %v1328 = vmul.f32 %v299, %v1296
        %v1329 = vmul.f32 %v300, %v1297
        %v1330 = vmul.f32 %v301, %v1298
        %v1331 = vmul.f32 %v302, %v1299
        %v1332 = vmul.f32 %v303, %v1300
        %v1333 = vmul.f32 %v304, %v1301
        %v1334 = vmul.f32 %v305, %v1302
        %v1335 = vmul.f32 %v306, %v1303
        %v1336 = vmul.f32 %v307, %v1304
        %v1337 = vsub.f32 1.0, %v1273
        %v1338 = vsub.f32 1.0, %v1274
        %v1339 = vsub.f32 1.0, %v1275
        %v1340 = vsub.f32 1.0, %v1276
        %v1341 = vsub.f32 1.0, %v1277
        %v1342 = vsub.f32 1.0, %v1278
        %v1343 = vsub.f32 1.0, %v1279
        %v1344 = vsub.f32 1.0, %v1280
        %v1345 = vsub.f32 1.0, %v1281
        %v1346 = vsub.f32 1.0, %v1282
        %v1347 = vsub.f32 1.0, %v1283
        %v1348 = vsub.f32 1.0, %v1284
        %v1349 = vsub.f32 1.0, %v1285
        %v1350 = vsub.f32 1.0, %v1286
        %v1351 = vsub.f32 1.0, %v1287
        %v1352 = vsub.f32 1.0, %v1288
        %v1353 = vsub.f32 1.0, %v1289
        %v1354 = vsub.f32 1.0, %v1290
        %v1355 = vsub.f32 1.0, %v1291
        %v1356 = vsub.f32 1.0, %v1292
        %v1357 = vsub.f32 1.0, %v1293
        %v1358 = vsub.f32 1.0, %v1294
        %v1359 = vsub.f32 1.0, %v1295
        %v1360 = vsub.f32 1.0, %v1296
        %v1361 = vsub.f32 1.0, %v1297
        %v1362 = vsub.f32 1.0, %v1298
        %v1363 = vsub.f32 1.0, %v1299
        %v1364 = vsub.f32 1.0, %v1300
        %v1365 = vsub.f32 1.0, %v1301
        %v1366 = vsub.f32 1.0, %v1302
        %v1367 = vsub.f32 1.0, %v1303
        %v1368 = vsub.f32 1.0, %v1304
        %v1369 = vmul.f32 %v1337, 0.5
        %v1370 = vmul.f32 %v1338, 0.5
        %v1371 = vmul.f32 %v1339, 0.5
        %v1372 = vmul.f32 %v1340, 0.5
        %v1373 = vmul.f32 %v1341, 0.5
        %v1374 = vmul.f32 %v1342, 0.5
        %v1375 = vmul.f32 %v1343, 0.5
        %v1376 = vmul.f32 %v1344, 0.5
        %v1377 = vmul.f32 %v1345, 0.5
        %v1378 = vmul.f32 %v1346, 0.5
        %v1379 = vmul.f32 %v1347, 0.5
        %v1380 = vmul.f32 %v1348, 0.5
        %v1381 = vmul.f32 %v1349, 0.5
        %v1382 = vmul.f32 %v1350, 0.5
        %v1383 = vmul.f32 %v1351, 0.5
        %v1384 = vmul.f32 %v1352, 0.5
        %v1385 = vmul.f32 %v1353, 0.5
        %v1386 = vmul.f32 %v1354, 0.5
        %v1387 = vmul.f32 %v1355, 0.5
        %v1388 = vmul.f32 %v1356, 0.5
        %v1389 = vmul.f32 %v1357, 0.5
        %v1390 = vmul.f32 %v1358, 0.5
        %v1391 = vmul.f32 %v1359, 0.5
        %v1392 = vmul.f32 %v1360, 0.5
        %v1393 = vmul.f32 %v1361, 0.5
        %v1394 = vmul.f32 %v1362, 0.5
        %v1395 = vmul.f32 %v1363, 0.5
        %v1396 = vmul.f32 %v1364, 0.5
        %v1397 = vmul.f32 %v1365, 0.5
        %v1398 = vmul.f32 %v1366, 0.5
        %v1399 = vmul.f32 %v1367, 0.5
        %v1400 = vmul.f32 %v1368, 0.5
        %v1401 = vmul.f32 %v308, %v1369
        %v1402 = vmul.f32 %v309, %v1370
        %v1403 = vmul.f32 %v310, %v1371
        %v1404 = vmul.f32 %v311, %v1372
        %v1405 = vmul.f32 %v312, %v1373
        %v1406 = vmul.f32 %v313, %v1374
        %v1407 = vmul.f32 %v314, %v1375
        %v1408 = vmul.f32 %v315, %v1376
        %v1409 = vmul.f32 %v316, %v1377
        %v1410 = vmul.f32 %v317, %v1378
        %v1411 = vmul.f32 %v318, %v1379
        %v1412 = vmul.f32 %v319, %v1380
        %v1413 = vmul.f32 %v320, %v1381
        %v1414 = vmul.f32 %v321, %v1382
        %v1415 = vmul.f32 %v322, %v1383
        %v1416 = vmul.f32 %v323, %v1384
        %v1417 = vmul.f32 %v324, %v1385
        %v1418 = vmul.f32 %v325, %v1386
        %v1419 = vmul.f32 %v326, %v1387
        %v1420 = vmul.f32 %v327, %v1388
        %v1421 = vmul.f32 %v328, %v1389
        %v1422 = vmul.f32 %v329, %v1390
        %v1423 = vmul.f32 %v330, %v1391
        %v1424 = vmul.f32 %v331, %v1392
        %v1425 = vmul.f32 %v332, %v1393
        %v1426 = vmul.f32 %v333, %v1394
        %v1427 = vmul.f32 %v334, %v1395
        %v1428 = vmul.f32 %v335, %v1396
        %v1429 = vmul.f32 %v336, %v1397
        %v1430 = vmul.f32 %v337, %v1398
        %v1431 = vmul.f32 %v338, %v1399
        %v1432 = vmul.f32 %v339, %v1400
        %v1433 = vadd.f32 %v1305, %v1401
        %v1434 = vadd.f32 %v1306, %v1402
        %v1435 = vadd.f32 %v1307, %v1403
        %v1436 = vadd.f32 %v1308, %v1404
        %v1437 = vadd.f32 %v1309, %v1405
        %v1438 = vadd.f32 %v1310, %v1406
        %v1439 = vadd.f32 %v1311, %v1407
        %v1440 = vadd.f32 %v1312, %v1408
        %v1441 = vadd.f32 %v1313, %v1409
        %v1442 = vadd.f32 %v1314, %v1410
        %v1443 = vadd.f32 %v1315, %v1411
        %v1444 = vadd.f32 %v1316, %v1412
        %v1445 = vadd.f32 %v1317, %v1413
        %v1446 = vadd.f32 %v1318, %v1414
        %v1447 = vadd.f32 %v1319, %v1415
        %v1448 = vadd.f32 %v1320, %v1416
        %v1449 = vadd.f32 %v1321, %v1417
        %v1450 = vadd.f32 %v1322, %v1418
        %v1451 = vadd.f32 %v1323, %v1419
        %v1452 = vadd.f32 %v1324, %v1420
        %v1453 = vadd.f32 %v1325, %v1421
        %v1454 = vadd.f32 %v1326, %v1422
        %v1455 = vadd.f32 %v1327, %v1423
        %v1456 = vadd.f32 %v1328, %v1424
        %v1457 = vadd.f32 %v1329, %v1425
        %v1458 = vadd.f32 %v1330, %v1426
        %v1459 = vadd.f32 %v1331, %v1427
        %v1460 = vadd.f32 %v1332, %v1428
        %v1461 = vadd.f32 %v1333, %v1429
        %v1462 = vadd.f32 %v1334, %v1430
        %v1463 = vadd.f32 %v1335, %v1431
        %v1464 = vadd.f32 %v1336, %v1432
        %1465 = vst [vmem:[#allocation2] sm:$0xff] 0.0
        %1466 = vst [vmem:[#allocation2 + $0x8] sm:$0xff] 0.0
        %1467 = vst [vmem:[#allocation2 + $0x10] sm:$0x3] 0.0
        %1468 = vst [vmem:[#allocation2 + $0x18] sm:$0xff] 0.0
        %1469 = vst [vmem:[#allocation2 + $0x20] sm:$0xff] 0.0
        %1470 = vst [vmem:[#allocation2 + $0x28] sm:$0x3] 0.0
        %1471 = vst [vmem:[#allocation2 + $0x30] sm:$0xff] 0.0
        %1472 = vst [vmem:[#allocation2 + $0x38] sm:$0xff] 0.0
        %1473 = vst [vmem:[#allocation2 + $0x40] sm:$0x3] 0.0
        %1474 = vst [vmem:[#allocation2 + $0x48] sm:$0xff] 0.0
        %1475 = vst [vmem:[#allocation2 + $0x50] sm:$0xff] 0.0
        %1476 = vst [vmem:[#allocation2 + $0x58] sm:$0x3] 0.0
        %1477 = vst [vmem:[#allocation2 + $0x60] sm:$0xff] 0.0
        %1478 = vst [vmem:[#allocation2 + $0x68] sm:$0xff] 0.0
        %1479 = vst [vmem:[#allocation2 + $0x70] sm:$0x3] 0.0
        %1480 = vst [vmem:[#allocation2 + $0x78] sm:$0xff] 0.0
        %1481 = vst [vmem:[#allocation2 + $0x80] sm:$0xff] 0.0
        %1482 = vst [vmem:[#allocation2 + $0x88] sm:$0x3] 0.0
        %1483 = vst [vmem:[#allocation2 + $0x90] sm:$0xff] 0.0
        %1484 = vst [vmem:[#allocation2 + $0x98] sm:$0xff] 0.0
        %1485 = vst [vmem:[#allocation2 + $0xa0] sm:$0x3] 0.0
        %1486 = vst [vmem:[#allocation2 + $0xa8] sm:$0xff] 0.0
        %1487 = vst [vmem:[#allocation2 + $0xb0] sm:$0xff] 0.0
        %1488 = vst [vmem:[#allocation2 + $0xb8] sm:$0x3] 0.0
        %1489 = vst [vmem:[#allocation2 + $0xc0] sm:$0xff] 0.0
        %1490 = vst [vmem:[#allocation2 + $0xc8] sm:$0xff] 0.0
        %1491 = vst [vmem:[#allocation2 + $0xd0] sm:$0x3] 0.0
        %1492 = vst [vmem:[#allocation2 + $0xd8] sm:$0xff] 0.0
        %1493 = vst [vmem:[#allocation2 + $0xe0] sm:$0xff] 0.0
        %1494 = vst [vmem:[#allocation2 + $0xe8] sm:$0x3] 0.0
        %1495 = vst [vmem:[#allocation2 + $0xf0] sm:$0xff] 0.0
        %1496 = vst [vmem:[#allocation2 + $0xf8] sm:$0xff] 0.0
        %1497 = vst [vmem:[#allocation2 + $0x100] sm:$0x3] 0.0
        %1498 = vst [vmem:[#allocation2 + $0x108] sm:$0xff] 0.0
        %1499 = vst [vmem:[#allocation2 + $0x110] sm:$0xff] 0.0
        %1500 = vst [vmem:[#allocation2 + $0x118] sm:$0x3] 0.0
        %1501 = vst [vmem:[#allocation2 + $0x120] sm:$0xff] 0.0
        %1502 = vst [vmem:[#allocation2 + $0x128] sm:$0xff] 0.0
        %1503 = vst [vmem:[#allocation2 + $0x130] sm:$0x3] 0.0
        %1504 = vst [vmem:[#allocation2 + $0x138] sm:$0xff] 0.0
        %1505 = vst [vmem:[#allocation2 + $0x140] sm:$0xff] 0.0
        %1506 = vst [vmem:[#allocation2 + $0x148] sm:$0x3] 0.0
        %1507 = vst [vmem:[#allocation2 + $0x150] sm:$0xff] 0.0
        %1508 = vst [vmem:[#allocation2 + $0x158] sm:$0xff] 0.0
        %1509 = vst [vmem:[#allocation2 + $0x160] sm:$0x3] 0.0
        %1510 = vst [vmem:[#allocation2 + $0x168] sm:$0xff] 0.0
        %1511 = vst [vmem:[#allocation2 + $0x170] sm:$0xff] 0.0
        %1512 = vst [vmem:[#allocation2 + $0x178] sm:$0x3] 0.0
        %1513 = vst [vmem:[#allocation2 + $0x180] sm:$0xff] 0.0
        %1514 = vst [vmem:[#allocation2 + $0x188] sm:$0xff] 0.0
        %1515 = vst [vmem:[#allocation2 + $0x190] sm:$0x3] 0.0
        %1516 = vst [vmem:[#allocation2 + $0x198] sm:$0xff] 0.0
        %1517 = vst [vmem:[#allocation2 + $0x1a0] sm:$0xff] 0.0
        %1518 = vst [vmem:[#allocation2 + $0x1a8] sm:$0x3] 0.0
        %s1519 = scalar_lea.vmem [#allocation2], 24
        %1520 = vst.msk [vmem:[%s1519 + $0x1] sm:$0xff] %vm372, %v1433
        %1521 = vst.msk [vmem:[%s1519 + $0x9] sm:$0xff] %vm372, %v1434
        %1522 = vst.msk [vmem:[%s1519 + $0x19] sm:$0xff] %vm372, %v1435
        %1523 = vst.msk [vmem:[%s1519 + $0x21] sm:$0xff] %vm372, %v1436
        %1524 = vst.msk [vmem:[%s1519 + $0x31] sm:$0xff] %vm372, %v1437
        %1525 = vst.msk [vmem:[%s1519 + $0x39] sm:$0xff] %vm372, %v1438
        %1526 = vst.msk [vmem:[%s1519 + $0x49] sm:$0xff] %vm372, %v1439
        %1527 = vst.msk [vmem:[%s1519 + $0x51] sm:$0xff] %vm372, %v1440
        %1528 = vst.msk [vmem:[%s1519 + $0x61] sm:$0xff] %vm372, %v1441
        %1529 = vst.msk [vmem:[%s1519 + $0x69] sm:$0xff] %vm372, %v1442
        %1530 = vst.msk [vmem:[%s1519 + $0x79] sm:$0xff] %vm372, %v1443
        %1531 = vst.msk [vmem:[%s1519 + $0x81] sm:$0xff] %vm372, %v1444
        %1532 = vst.msk [vmem:[%s1519 + $0x91] sm:$0xff] %vm372, %v1445
        %1533 = vst.msk [vmem:[%s1519 + $0x99] sm:$0xff] %vm372, %v1446
        %1534 = vst.msk [vmem:[%s1519 + $0xa9] sm:$0xff] %vm372, %v1447
        %1535 = vst.msk [vmem:[%s1519 + $0xb1] sm:$0xff] %vm372, %v1448
        %1536 = vst.msk [vmem:[%s1519 + $0xc1] sm:$0xff] %vm372, %v1449
        %1537 = vst.msk [vmem:[%s1519 + $0xc9] sm:$0xff] %vm372, %v1450
        %1538 = vst.msk [vmem:[%s1519 + $0xd9] sm:$0xff] %vm372, %v1451
        %1539 = vst.msk [vmem:[%s1519 + $0xe1] sm:$0xff] %vm372, %v1452
        %1540 = vst.msk [vmem:[%s1519 + $0xf1] sm:$0xff] %vm372, %v1453
        %1541 = vst.msk [vmem:[%s1519 + $0xf9] sm:$0xff] %vm372, %v1454
        %1542 = vst.msk [vmem:[%s1519 + $0x109] sm:$0xff] %vm372, %v1455
        %1543 = vst.msk [vmem:[%s1519 + $0x111] sm:$0xff] %vm372, %v1456
        %1544 = vst.msk [vmem:[%s1519 + $0x121] sm:$0xff] %vm372, %v1457
        %1545 = vst.msk [vmem:[%s1519 + $0x129] sm:$0xff] %vm372, %v1458
        %1546 = vst.msk [vmem:[%s1519 + $0x139] sm:$0xff] %vm372, %v1459
        %1547 = vst.msk [vmem:[%s1519 + $0x141] sm:$0xff] %vm372, %v1460
        %1548 = vst.msk [vmem:[%s1519 + $0x151] sm:$0xff] %vm372, %v1461
        %1549 = vst.msk [vmem:[%s1519 + $0x159] sm:$0xff] %vm372, %v1462
        %1550 = vst.msk [vmem:[%s1519 + $0x169] sm:$0xff] %vm372, %v1463
        %1551 = vst.msk [vmem:[%s1519 + $0x171] sm:$0xff] %vm372, %v1464
        %v1552 = vld [vmem:[#allocation2] sm:$0xff]
        %v1553 = vld [vmem:[#allocation2 + $0x8] sm:$0xff]
        %v1554 = vld [vmem:[#allocation2 + $0x18] sm:$0xff]
        %v1555 = vld [vmem:[#allocation2 + $0x20] sm:$0xff]
        %v1556 = vld [vmem:[#allocation2 + $0x30] sm:$0xff]
        %v1557 = vld [vmem:[#allocation2 + $0x38] sm:$0xff]
        %v1558 = vld [vmem:[#allocation2 + $0x48] sm:$0xff]
        %v1559 = vld [vmem:[#allocation2 + $0x50] sm:$0xff]
        %v1560 = vld [vmem:[#allocation2 + $0x60] sm:$0xff]
        %v1561 = vld [vmem:[#allocation2 + $0x68] sm:$0xff]
        %v1562 = vld [vmem:[#allocation2 + $0x78] sm:$0xff]
        %v1563 = vld [vmem:[#allocation2 + $0x80] sm:$0xff]
        %v1564 = vld [vmem:[#allocation2 + $0x90] sm:$0xff]
        %v1565 = vld [vmem:[#allocation2 + $0x98] sm:$0xff]
        %v1566 = vld [vmem:[#allocation2 + $0xa8] sm:$0xff]
        %v1567 = vld [vmem:[#allocation2 + $0xb0] sm:$0xff]
        %v1568 = vld [vmem:[#allocation2 + $0xc0] sm:$0xff]
        %v1569 = vld [vmem:[#allocation2 + $0xc8] sm:$0xff]
        %v1570 = vld [vmem:[#allocation2 + $0xd8] sm:$0xff]
        %v1571 = vld [vmem:[#allocation2 + $0xe0] sm:$0xff]
        %v1572 = vld [vmem:[#allocation2 + $0xf0] sm:$0xff]
        %v1573 = vld [vmem:[#allocation2 + $0xf8] sm:$0xff]
        %v1574 = vld [vmem:[#allocation2 + $0x108] sm:$0xff]
        %v1575 = vld [vmem:[#allocation2 + $0x110] sm:$0xff]
        %v1576 = vld [vmem:[#allocation2 + $0x120] sm:$0xff]
        %v1577 = vld [vmem:[#allocation2 + $0x128] sm:$0xff]
        %v1578 = vld [vmem:[#allocation2 + $0x138] sm:$0xff]
        %v1579 = vld [vmem:[#allocation2 + $0x140] sm:$0xff]
        %v1580 = vld [vmem:[#allocation2 + $0x150] sm:$0xff]
        %v1581 = vld [vmem:[#allocation2 + $0x158] sm:$0xff]
        %v1582 = vld [vmem:[#allocation2 + $0x168] sm:$0xff]
        %v1583 = vld [vmem:[#allocation2 + $0x170] sm:$0xff]
        %v1584 = vld [vmem:[#allocation2 + $0x1] sm:$0xff]
        %v1585 = vld [vmem:[#allocation2 + $0x9] sm:$0xff]
        %v1586 = vld [vmem:[#allocation2 + $0x19] sm:$0xff]
        %v1587 = vld [vmem:[#allocation2 + $0x21] sm:$0xff]
        %v1588 = vld [vmem:[#allocation2 + $0x31] sm:$0xff]
        %v1589 = vld [vmem:[#allocation2 + $0x39] sm:$0xff]
        %v1590 = vld [vmem:[#allocation2 + $0x49] sm:$0xff]
        %v1591 = vld [vmem:[#allocation2 + $0x51] sm:$0xff]
        %v1592 = vld [vmem:[#allocation2 + $0x61] sm:$0xff]
        %v1593 = vld [vmem:[#allocation2 + $0x69] sm:$0xff]
        %v1594 = vld [vmem:[#allocation2 + $0x79] sm:$0xff]
        %v1595 = vld [vmem:[#allocation2 + $0x81] sm:$0xff]
        %v1596 = vld [vmem:[#allocation2 + $0x91] sm:$0xff]
        %v1597 = vld [vmem:[#allocation2 + $0x99] sm:$0xff]
        %v1598 = vld [vmem:[#allocation2 + $0xa9] sm:$0xff]
        %v1599 = vld [vmem:[#allocation2 + $0xb1] sm:$0xff]
        %v1600 = vld [vmem:[#allocation2 + $0xc1] sm:$0xff]
        %v1601 = vld [vmem:[#allocation2 + $0xc9] sm:$0xff]
        %v1602 = vld [vmem:[#allocation2 + $0xd9] sm:$0xff]
        %v1603 = vld [vmem:[#allocation2 + $0xe1] sm:$0xff]
        %v1604 = vld [vmem:[#allocation2 + $0xf1] sm:$0xff]
        %v1605 = vld [vmem:[#allocation2 + $0xf9] sm:$0xff]
        %v1606 = vld [vmem:[#allocation2 + $0x109] sm:$0xff]
        %v1607 = vld [vmem:[#allocation2 + $0x111] sm:$0xff]
        %v1608 = vld [vmem:[#allocation2 + $0x121] sm:$0xff]
        %v1609 = vld [vmem:[#allocation2 + $0x129] sm:$0xff]
        %v1610 = vld [vmem:[#allocation2 + $0x139] sm:$0xff]
        %v1611 = vld [vmem:[#allocation2 + $0x141] sm:$0xff]
        %v1612 = vld [vmem:[#allocation2 + $0x151] sm:$0xff]
        %v1613 = vld [vmem:[#allocation2 + $0x159] sm:$0xff]
        %v1614 = vld [vmem:[#allocation2 + $0x169] sm:$0xff]
        %v1615 = vld [vmem:[#allocation2 + $0x171] sm:$0xff]
        %v1616 = vld [vmem:[#allocation2 + $0x2] sm:$0xff]
        %v1617 = vld [vmem:[#allocation2 + $0xa] sm:$0xff]
        %v1618 = vld [vmem:[#allocation2 + $0x1a] sm:$0xff]
        %v1619 = vld [vmem:[#allocation2 + $0x22] sm:$0xff]
        %v1620 = vld [vmem:[#allocation2 + $0x32] sm:$0xff]
        %v1621 = vld [vmem:[#allocation2 + $0x3a] sm:$0xff]
        %v1622 = vld [vmem:[#allocation2 + $0x4a] sm:$0xff]
        %v1623 = vld [vmem:[#allocation2 + $0x52] sm:$0xff]
        %v1624 = vld [vmem:[#allocation2 + $0x62] sm:$0xff]
        %v1625 = vld [vmem:[#allocation2 + $0x6a] sm:$0xff]
        %v1626 = vld [vmem:[#allocation2 + $0x7a] sm:$0xff]
        %v1627 = vld [vmem:[#allocation2 + $0x82] sm:$0xff]
        %v1628 = vld [vmem:[#allocation2 + $0x92] sm:$0xff]
        %v1629 = vld [vmem:[#allocation2 + $0x9a] sm:$0xff]
        %v1630 = vld [vmem:[#allocation2 + $0xaa] sm:$0xff]
        %v1631 = vld [vmem:[#allocation2 + $0xb2] sm:$0xff]
        %v1632 = vld [vmem:[#allocation2 + $0xc2] sm:$0xff]
        %v1633 = vld [vmem:[#allocation2 + $0xca] sm:$0xff]
        %v1634 = vld [vmem:[#allocation2 + $0xda] sm:$0xff]
        %v1635 = vld [vmem:[#allocation2 + $0xe2] sm:$0xff]
        %v1636 = vld [vmem:[#allocation2 + $0xf2] sm:$0xff]
        %v1637 = vld [vmem:[#allocation2 + $0xfa] sm:$0xff]
        %v1638 = vld [vmem:[#allocation2 + $0x10a] sm:$0xff]
        %v1639 = vld [vmem:[#allocation2 + $0x112] sm:$0xff]
        %v1640 = vld [vmem:[#allocation2 + $0x122] sm:$0xff]
        %v1641 = vld [vmem:[#allocation2 + $0x12a] sm:$0xff]
        %v1642 = vld [vmem:[#allocation2 + $0x13a] sm:$0xff]
        %v1643 = vld [vmem:[#allocation2 + $0x142] sm:$0xff]
        %v1644 = vld [vmem:[#allocation2 + $0x152] sm:$0xff]
        %v1645 = vld [vmem:[#allocation2 + $0x15a] sm:$0xff]
        %v1646 = vld [vmem:[#allocation2 + $0x16a] sm:$0xff]
        %v1647 = vld [vmem:[#allocation2 + $0x172] sm:$0xff]
        %v1648 = vpack.c.bf16 %v1553, %v1552
        %v1649 = vpack.c.bf16 %v1585, %v1584
        %v1650 = vpack.c.bf16 %v1617, %v1616
        %v1651 = vpack.c.bf16 %v1555, %v1554
        %v1652 = vpack.c.bf16 %v1587, %v1586
        %v1653 = vpack.c.bf16 %v1619, %v1618
        %v1654 = vpack.c.bf16 %v1557, %v1556
        %v1655 = vpack.c.bf16 %v1589, %v1588
        %v1656 = vpack.c.bf16 %v1621, %v1620
        %v1657 = vpack.c.bf16 %v1559, %v1558
        %v1658 = vpack.c.bf16 %v1591, %v1590
        %v1659 = vpack.c.bf16 %v1623, %v1622
        %v1660 = vpack.c.bf16 %v1561, %v1560
        %v1661 = vpack.c.bf16 %v1593, %v1592
        %v1662 = vpack.c.bf16 %v1625, %v1624
        %v1663 = vpack.c.bf16 %v1563, %v1562
        %v1664 = vpack.c.bf16 %v1595, %v1594
        %v1665 = vpack.c.bf16 %v1627, %v1626
        %v1666 = vpack.c.bf16 %v1565, %v1564
        %v1667 = vpack.c.bf16 %v1597, %v1596
        %v1668 = vpack.c.bf16 %v1629, %v1628
        %v1669 = vpack.c.bf16 %v1567, %v1566
        %v1670 = vpack.c.bf16 %v1599, %v1598
        %v1671 = vpack.c.bf16 %v1631, %v1630
        %v1672 = vpack.c.bf16 %v1569, %v1568
        %v1673 = vpack.c.bf16 %v1601, %v1600
        %v1674 = vpack.c.bf16 %v1633, %v1632
        %v1675 = vpack.c.bf16 %v1571, %v1570
        %v1676 = vpack.c.bf16 %v1603, %v1602
        %v1677 = vpack.c.bf16 %v1635, %v1634
        %v1678 = vpack.c.bf16 %v1573, %v1572
        %v1679 = vpack.c.bf16 %v1605, %v1604
        %v1680 = vpack.c.bf16 %v1637, %v1636
        %v1681 = vpack.c.bf16 %v1575, %v1574
        %v1682 = vpack.c.bf16 %v1607, %v1606
        %v1683 = vpack.c.bf16 %v1639, %v1638
        %v1684 = vpack.c.bf16 %v1577, %v1576
        %v1685 = vpack.c.bf16 %v1609, %v1608
        %v1686 = vpack.c.bf16 %v1641, %v1640
        %v1687 = vpack.c.bf16 %v1579, %v1578
        %v1688 = vpack.c.bf16 %v1611, %v1610
        %v1689 = vpack.c.bf16 %v1643, %v1642
        %v1690 = vpack.c.bf16 %v1581, %v1580
        %v1691 = vpack.c.bf16 %v1613, %v1612
        %v1692 = vpack.c.bf16 %v1645, %v1644
        %v1693 = vpack.c.bf16 %v1583, %v1582
        %v1694 = vpack.c.bf16 %v1615, %v1614
        %v1695 = vpack.c.bf16 %v1647, %v1646
        %v1696 = vld [vmem:[#allocation8] sm:$0xf]
        %v1697 = vld [vmem:[#allocation8 + $0x4] sm:$0xf]
        %v1698 = vld [vmem:[#allocation8 + $0x8] sm:$0xf]
        %v1699 = vld [vmem:[#allocation8 + $0xc] sm:$0xf]
        %v1700 = vld [vmem:[#allocation8 + $0x10] sm:$0xf]
        %v1701 = vld [vmem:[#allocation8 + $0x14] sm:$0xf]
        %v1702 = vld [vmem:[#allocation8 + $0x18] sm:$0xf]
        %v1703 = vld [vmem:[#allocation8 + $0x1c] sm:$0xf]
        %v1704 = vld [vmem:[#allocation8 + $0x20] sm:$0xf]
        %v1705 = vld [vmem:[#allocation8 + $0x24] sm:$0xf]
        %v1706 = vld [vmem:[#allocation8 + $0x28] sm:$0xf]
        %v1707 = vld [vmem:[#allocation8 + $0x2c] sm:$0xf]
        %v1708 = vld [vmem:[#allocation8 + $0x30] sm:$0xf]
        %v1709 = vld [vmem:[#allocation8 + $0x34] sm:$0xf]
        %v1710 = vld [vmem:[#allocation8 + $0x38] sm:$0xf]
        %v1711 = vld [vmem:[#allocation8 + $0x3c] sm:$0xf]
        %v1712 = vld [vmem:[#allocation8 + $0x40] sm:$0xf]
        %v1713 = vld [vmem:[#allocation8 + $0x44] sm:$0xf]
        %v1714 = vld [vmem:[#allocation8 + $0x48] sm:$0xf]
        %v1715 = vld [vmem:[#allocation8 + $0x4c] sm:$0xf]
        %v1716 = vld [vmem:[#allocation8 + $0x50] sm:$0xf]
        %v1717 = vld [vmem:[#allocation8 + $0x54] sm:$0xf]
        %v1718 = vld [vmem:[#allocation8 + $0x58] sm:$0xf]
        %v1719 = vld [vmem:[#allocation8 + $0x5c] sm:$0xf]
        %v1720 = vld [vmem:[#allocation8 + $0x60] sm:$0xf]
        %v1721 = vld [vmem:[#allocation8 + $0x64] sm:$0xf]
        %v1722 = vld [vmem:[#allocation8 + $0x68] sm:$0xf]
        %v1723 = vld [vmem:[#allocation8 + $0x6c] sm:$0xf]
        %v1724 = vld [vmem:[#allocation8 + $0x70] sm:$0xf]
        %v1725 = vld [vmem:[#allocation8 + $0x74] sm:$0xf]
        %v1726 = vld [vmem:[#allocation8 + $0x78] sm:$0xf]
        %v1727 = vld [vmem:[#allocation8 + $0x7c] sm:$0xf]
        %v1728 = vld [vmem:[#allocation8 + $0x80] sm:$0xf]
        %v1729 = vld [vmem:[#allocation8 + $0x84] sm:$0xf]
        %v1730 = vld [vmem:[#allocation8 + $0x88] sm:$0xf]
        %v1731 = vld [vmem:[#allocation8 + $0x8c] sm:$0xf]
        %v1732 = vld [vmem:[#allocation8 + $0x90] sm:$0xf]
        %v1733 = vld [vmem:[#allocation8 + $0x94] sm:$0xf]
        %v1734 = vld [vmem:[#allocation8 + $0x98] sm:$0xf]
        %v1735 = vld [vmem:[#allocation8 + $0x9c] sm:$0xf]
        %v1736 = vld [vmem:[#allocation8 + $0xa0] sm:$0xf]
        %v1737 = vld [vmem:[#allocation8 + $0xa4] sm:$0xf]
        %v1738 = vld [vmem:[#allocation8 + $0xa8] sm:$0xf]
        %v1739 = vld [vmem:[#allocation8 + $0xac] sm:$0xf]
        %v1740 = vld [vmem:[#allocation8 + $0xb0] sm:$0xf]
        %v1741 = vld [vmem:[#allocation8 + $0xb4] sm:$0xf]
        %v1742 = vld [vmem:[#allocation8 + $0xb8] sm:$0xf]
        %v1743 = vld [vmem:[#allocation8 + $0xbc] sm:$0xf]
        %v1744 = vld [vmem:[%s1519] sm:$0xff]
        %v1745 = vld [vmem:[%s1519 + $0x8] sm:$0xff]
        %v1746 = vld [vmem:[%s1519 + $0x18] sm:$0xff]
        %v1747 = vld [vmem:[%s1519 + $0x20] sm:$0xff]
        %v1748 = vld [vmem:[%s1519 + $0x30] sm:$0xff]
        %v1749 = vld [vmem:[%s1519 + $0x38] sm:$0xff]
        %v1750 = vld [vmem:[%s1519 + $0x48] sm:$0xff]
        %v1751 = vld [vmem:[%s1519 + $0x50] sm:$0xff]
        %v1752 = vld [vmem:[%s1519 + $0x60] sm:$0xff]
        %v1753 = vld [vmem:[%s1519 + $0x68] sm:$0xff]
        %v1754 = vld [vmem:[%s1519 + $0x78] sm:$0xff]
        %v1755 = vld [vmem:[%s1519 + $0x80] sm:$0xff]
        %v1756 = vld [vmem:[%s1519 + $0x90] sm:$0xff]
        %v1757 = vld [vmem:[%s1519 + $0x98] sm:$0xff]
        %v1758 = vld [vmem:[%s1519 + $0xa8] sm:$0xff]
        %v1759 = vld [vmem:[%s1519 + $0xb0] sm:$0xff]
        %v1760 = vld [vmem:[%s1519 + $0xc0] sm:$0xff]
        %v1761 = vld [vmem:[%s1519 + $0xc8] sm:$0xff]
        %v1762 = vld [vmem:[%s1519 + $0xd8] sm:$0xff]
        %v1763 = vld [vmem:[%s1519 + $0xe0] sm:$0xff]
        %v1764 = vld [vmem:[%s1519 + $0xf0] sm:$0xff]
        %v1765 = vld [vmem:[%s1519 + $0xf8] sm:$0xff]
        %v1766 = vld [vmem:[%s1519 + $0x108] sm:$0xff]
        %v1767 = vld [vmem:[%s1519 + $0x110] sm:$0xff]
        %v1768 = vld [vmem:[%s1519 + $0x120] sm:$0xff]
        %v1769 = vld [vmem:[%s1519 + $0x128] sm:$0xff]
        %v1770 = vld [vmem:[%s1519 + $0x138] sm:$0xff]
        %v1771 = vld [vmem:[%s1519 + $0x140] sm:$0xff]
        %v1772 = vld [vmem:[%s1519 + $0x150] sm:$0xff]
        %v1773 = vld [vmem:[%s1519 + $0x158] sm:$0xff]
        %v1774 = vld [vmem:[%s1519 + $0x168] sm:$0xff]
        %v1775 = vld [vmem:[%s1519 + $0x170] sm:$0xff]
        %v1776 = vld [vmem:[%s1519 + $0x1] sm:$0xff]
        %v1777 = vld [vmem:[%s1519 + $0x9] sm:$0xff]
        %v1778 = vld [vmem:[%s1519 + $0x19] sm:$0xff]
        %v1779 = vld [vmem:[%s1519 + $0x21] sm:$0xff]
        %v1780 = vld [vmem:[%s1519 + $0x31] sm:$0xff]
        %v1781 = vld [vmem:[%s1519 + $0x39] sm:$0xff]
        %v1782 = vld [vmem:[%s1519 + $0x49] sm:$0xff]
        %v1783 = vld [vmem:[%s1519 + $0x51] sm:$0xff]
        %v1784 = vld [vmem:[%s1519 + $0x61] sm:$0xff]
        %v1785 = vld [vmem:[%s1519 + $0x69] sm:$0xff]
        %v1786 = vld [vmem:[%s1519 + $0x79] sm:$0xff]
        %v1787 = vld [vmem:[%s1519 + $0x81] sm:$0xff]
        %v1788 = vld [vmem:[%s1519 + $0x91] sm:$0xff]
        %v1789 = vld [vmem:[%s1519 + $0x99] sm:$0xff]
        %v1790 = vld [vmem:[%s1519 + $0xa9] sm:$0xff]
        %v1791 = vld [vmem:[%s1519 + $0xb1] sm:$0xff]
        %v1792 = vld [vmem:[%s1519 + $0xc1] sm:$0xff]
        %v1793 = vld [vmem:[%s1519 + $0xc9] sm:$0xff]
        %v1794 = vld [vmem:[%s1519 + $0xd9] sm:$0xff]
        %v1795 = vld [vmem:[%s1519 + $0xe1] sm:$0xff]
        %v1796 = vld [vmem:[%s1519 + $0xf1] sm:$0xff]
        %v1797 = vld [vmem:[%s1519 + $0xf9] sm:$0xff]
        %v1798 = vld [vmem:[%s1519 + $0x109] sm:$0xff]
        %v1799 = vld [vmem:[%s1519 + $0x111] sm:$0xff]
        %v1800 = vld [vmem:[%s1519 + $0x121] sm:$0xff]
        %v1801 = vld [vmem:[%s1519 + $0x129] sm:$0xff]
        %v1802 = vld [vmem:[%s1519 + $0x139] sm:$0xff]
        %v1803 = vld [vmem:[%s1519 + $0x141] sm:$0xff]
        %v1804 = vld [vmem:[%s1519 + $0x151] sm:$0xff]
        %v1805 = vld [vmem:[%s1519 + $0x159] sm:$0xff]
        %v1806 = vld [vmem:[%s1519 + $0x169] sm:$0xff]
        %v1807 = vld [vmem:[%s1519 + $0x171] sm:$0xff]
        %v1808 = vld [vmem:[%s1519 + $0x2] sm:$0xff]
        %v1809 = vld [vmem:[%s1519 + $0xa] sm:$0xff]
        %v1810 = vld [vmem:[%s1519 + $0x1a] sm:$0xff]
        %v1811 = vld [vmem:[%s1519 + $0x22] sm:$0xff]
        %v1812 = vld [vmem:[%s1519 + $0x32] sm:$0xff]
        %v1813 = vld [vmem:[%s1519 + $0x3a] sm:$0xff]
        %v1814 = vld [vmem:[%s1519 + $0x4a] sm:$0xff]
        %v1815 = vld [vmem:[%s1519 + $0x52] sm:$0xff]
        %v1816 = vld [vmem:[%s1519 + $0x62] sm:$0xff]
        %v1817 = vld [vmem:[%s1519 + $0x6a] sm:$0xff]
        %v1818 = vld [vmem:[%s1519 + $0x7a] sm:$0xff]
        %v1819 = vld [vmem:[%s1519 + $0x82] sm:$0xff]
        %v1820 = vld [vmem:[%s1519 + $0x92] sm:$0xff]
        %v1821 = vld [vmem:[%s1519 + $0x9a] sm:$0xff]
        %v1822 = vld [vmem:[%s1519 + $0xaa] sm:$0xff]
        %v1823 = vld [vmem:[%s1519 + $0xb2] sm:$0xff]
        %v1824 = vld [vmem:[%s1519 + $0xc2] sm:$0xff]
        %v1825 = vld [vmem:[%s1519 + $0xca] sm:$0xff]
        %v1826 = vld [vmem:[%s1519 + $0xda] sm:$0xff]
        %v1827 = vld [vmem:[%s1519 + $0xe2] sm:$0xff]
        %v1828 = vld [vmem:[%s1519 + $0xf2] sm:$0xff]
        %v1829 = vld [vmem:[%s1519 + $0xfa] sm:$0xff]
        %v1830 = vld [vmem:[%s1519 + $0x10a] sm:$0xff]
        %v1831 = vld [vmem:[%s1519 + $0x112] sm:$0xff]
        %v1832 = vld [vmem:[%s1519 + $0x122] sm:$0xff]
        %v1833 = vld [vmem:[%s1519 + $0x12a] sm:$0xff]
        %v1834 = vld [vmem:[%s1519 + $0x13a] sm:$0xff]
        %v1835 = vld [vmem:[%s1519 + $0x142] sm:$0xff]
        %v1836 = vld [vmem:[%s1519 + $0x152] sm:$0xff]
        %v1837 = vld [vmem:[%s1519 + $0x15a] sm:$0xff]
        %v1838 = vld [vmem:[%s1519 + $0x16a] sm:$0xff]
        %v1839 = vld [vmem:[%s1519 + $0x172] sm:$0xff]
        %v1840 = vpack.c.bf16 %v1745, %v1744
        %v1841 = vpack.c.bf16 %v1777, %v1776
        %v1842 = vpack.c.bf16 %v1809, %v1808
        %v1843 = vpack.c.bf16 %v1747, %v1746
        %v1844 = vpack.c.bf16 %v1779, %v1778
        %v1845 = vpack.c.bf16 %v1811, %v1810
        %v1846 = vpack.c.bf16 %v1749, %v1748
        %v1847 = vpack.c.bf16 %v1781, %v1780
        %v1848 = vpack.c.bf16 %v1813, %v1812
        %v1849 = vpack.c.bf16 %v1751, %v1750
        %v1850 = vpack.c.bf16 %v1783, %v1782
        %v1851 = vpack.c.bf16 %v1815, %v1814
        %v1852 = vpack.c.bf16 %v1753, %v1752
        %v1853 = vpack.c.bf16 %v1785, %v1784
        %v1854 = vpack.c.bf16 %v1817, %v1816
        %v1855 = vpack.c.bf16 %v1755, %v1754
        %v1856 = vpack.c.bf16 %v1787, %v1786
        %v1857 = vpack.c.bf16 %v1819, %v1818
        %v1858 = vpack.c.bf16 %v1757, %v1756
        %v1859 = vpack.c.bf16 %v1789, %v1788
        %v1860 = vpack.c.bf16 %v1821, %v1820
        %v1861 = vpack.c.bf16 %v1759, %v1758
        %v1862 = vpack.c.bf16 %v1791, %v1790
        %v1863 = vpack.c.bf16 %v1823, %v1822
        %v1864 = vpack.c.bf16 %v1761, %v1760
        %v1865 = vpack.c.bf16 %v1793, %v1792
        %v1866 = vpack.c.bf16 %v1825, %v1824
        %v1867 = vpack.c.bf16 %v1763, %v1762
        %v1868 = vpack.c.bf16 %v1795, %v1794
        %v1869 = vpack.c.bf16 %v1827, %v1826
        %v1870 = vpack.c.bf16 %v1765, %v1764
        %v1871 = vpack.c.bf16 %v1797, %v1796
        %v1872 = vpack.c.bf16 %v1829, %v1828
        %v1873 = vpack.c.bf16 %v1767, %v1766
        %v1874 = vpack.c.bf16 %v1799, %v1798
        %v1875 = vpack.c.bf16 %v1831, %v1830
        %v1876 = vpack.c.bf16 %v1769, %v1768
        %v1877 = vpack.c.bf16 %v1801, %v1800
        %v1878 = vpack.c.bf16 %v1833, %v1832
        %v1879 = vpack.c.bf16 %v1771, %v1770
        %v1880 = vpack.c.bf16 %v1803, %v1802
        %v1881 = vpack.c.bf16 %v1835, %v1834
        %v1882 = vpack.c.bf16 %v1773, %v1772
        %v1883 = vpack.c.bf16 %v1805, %v1804
        %v1884 = vpack.c.bf16 %v1837, %v1836
        %v1885 = vpack.c.bf16 %v1775, %v1774
        %v1886 = vpack.c.bf16 %v1807, %v1806
        %v1887 = vpack.c.bf16 %v1839, %v1838
        %s1888 = scalar_lea.vmem [#allocation8], 192
        %v1889 = vld [vmem:[%s1888] sm:$0xf]
        %v1890 = vld [vmem:[%s1888 + $0x4] sm:$0xf]
        %v1891 = vld [vmem:[%s1888 + $0x8] sm:$0xf]
        %v1892 = vld [vmem:[%s1888 + $0xc] sm:$0xf]
        %v1893 = vld [vmem:[%s1888 + $0x10] sm:$0xf]
        %v1894 = vld [vmem:[%s1888 + $0x14] sm:$0xf]
        %v1895 = vld [vmem:[%s1888 + $0x18] sm:$0xf]
        %v1896 = vld [vmem:[%s1888 + $0x1c] sm:$0xf]
        %v1897 = vld [vmem:[%s1888 + $0x20] sm:$0xf]
        %v1898 = vld [vmem:[%s1888 + $0x24] sm:$0xf]
        %v1899 = vld [vmem:[%s1888 + $0x28] sm:$0xf]
        %v1900 = vld [vmem:[%s1888 + $0x2c] sm:$0xf]
        %v1901 = vld [vmem:[%s1888 + $0x30] sm:$0xf]
        %v1902 = vld [vmem:[%s1888 + $0x34] sm:$0xf]
        %v1903 = vld [vmem:[%s1888 + $0x38] sm:$0xf]
        %v1904 = vld [vmem:[%s1888 + $0x3c] sm:$0xf]
        %v1905 = vld [vmem:[%s1888 + $0x40] sm:$0xf]
        %v1906 = vld [vmem:[%s1888 + $0x44] sm:$0xf]
        %v1907 = vld [vmem:[%s1888 + $0x48] sm:$0xf]
        %v1908 = vld [vmem:[%s1888 + $0x4c] sm:$0xf]
        %v1909 = vld [vmem:[%s1888 + $0x50] sm:$0xf]
        %v1910 = vld [vmem:[%s1888 + $0x54] sm:$0xf]
        %v1911 = vld [vmem:[%s1888 + $0x58] sm:$0xf]
        %v1912 = vld [vmem:[%s1888 + $0x5c] sm:$0xf]
        %v1913 = vld [vmem:[%s1888 + $0x60] sm:$0xf]
        %v1914 = vld [vmem:[%s1888 + $0x64] sm:$0xf]
        %v1915 = vld [vmem:[%s1888 + $0x68] sm:$0xf]
        %v1916 = vld [vmem:[%s1888 + $0x6c] sm:$0xf]
        %v1917 = vld [vmem:[%s1888 + $0x70] sm:$0xf]
        %v1918 = vld [vmem:[%s1888 + $0x74] sm:$0xf]
        %v1919 = vld [vmem:[%s1888 + $0x78] sm:$0xf]
        %v1920 = vld [vmem:[%s1888 + $0x7c] sm:$0xf]
        %v1921 = vld [vmem:[%s1888 + $0x80] sm:$0xf]
        %v1922 = vld [vmem:[%s1888 + $0x84] sm:$0xf]
        %v1923 = vld [vmem:[%s1888 + $0x88] sm:$0xf]
        %v1924 = vld [vmem:[%s1888 + $0x8c] sm:$0xf]
        %v1925 = vld [vmem:[%s1888 + $0x90] sm:$0xf]
        %v1926 = vld [vmem:[%s1888 + $0x94] sm:$0xf]
        %v1927 = vld [vmem:[%s1888 + $0x98] sm:$0xf]
        %v1928 = vld [vmem:[%s1888 + $0x9c] sm:$0xf]
        %v1929 = vld [vmem:[%s1888 + $0xa0] sm:$0xf]
        %v1930 = vld [vmem:[%s1888 + $0xa4] sm:$0xf]
        %v1931 = vld [vmem:[%s1888 + $0xa8] sm:$0xf]
        %v1932 = vld [vmem:[%s1888 + $0xac] sm:$0xf]
        %v1933 = vld [vmem:[%s1888 + $0xb0] sm:$0xf]
        %v1934 = vld [vmem:[%s1888 + $0xb4] sm:$0xf]
        %v1935 = vld [vmem:[%s1888 + $0xb8] sm:$0xf]
        %v1936 = vld [vmem:[%s1888 + $0xbc] sm:$0xf]
        %v1985 = vunpack.c.l.b16 %v1889
        %v1986 = vunpack.c.l.b16 %v1890
        %v1987 = vunpack.c.l.b16 %v1891
        %v1988 = vunpack.c.l.b16 %v1892
        %v1989 = vunpack.c.l.b16 %v1893
        %v1990 = vunpack.c.l.b16 %v1894
        %v1991 = vunpack.c.l.b16 %v1895
        %v1992 = vunpack.c.l.b16 %v1896
        %v1993 = vunpack.c.l.b16 %v1897
        %v1994 = vunpack.c.l.b16 %v1898
        %v1995 = vunpack.c.l.b16 %v1899
        %v1996 = vunpack.c.l.b16 %v1900
        %v1997 = vunpack.c.l.b16 %v1901
        %v1998 = vunpack.c.l.b16 %v1902
        %v1999 = vunpack.c.l.b16 %v1903
        %v2000 = vunpack.c.l.b16 %v1904
        %v2001 = vunpack.c.l.b16 %v1905
        %v2002 = vunpack.c.l.b16 %v1906
        %v2003 = vunpack.c.l.b16 %v1907
        %v2004 = vunpack.c.l.b16 %v1908
        %v2005 = vunpack.c.l.b16 %v1909
        %v2006 = vunpack.c.l.b16 %v1910
        %v2007 = vunpack.c.l.b16 %v1911
        %v2008 = vunpack.c.l.b16 %v1912
        %v2009 = vunpack.c.l.b16 %v1913
        %v2010 = vunpack.c.l.b16 %v1914
        %v2011 = vunpack.c.l.b16 %v1915
        %v2012 = vunpack.c.l.b16 %v1916
        %v2013 = vunpack.c.l.b16 %v1917
        %v2014 = vunpack.c.l.b16 %v1918
        %v2015 = vunpack.c.l.b16 %v1919
        %v2016 = vunpack.c.l.b16 %v1920
        %v2017 = vunpack.c.l.b16 %v1921
        %v2018 = vunpack.c.l.b16 %v1922
        %v2019 = vunpack.c.l.b16 %v1923
        %v2020 = vunpack.c.l.b16 %v1924
        %v2021 = vunpack.c.l.b16 %v1925
        %v2022 = vunpack.c.l.b16 %v1926
        %v2023 = vunpack.c.l.b16 %v1927
        %v2024 = vunpack.c.l.b16 %v1928
        %v2025 = vunpack.c.l.b16 %v1929
        %v2026 = vunpack.c.l.b16 %v1930
        %v2027 = vunpack.c.l.b16 %v1931
        %v2028 = vunpack.c.l.b16 %v1932
        %v2029 = vunpack.c.l.b16 %v1933
        %v2030 = vunpack.c.l.b16 %v1934
        %v2031 = vunpack.c.l.b16 %v1935
        %v2032 = vunpack.c.l.b16 %v1936
        %v2033 = vpack.c.b16 %v1986, %v1985
        %v2034 = vpack.c.b16 %v1988, %v1987
        %v2035 = vpack.c.b16 %v1990, %v1989
        %v2036 = vpack.c.b16 %v1992, %v1991
        %v2037 = vpack.c.b16 %v1994, %v1993
        %v2038 = vpack.c.b16 %v1996, %v1995
        %v2039 = vpack.c.b16 %v1998, %v1997
        %v2040 = vpack.c.b16 %v2000, %v1999
        %v2041 = vpack.c.b16 %v2002, %v2001
        %v2042 = vpack.c.b16 %v2004, %v2003
        %v2043 = vpack.c.b16 %v2006, %v2005
        %v2044 = vpack.c.b16 %v2008, %v2007
        %v2045 = vpack.c.b16 %v2010, %v2009
        %v2046 = vpack.c.b16 %v2012, %v2011
        %v2047 = vpack.c.b16 %v2014, %v2013
        %v2048 = vpack.c.b16 %v2016, %v2015
        %v2049 = vpack.c.b16 %v2018, %v2017
        %v2050 = vpack.c.b16 %v2020, %v2019
        %v2051 = vpack.c.b16 %v2022, %v2021
        %v2052 = vpack.c.b16 %v2024, %v2023
        %v2053 = vpack.c.b16 %v2026, %v2025
        %v2054 = vpack.c.b16 %v2028, %v2027
        %v2055 = vpack.c.b16 %v2030, %v2029
        %v2056 = vpack.c.b16 %v2032, %v2031
        %2081 = vmatpush.bf16.msra.mxu0 %v2040
        %2082 = vmatpush.bf16.msra.mxu0 %v2039
        %2083 = vmatpush.bf16.msra.mxu0 %v2038
        %2084 = vmatpush.bf16.msra.mxu0 %v2037
        %2085 = vmatpush.bf16.msra.mxu0 %v2036
        %2086 = vmatpush.bf16.msra.mxu0 %v2035
        %2087 = vmatpush.bf16.msra.mxu0 %v2034
        %2088 = vmatpush.bf16.msra.mxu0 %v2033
        %2089 = vmatmul.bf16.gmra.mxu0 %v1840
        %v2090 = vpop.f32.mrf.mxu0
        %v2091 = vadd.f32 0.0, %v2090
        %v2092 = vpop.f32.mrf.mxu0
        %v2093 = vadd.f32 0.0, %v2092
        %2094 = vmatmul.bf16.gmra.mxu0 %v1843
        %v2095 = vpop.f32.mrf.mxu0
        %v2096 = vadd.f32 0.0, %v2095
        %v2097 = vpop.f32.mrf.mxu0
        %v2098 = vadd.f32 0.0, %v2097
        %2099 = vmatmul.bf16.gmra.mxu0 %v1846
        %v2100 = vpop.f32.mrf.mxu0
        %v2101 = vadd.f32 0.0, %v2100
        %v2102 = vpop.f32.mrf.mxu0
        %v2103 = vadd.f32 0.0, %v2102
        %2104 = vmatmul.bf16.gmra.mxu0 %v1849
        %v2105 = vpop.f32.mrf.mxu0
        %v2106 = vadd.f32 0.0, %v2105
        %v2107 = vpop.f32.mrf.mxu0
        %v2108 = vadd.f32 0.0, %v2107
        %2109 = vmatmul.bf16.gmra.mxu0 %v1852
        %v2110 = vpop.f32.mrf.mxu0
        %v2111 = vadd.f32 0.0, %v2110
        %v2112 = vpop.f32.mrf.mxu0
        %v2113 = vadd.f32 0.0, %v2112
        %2114 = vmatmul.bf16.gmra.mxu0 %v1855
        %v2115 = vpop.f32.mrf.mxu0
        %v2116 = vadd.f32 0.0, %v2115
        %v2117 = vpop.f32.mrf.mxu0
        %v2118 = vadd.f32 0.0, %v2117
        %2119 = vmatmul.bf16.gmra.mxu0 %v1858
        %v2120 = vpop.f32.mrf.mxu0
        %v2121 = vadd.f32 0.0, %v2120
        %v2122 = vpop.f32.mrf.mxu0
        %v2123 = vadd.f32 0.0, %v2122
        %2124 = vmatmul.bf16.gmra.mxu0 %v1861
        %v2125 = vpop.f32.mrf.mxu0
        %v2126 = vadd.f32 0.0, %v2125
        %v2127 = vpop.f32.mrf.mxu0
        %v2128 = vadd.f32 0.0, %v2127
        %2129 = vmatmul.bf16.gmra.mxu0 %v1864
        %v2130 = vpop.f32.mrf.mxu0
        %v2131 = vadd.f32 0.0, %v2130
        %v2132 = vpop.f32.mrf.mxu0
        %v2133 = vadd.f32 0.0, %v2132
        %2134 = vmatmul.bf16.gmra.mxu0 %v1867
        %v2135 = vpop.f32.mrf.mxu0
        %v2136 = vadd.f32 0.0, %v2135
        %v2137 = vpop.f32.mrf.mxu0
        %v2138 = vadd.f32 0.0, %v2137
        %2139 = vmatmul.bf16.gmra.mxu0 %v1870
        %v2140 = vpop.f32.mrf.mxu0
        %v2141 = vadd.f32 0.0, %v2140
        %v2142 = vpop.f32.mrf.mxu0
        %v2143 = vadd.f32 0.0, %v2142
        %2144 = vmatmul.bf16.gmra.mxu0 %v1873
        %v2145 = vpop.f32.mrf.mxu0
        %v2146 = vadd.f32 0.0, %v2145
        %v2147 = vpop.f32.mrf.mxu0
        %v2148 = vadd.f32 0.0, %v2147
        %2149 = vmatmul.bf16.gmra.mxu0 %v1876
        %v2150 = vpop.f32.mrf.mxu0
        %v2151 = vadd.f32 0.0, %v2150
        %v2152 = vpop.f32.mrf.mxu0
        %v2153 = vadd.f32 0.0, %v2152
        %2154 = vmatmul.bf16.gmra.mxu0 %v1879
        %v2155 = vpop.f32.mrf.mxu0
        %v2156 = vadd.f32 0.0, %v2155
        %v2157 = vpop.f32.mrf.mxu0
        %v2158 = vadd.f32 0.0, %v2157
        %2159 = vmatmul.bf16.gmra.mxu0 %v1882
        %v2160 = vpop.f32.mrf.mxu0
        %v2161 = vadd.f32 0.0, %v2160
        %v2162 = vpop.f32.mrf.mxu0
        %v2163 = vadd.f32 0.0, %v2162
        %2164 = vmatmul.bf16.gmra.mxu0 %v1885
        %v2165 = vpop.f32.mrf.mxu0
        %v2166 = vadd.f32 0.0, %v2165
        %v2167 = vpop.f32.mrf.mxu0
        %v2168 = vadd.f32 0.0, %v2167
        %2169 = vdwg.mxu0
        %2170 = vmatpush.bf16.msra.mxu0 %v2048
        %2171 = vmatpush.bf16.msra.mxu0 %v2047
        %2172 = vmatpush.bf16.msra.mxu0 %v2046
        %2173 = vmatpush.bf16.msra.mxu0 %v2045
        %2174 = vmatpush.bf16.msra.mxu0 %v2044
        %2175 = vmatpush.bf16.msra.mxu0 %v2043
        %2176 = vmatpush.bf16.msra.mxu0 %v2042
        %2177 = vmatpush.bf16.msra.mxu0 %v2041
        %2178 = vmatmul.bf16.gmra.mxu0 %v1841
        %v2179 = vpop.f32.mrf.mxu0
        %v2180 = vadd.f32 %v2091, %v2179
        %v2181 = vpop.f32.mrf.mxu0
        %v2182 = vadd.f32 %v2093, %v2181
        %2183 = vmatmul.bf16.gmra.mxu0 %v1844
        %v2184 = vpop.f32.mrf.mxu0
        %v2185 = vadd.f32 %v2096, %v2184
        %v2186 = vpop.f32.mrf.mxu0
        %v2187 = vadd.f32 %v2098, %v2186
        %2188 = vmatmul.bf16.gmra.mxu0 %v1847
        %v2189 = vpop.f32.mrf.mxu0
        %v2190 = vadd.f32 %v2101, %v2189
        %v2191 = vpop.f32.mrf.mxu0
        %v2192 = vadd.f32 %v2103, %v2191
        %2193 = vmatmul.bf16.gmra.mxu0 %v1850
        %v2194 = vpop.f32.mrf.mxu0
        %v2195 = vadd.f32 %v2106, %v2194
        %v2196 = vpop.f32.mrf.mxu0
        %v2197 = vadd.f32 %v2108, %v2196
        %2198 = vmatmul.bf16.gmra.mxu0 %v1853
        %v2199 = vpop.f32.mrf.mxu0
        %v2200 = vadd.f32 %v2111, %v2199
        %v2201 = vpop.f32.mrf.mxu0
        %v2202 = vadd.f32 %v2113, %v2201
        %2203 = vmatmul.bf16.gmra.mxu0 %v1856
        %v2204 = vpop.f32.mrf.mxu0
        %v2205 = vadd.f32 %v2116, %v2204
        %v2206 = vpop.f32.mrf.mxu0
        %v2207 = vadd.f32 %v2118, %v2206
        %2208 = vmatmul.bf16.gmra.mxu0 %v1859
        %v2209 = vpop.f32.mrf.mxu0
        %v2210 = vadd.f32 %v2121, %v2209
        %v2211 = vpop.f32.mrf.mxu0
        %v2212 = vadd.f32 %v2123, %v2211
        %2213 = vmatmul.bf16.gmra.mxu0 %v1862
        %v2214 = vpop.f32.mrf.mxu0
        %v2215 = vadd.f32 %v2126, %v2214
        %v2216 = vpop.f32.mrf.mxu0
        %v2217 = vadd.f32 %v2128, %v2216
        %2218 = vmatmul.bf16.gmra.mxu0 %v1865
        %v2219 = vpop.f32.mrf.mxu0
        %v2220 = vadd.f32 %v2131, %v2219
        %v2221 = vpop.f32.mrf.mxu0
        %v2222 = vadd.f32 %v2133, %v2221
        %2223 = vmatmul.bf16.gmra.mxu0 %v1868
        %v2224 = vpop.f32.mrf.mxu0
        %v2225 = vadd.f32 %v2136, %v2224
        %v2226 = vpop.f32.mrf.mxu0
        %v2227 = vadd.f32 %v2138, %v2226
        %2228 = vmatmul.bf16.gmra.mxu0 %v1871
        %v2229 = vpop.f32.mrf.mxu0
        %v2230 = vadd.f32 %v2141, %v2229
        %v2231 = vpop.f32.mrf.mxu0
        %v2232 = vadd.f32 %v2143, %v2231
        %2233 = vmatmul.bf16.gmra.mxu0 %v1874
        %v2234 = vpop.f32.mrf.mxu0
        %v2235 = vadd.f32 %v2146, %v2234
        %v2236 = vpop.f32.mrf.mxu0
        %v2237 = vadd.f32 %v2148, %v2236
        %2238 = vmatmul.bf16.gmra.mxu0 %v1877
        %v2239 = vpop.f32.mrf.mxu0
        %v2240 = vadd.f32 %v2151, %v2239
        %v2241 = vpop.f32.mrf.mxu0
        %v2242 = vadd.f32 %v2153, %v2241
        %2243 = vmatmul.bf16.gmra.mxu0 %v1880
        %v2244 = vpop.f32.mrf.mxu0
        %v2245 = vadd.f32 %v2156, %v2244
        %v2246 = vpop.f32.mrf.mxu0
        %v2247 = vadd.f32 %v2158, %v2246
        %2248 = vmatmul.bf16.gmra.mxu0 %v1883
        %v2249 = vpop.f32.mrf.mxu0
        %v2250 = vadd.f32 %v2161, %v2249
        %v2251 = vpop.f32.mrf.mxu0
        %v2252 = vadd.f32 %v2163, %v2251
        %2253 = vmatmul.bf16.gmra.mxu0 %v1886
        %v2254 = vpop.f32.mrf.mxu0
        %v2255 = vadd.f32 %v2166, %v2254
        %v2256 = vpop.f32.mrf.mxu0
        %v2257 = vadd.f32 %v2168, %v2256
        %2258 = vdwg.mxu0
        %2259 = vmatpush.bf16.msra.mxu0 %v2056
        %2260 = vmatpush.bf16.msra.mxu0 %v2055
        %2261 = vmatpush.bf16.msra.mxu0 %v2054
        %2262 = vmatpush.bf16.msra.mxu0 %v2053
        %2263 = vmatpush.bf16.msra.mxu0 %v2052
        %2264 = vmatpush.bf16.msra.mxu0 %v2051
        %2265 = vmatpush.bf16.msra.mxu0 %v2050
        %2266 = vmatpush.bf16.msra.mxu0 %v2049
        %2267 = vmatmul.bf16.gmra.mxu0 %v1842
        %v2268 = vpop.f32.mrf.mxu0
        %v2269 = vadd.f32 %v2180, %v2268
        %v2270 = vpop.f32.mrf.mxu0
        %v2271 = vadd.f32 %v2182, %v2270
        %2272 = vmatmul.bf16.gmra.mxu0 %v1845
        %v2273 = vpop.f32.mrf.mxu0
        %v2274 = vadd.f32 %v2185, %v2273
        %v2275 = vpop.f32.mrf.mxu0
        %v2276 = vadd.f32 %v2187, %v2275
        %2277 = vmatmul.bf16.gmra.mxu0 %v1848
        %v2278 = vpop.f32.mrf.mxu0
        %v2279 = vadd.f32 %v2190, %v2278
        %v2280 = vpop.f32.mrf.mxu0
        %v2281 = vadd.f32 %v2192, %v2280
        %2282 = vmatmul.bf16.gmra.mxu0 %v1851
        %v2283 = vpop.f32.mrf.mxu0
        %v2284 = vadd.f32 %v2195, %v2283
        %v2285 = vpop.f32.mrf.mxu0
        %v2286 = vadd.f32 %v2197, %v2285
        %2287 = vmatmul.bf16.gmra.mxu0 %v1854
        %v2288 = vpop.f32.mrf.mxu0
        %v2289 = vadd.f32 %v2200, %v2288
        %v2290 = vpop.f32.mrf.mxu0
        %v2291 = vadd.f32 %v2202, %v2290
        %2292 = vmatmul.bf16.gmra.mxu0 %v1857
        %v2293 = vpop.f32.mrf.mxu0
        %v2294 = vadd.f32 %v2205, %v2293
        %v2295 = vpop.f32.mrf.mxu0
        %v2296 = vadd.f32 %v2207, %v2295
        %2297 = vmatmul.bf16.gmra.mxu0 %v1860
        %v2298 = vpop.f32.mrf.mxu0
        %v2299 = vadd.f32 %v2210, %v2298
        %v2300 = vpop.f32.mrf.mxu0
        %v2301 = vadd.f32 %v2212, %v2300
        %2302 = vmatmul.bf16.gmra.mxu0 %v1863
        %v2303 = vpop.f32.mrf.mxu0
        %v2304 = vadd.f32 %v2215, %v2303
        %v2305 = vpop.f32.mrf.mxu0
        %v2306 = vadd.f32 %v2217, %v2305
        %2307 = vmatmul.bf16.gmra.mxu0 %v1866
        %v2308 = vpop.f32.mrf.mxu0
        %v2309 = vadd.f32 %v2220, %v2308
        %v2310 = vpop.f32.mrf.mxu0
        %v2311 = vadd.f32 %v2222, %v2310
        %2312 = vmatmul.bf16.gmra.mxu0 %v1869
        %v2313 = vpop.f32.mrf.mxu0
        %v2314 = vadd.f32 %v2225, %v2313
        %v2315 = vpop.f32.mrf.mxu0
        %v2316 = vadd.f32 %v2227, %v2315
        %2317 = vmatmul.bf16.gmra.mxu0 %v1872
        %v2318 = vpop.f32.mrf.mxu0
        %v2319 = vadd.f32 %v2230, %v2318
        %v2320 = vpop.f32.mrf.mxu0
        %v2321 = vadd.f32 %v2232, %v2320
        %2322 = vmatmul.bf16.gmra.mxu0 %v1875
        %v2323 = vpop.f32.mrf.mxu0
        %v2324 = vadd.f32 %v2235, %v2323
        %v2325 = vpop.f32.mrf.mxu0
        %v2326 = vadd.f32 %v2237, %v2325
        %2327 = vmatmul.bf16.gmra.mxu0 %v1878
        %v2328 = vpop.f32.mrf.mxu0
        %v2329 = vadd.f32 %v2240, %v2328
        %v2330 = vpop.f32.mrf.mxu0
        %v2331 = vadd.f32 %v2242, %v2330
        %2332 = vmatmul.bf16.gmra.mxu0 %v1881
        %v2333 = vpop.f32.mrf.mxu0
        %v2334 = vadd.f32 %v2245, %v2333
        %v2335 = vpop.f32.mrf.mxu0
        %v2336 = vadd.f32 %v2247, %v2335
        %2337 = vmatmul.bf16.gmra.mxu0 %v1884
        %v2338 = vpop.f32.mrf.mxu0
        %v2339 = vadd.f32 %v2250, %v2338
        %v2340 = vpop.f32.mrf.mxu0
        %v2341 = vadd.f32 %v2252, %v2340
        %2342 = vmatmul.bf16.gmra.mxu0 %v1887
        %v2343 = vpop.f32.mrf.mxu0
        %v2344 = vadd.f32 %v2255, %v2343
        %v2345 = vpop.f32.mrf.mxu0
        %v2346 = vadd.f32 %v2257, %v2345
        %2347 = vdwg.mxu0
        %v2396 = vunpack.c.l.b16 %v1696
        %v2397 = vunpack.c.l.b16 %v1697
        %v2398 = vunpack.c.l.b16 %v1698
        %v2399 = vunpack.c.l.b16 %v1699
        %v2400 = vunpack.c.l.b16 %v1700
        %v2401 = vunpack.c.l.b16 %v1701
        %v2402 = vunpack.c.l.b16 %v1702
        %v2403 = vunpack.c.l.b16 %v1703
        %v2404 = vunpack.c.l.b16 %v1704
        %v2405 = vunpack.c.l.b16 %v1705
        %v2406 = vunpack.c.l.b16 %v1706
        %v2407 = vunpack.c.l.b16 %v1707
        %v2408 = vunpack.c.l.b16 %v1708
        %v2409 = vunpack.c.l.b16 %v1709
        %v2410 = vunpack.c.l.b16 %v1710
        %v2411 = vunpack.c.l.b16 %v1711
        %v2412 = vunpack.c.l.b16 %v1712
        %v2413 = vunpack.c.l.b16 %v1713
        %v2414 = vunpack.c.l.b16 %v1714
        %v2415 = vunpack.c.l.b16 %v1715
        %v2416 = vunpack.c.l.b16 %v1716
        %v2417 = vunpack.c.l.b16 %v1717
        %v2418 = vunpack.c.l.b16 %v1718
        %v2419 = vunpack.c.l.b16 %v1719
        %v2420 = vunpack.c.l.b16 %v1720
        %v2421 = vunpack.c.l.b16 %v1721
        %v2422 = vunpack.c.l.b16 %v1722
        %v2423 = vunpack.c.l.b16 %v1723
        %v2424 = vunpack.c.l.b16 %v1724
        %v2425 = vunpack.c.l.b16 %v1725
        %v2426 = vunpack.c.l.b16 %v1726
        %v2427 = vunpack.c.l.b16 %v1727
        %v2428 = vunpack.c.l.b16 %v1728
        %v2429 = vunpack.c.l.b16 %v1729
        %v2430 = vunpack.c.l.b16 %v1730
        %v2431 = vunpack.c.l.b16 %v1731
        %v2432 = vunpack.c.l.b16 %v1732
        %v2433 = vunpack.c.l.b16 %v1733
        %v2434 = vunpack.c.l.b16 %v1734
        %v2435 = vunpack.c.l.b16 %v1735
        %v2436 = vunpack.c.l.b16 %v1736
        %v2437 = vunpack.c.l.b16 %v1737
        %v2438 = vunpack.c.l.b16 %v1738
        %v2439 = vunpack.c.l.b16 %v1739
        %v2440 = vunpack.c.l.b16 %v1740
        %v2441 = vunpack.c.l.b16 %v1741
        %v2442 = vunpack.c.l.b16 %v1742
        %v2443 = vunpack.c.l.b16 %v1743
        %v2444 = vpack.c.b16 %v2397, %v2396
        %v2445 = vpack.c.b16 %v2399, %v2398
        %v2446 = vpack.c.b16 %v2401, %v2400
        %v2447 = vpack.c.b16 %v2403, %v2402
        %v2448 = vpack.c.b16 %v2405, %v2404
        %v2449 = vpack.c.b16 %v2407, %v2406
        %v2450 = vpack.c.b16 %v2409, %v2408
        %v2451 = vpack.c.b16 %v2411, %v2410
        %v2452 = vpack.c.b16 %v2413, %v2412
        %v2453 = vpack.c.b16 %v2415, %v2414
        %v2454 = vpack.c.b16 %v2417, %v2416
        %v2455 = vpack.c.b16 %v2419, %v2418
        %v2456 = vpack.c.b16 %v2421, %v2420
        %v2457 = vpack.c.b16 %v2423, %v2422
        %v2458 = vpack.c.b16 %v2425, %v2424
        %v2459 = vpack.c.b16 %v2427, %v2426
        %v2460 = vpack.c.b16 %v2429, %v2428
        %v2461 = vpack.c.b16 %v2431, %v2430
        %v2462 = vpack.c.b16 %v2433, %v2432
        %v2463 = vpack.c.b16 %v2435, %v2434
        %v2464 = vpack.c.b16 %v2437, %v2436
        %v2465 = vpack.c.b16 %v2439, %v2438
        %v2466 = vpack.c.b16 %v2441, %v2440
        %v2467 = vpack.c.b16 %v2443, %v2442
        %2492 = vmatpush.bf16.msra.mxu0 %v2451
        %2493 = vmatpush.bf16.msra.mxu0 %v2450
        %2494 = vmatpush.bf16.msra.mxu0 %v2449
        %2495 = vmatpush.bf16.msra.mxu0 %v2448
        %2496 = vmatpush.bf16.msra.mxu0 %v2447
        %2497 = vmatpush.bf16.msra.mxu0 %v2446
        %2498 = vmatpush.bf16.msra.mxu0 %v2445
        %2499 = vmatpush.bf16.msra.mxu0 %v2444
        %2500 = vmatmul.bf16.gmra.mxu0 %v1648
        %v2501 = vpop.f32.mrf.mxu0
        %v2502 = vadd.f32 %v2269, %v2501
        %v2503 = vpop.f32.mrf.mxu0
        %v2504 = vadd.f32 %v2271, %v2503
        %2505 = vmatmul.bf16.gmra.mxu0 %v1651
        %v2506 = vpop.f32.mrf.mxu0
        %v2507 = vadd.f32 %v2274, %v2506
        %v2508 = vpop.f32.mrf.mxu0
        %v2509 = vadd.f32 %v2276, %v2508
        %2510 = vmatmul.bf16.gmra.mxu0 %v1654
        %v2511 = vpop.f32.mrf.mxu0
        %v2512 = vadd.f32 %v2279, %v2511
        %v2513 = vpop.f32.mrf.mxu0
        %v2514 = vadd.f32 %v2281, %v2513
        %2515 = vmatmul.bf16.gmra.mxu0 %v1657
        %v2516 = vpop.f32.mrf.mxu0
        %v2517 = vadd.f32 %v2284, %v2516
        %v2518 = vpop.f32.mrf.mxu0
        %v2519 = vadd.f32 %v2286, %v2518
        %2520 = vmatmul.bf16.gmra.mxu0 %v1660
        %v2521 = vpop.f32.mrf.mxu0
        %v2522 = vadd.f32 %v2289, %v2521
        %v2523 = vpop.f32.mrf.mxu0
        %v2524 = vadd.f32 %v2291, %v2523
        %2525 = vmatmul.bf16.gmra.mxu0 %v1663
        %v2526 = vpop.f32.mrf.mxu0
        %v2527 = vadd.f32 %v2294, %v2526
        %v2528 = vpop.f32.mrf.mxu0
        %v2529 = vadd.f32 %v2296, %v2528
        %2530 = vmatmul.bf16.gmra.mxu0 %v1666
        %v2531 = vpop.f32.mrf.mxu0
        %v2532 = vadd.f32 %v2299, %v2531
        %v2533 = vpop.f32.mrf.mxu0
        %v2534 = vadd.f32 %v2301, %v2533
        %2535 = vmatmul.bf16.gmra.mxu0 %v1669
        %v2536 = vpop.f32.mrf.mxu0
        %v2537 = vadd.f32 %v2304, %v2536
        %v2538 = vpop.f32.mrf.mxu0
        %v2539 = vadd.f32 %v2306, %v2538
        %2540 = vmatmul.bf16.gmra.mxu0 %v1672
        %v2541 = vpop.f32.mrf.mxu0
        %v2542 = vadd.f32 %v2309, %v2541
        %v2543 = vpop.f32.mrf.mxu0
        %v2544 = vadd.f32 %v2311, %v2543
        %2545 = vmatmul.bf16.gmra.mxu0 %v1675
        %v2546 = vpop.f32.mrf.mxu0
        %v2547 = vadd.f32 %v2314, %v2546
        %v2548 = vpop.f32.mrf.mxu0
        %v2549 = vadd.f32 %v2316, %v2548
        %2550 = vmatmul.bf16.gmra.mxu0 %v1678
        %v2551 = vpop.f32.mrf.mxu0
        %v2552 = vadd.f32 %v2319, %v2551
        %v2553 = vpop.f32.mrf.mxu0
        %v2554 = vadd.f32 %v2321, %v2553
        %2555 = vmatmul.bf16.gmra.mxu0 %v1681
        %v2556 = vpop.f32.mrf.mxu0
        %v2557 = vadd.f32 %v2324, %v2556
        %v2558 = vpop.f32.mrf.mxu0
        %v2559 = vadd.f32 %v2326, %v2558
        %2560 = vmatmul.bf16.gmra.mxu0 %v1684
        %v2561 = vpop.f32.mrf.mxu0
        %v2562 = vadd.f32 %v2329, %v2561
        %v2563 = vpop.f32.mrf.mxu0
        %v2564 = vadd.f32 %v2331, %v2563
        %2565 = vmatmul.bf16.gmra.mxu0 %v1687
        %v2566 = vpop.f32.mrf.mxu0
        %v2567 = vadd.f32 %v2334, %v2566
        %v2568 = vpop.f32.mrf.mxu0
        %v2569 = vadd.f32 %v2336, %v2568
        %2570 = vmatmul.bf16.gmra.mxu0 %v1690
        %v2571 = vpop.f32.mrf.mxu0
        %v2572 = vadd.f32 %v2339, %v2571
        %v2573 = vpop.f32.mrf.mxu0
        %v2574 = vadd.f32 %v2341, %v2573
        %2575 = vmatmul.bf16.gmra.mxu0 %v1693
        %v2576 = vpop.f32.mrf.mxu0
        %v2577 = vadd.f32 %v2344, %v2576
        %v2578 = vpop.f32.mrf.mxu0
        %v2579 = vadd.f32 %v2346, %v2578
        %2580 = vdwg.mxu0
        %2581 = vmatpush.bf16.msra.mxu0 %v2459
        %2582 = vmatpush.bf16.msra.mxu0 %v2458
        %2583 = vmatpush.bf16.msra.mxu0 %v2457
        %2584 = vmatpush.bf16.msra.mxu0 %v2456
        %2585 = vmatpush.bf16.msra.mxu0 %v2455
        %2586 = vmatpush.bf16.msra.mxu0 %v2454
        %2587 = vmatpush.bf16.msra.mxu0 %v2453
        %2588 = vmatpush.bf16.msra.mxu0 %v2452
        %2589 = vmatmul.bf16.gmra.mxu0 %v1649
        %v2590 = vpop.f32.mrf.mxu0
        %v2591 = vadd.f32 %v2502, %v2590
        %v2592 = vpop.f32.mrf.mxu0
        %v2593 = vadd.f32 %v2504, %v2592
        %2594 = vmatmul.bf16.gmra.mxu0 %v1652
        %v2595 = vpop.f32.mrf.mxu0
        %v2596 = vadd.f32 %v2507, %v2595
        %v2597 = vpop.f32.mrf.mxu0
        %v2598 = vadd.f32 %v2509, %v2597
        %2599 = vmatmul.bf16.gmra.mxu0 %v1655
        %v2600 = vpop.f32.mrf.mxu0
        %v2601 = vadd.f32 %v2512, %v2600
        %v2602 = vpop.f32.mrf.mxu0
        %v2603 = vadd.f32 %v2514, %v2602
        %2604 = vmatmul.bf16.gmra.mxu0 %v1658
        %v2605 = vpop.f32.mrf.mxu0
        %v2606 = vadd.f32 %v2517, %v2605
        %v2607 = vpop.f32.mrf.mxu0
        %v2608 = vadd.f32 %v2519, %v2607
        %2609 = vmatmul.bf16.gmra.mxu0 %v1661
        %v2610 = vpop.f32.mrf.mxu0
        %v2611 = vadd.f32 %v2522, %v2610
        %v2612 = vpop.f32.mrf.mxu0
        %v2613 = vadd.f32 %v2524, %v2612
        %2614 = vmatmul.bf16.gmra.mxu0 %v1664
        %v2615 = vpop.f32.mrf.mxu0
        %v2616 = vadd.f32 %v2527, %v2615
        %v2617 = vpop.f32.mrf.mxu0
        %v2618 = vadd.f32 %v2529, %v2617
        %2619 = vmatmul.bf16.gmra.mxu0 %v1667
        %v2620 = vpop.f32.mrf.mxu0
        %v2621 = vadd.f32 %v2532, %v2620
        %v2622 = vpop.f32.mrf.mxu0
        %v2623 = vadd.f32 %v2534, %v2622
        %2624 = vmatmul.bf16.gmra.mxu0 %v1670
        %v2625 = vpop.f32.mrf.mxu0
        %v2626 = vadd.f32 %v2537, %v2625
        %v2627 = vpop.f32.mrf.mxu0
        %v2628 = vadd.f32 %v2539, %v2627
        %2629 = vmatmul.bf16.gmra.mxu0 %v1673
        %v2630 = vpop.f32.mrf.mxu0
        %v2631 = vadd.f32 %v2542, %v2630
        %v2632 = vpop.f32.mrf.mxu0
        %v2633 = vadd.f32 %v2544, %v2632
        %2634 = vmatmul.bf16.gmra.mxu0 %v1676
        %v2635 = vpop.f32.mrf.mxu0
        %v2636 = vadd.f32 %v2547, %v2635
        %v2637 = vpop.f32.mrf.mxu0
        %v2638 = vadd.f32 %v2549, %v2637
        %2639 = vmatmul.bf16.gmra.mxu0 %v1679
        %v2640 = vpop.f32.mrf.mxu0
        %v2641 = vadd.f32 %v2552, %v2640
        %v2642 = vpop.f32.mrf.mxu0
        %v2643 = vadd.f32 %v2554, %v2642
        %2644 = vmatmul.bf16.gmra.mxu0 %v1682
        %v2645 = vpop.f32.mrf.mxu0
        %v2646 = vadd.f32 %v2557, %v2645
        %v2647 = vpop.f32.mrf.mxu0
        %v2648 = vadd.f32 %v2559, %v2647
        %2649 = vmatmul.bf16.gmra.mxu0 %v1685
        %v2650 = vpop.f32.mrf.mxu0
        %v2651 = vadd.f32 %v2562, %v2650
        %v2652 = vpop.f32.mrf.mxu0
        %v2653 = vadd.f32 %v2564, %v2652
        %2654 = vmatmul.bf16.gmra.mxu0 %v1688
        %v2655 = vpop.f32.mrf.mxu0
        %v2656 = vadd.f32 %v2567, %v2655
        %v2657 = vpop.f32.mrf.mxu0
        %v2658 = vadd.f32 %v2569, %v2657
        %2659 = vmatmul.bf16.gmra.mxu0 %v1691
        %v2660 = vpop.f32.mrf.mxu0
        %v2661 = vadd.f32 %v2572, %v2660
        %v2662 = vpop.f32.mrf.mxu0
        %v2663 = vadd.f32 %v2574, %v2662
        %2664 = vmatmul.bf16.gmra.mxu0 %v1694
        %v2665 = vpop.f32.mrf.mxu0
        %v2666 = vadd.f32 %v2577, %v2665
        %v2667 = vpop.f32.mrf.mxu0
        %v2668 = vadd.f32 %v2579, %v2667
        %2669 = vdwg.mxu0
        %2670 = vmatpush.bf16.msra.mxu0 %v2467
        %2671 = vmatpush.bf16.msra.mxu0 %v2466
        %2672 = vmatpush.bf16.msra.mxu0 %v2465
        %2673 = vmatpush.bf16.msra.mxu0 %v2464
        %2674 = vmatpush.bf16.msra.mxu0 %v2463
        %2675 = vmatpush.bf16.msra.mxu0 %v2462
        %2676 = vmatpush.bf16.msra.mxu0 %v2461
        %2677 = vmatpush.bf16.msra.mxu0 %v2460
        %2678 = vmatmul.bf16.gmra.mxu0 %v1650
        %v2679 = vpop.f32.mrf.mxu0
        %v2680 = vadd.f32 %v2591, %v2679
        %v2681 = vpop.f32.mrf.mxu0
        %v2682 = vadd.f32 %v2593, %v2681
        %2683 = vmatmul.bf16.gmra.mxu0 %v1653
        %v2684 = vpop.f32.mrf.mxu0
        %v2685 = vadd.f32 %v2596, %v2684
        %v2686 = vpop.f32.mrf.mxu0
        %v2687 = vadd.f32 %v2598, %v2686
        %2688 = vmatmul.bf16.gmra.mxu0 %v1656
        %v2689 = vpop.f32.mrf.mxu0
        %v2690 = vadd.f32 %v2601, %v2689
        %v2691 = vpop.f32.mrf.mxu0
        %v2692 = vadd.f32 %v2603, %v2691
        %2693 = vmatmul.bf16.gmra.mxu0 %v1659
        %v2694 = vpop.f32.mrf.mxu0
        %v2695 = vadd.f32 %v2606, %v2694
        %v2696 = vpop.f32.mrf.mxu0
        %v2697 = vadd.f32 %v2608, %v2696
        %2698 = vmatmul.bf16.gmra.mxu0 %v1662
        %v2699 = vpop.f32.mrf.mxu0
        %v2700 = vadd.f32 %v2611, %v2699
        %v2701 = vpop.f32.mrf.mxu0
        %v2702 = vadd.f32 %v2613, %v2701
        %2703 = vmatmul.bf16.gmra.mxu0 %v1665
        %v2704 = vpop.f32.mrf.mxu0
        %v2705 = vadd.f32 %v2616, %v2704
        %v2706 = vpop.f32.mrf.mxu0
        %v2707 = vadd.f32 %v2618, %v2706
        %2708 = vmatmul.bf16.gmra.mxu0 %v1668
        %v2709 = vpop.f32.mrf.mxu0
        %v2710 = vadd.f32 %v2621, %v2709
        %v2711 = vpop.f32.mrf.mxu0
        %v2712 = vadd.f32 %v2623, %v2711
        %2713 = vmatmul.bf16.gmra.mxu0 %v1671
        %v2714 = vpop.f32.mrf.mxu0
        %v2715 = vadd.f32 %v2626, %v2714
        %v2716 = vpop.f32.mrf.mxu0
        %v2717 = vadd.f32 %v2628, %v2716
        %2718 = vmatmul.bf16.gmra.mxu0 %v1674
        %v2719 = vpop.f32.mrf.mxu0
        %v2720 = vadd.f32 %v2631, %v2719
        %v2721 = vpop.f32.mrf.mxu0
        %v2722 = vadd.f32 %v2633, %v2721
        %2723 = vmatmul.bf16.gmra.mxu0 %v1677
        %v2724 = vpop.f32.mrf.mxu0
        %v2725 = vadd.f32 %v2636, %v2724
        %v2726 = vpop.f32.mrf.mxu0
        %v2727 = vadd.f32 %v2638, %v2726
        %2728 = vmatmul.bf16.gmra.mxu0 %v1680
        %v2729 = vpop.f32.mrf.mxu0
        %v2730 = vadd.f32 %v2641, %v2729
        %v2731 = vpop.f32.mrf.mxu0
        %v2732 = vadd.f32 %v2643, %v2731
        %2733 = vmatmul.bf16.gmra.mxu0 %v1683
        %v2734 = vpop.f32.mrf.mxu0
        %v2735 = vadd.f32 %v2646, %v2734
        %v2736 = vpop.f32.mrf.mxu0
        %v2737 = vadd.f32 %v2648, %v2736
        %2738 = vmatmul.bf16.gmra.mxu0 %v1686
        %v2739 = vpop.f32.mrf.mxu0
        %v2740 = vadd.f32 %v2651, %v2739
        %v2741 = vpop.f32.mrf.mxu0
        %v2742 = vadd.f32 %v2653, %v2741
        %2743 = vmatmul.bf16.gmra.mxu0 %v1689
        %v2744 = vpop.f32.mrf.mxu0
        %v2745 = vadd.f32 %v2656, %v2744
        %v2746 = vpop.f32.mrf.mxu0
        %v2747 = vadd.f32 %v2658, %v2746
        %2748 = vmatmul.bf16.gmra.mxu0 %v1692
        %v2749 = vpop.f32.mrf.mxu0
        %v2750 = vadd.f32 %v2661, %v2749
        %v2751 = vpop.f32.mrf.mxu0
        %v2752 = vadd.f32 %v2663, %v2751
        %2753 = vmatmul.bf16.gmra.mxu0 %v1695
        %v2754 = vpop.f32.mrf.mxu0
        %v2755 = vadd.f32 %v2666, %v2754
        %v2756 = vpop.f32.mrf.mxu0
        %v2757 = vadd.f32 %v2668, %v2756
        %2758 = vdwg.mxu0
        %s2759 = scalar_lea.vmem [#allocation2], 48
        %v2760 = vld [vmem:[%s2759] sm:$0xff]
        %v2761 = vld [vmem:[%s2759 + $0x8] sm:$0xff]
        %v2762 = vld [vmem:[%s2759 + $0x18] sm:$0xff]
        %v2763 = vld [vmem:[%s2759 + $0x20] sm:$0xff]
        %v2764 = vld [vmem:[%s2759 + $0x30] sm:$0xff]
        %v2765 = vld [vmem:[%s2759 + $0x38] sm:$0xff]
        %v2766 = vld [vmem:[%s2759 + $0x48] sm:$0xff]
        %v2767 = vld [vmem:[%s2759 + $0x50] sm:$0xff]
        %v2768 = vld [vmem:[%s2759 + $0x60] sm:$0xff]
        %v2769 = vld [vmem:[%s2759 + $0x68] sm:$0xff]
        %v2770 = vld [vmem:[%s2759 + $0x78] sm:$0xff]
        %v2771 = vld [vmem:[%s2759 + $0x80] sm:$0xff]
        %v2772 = vld [vmem:[%s2759 + $0x90] sm:$0xff]
        %v2773 = vld [vmem:[%s2759 + $0x98] sm:$0xff]
        %v2774 = vld [vmem:[%s2759 + $0xa8] sm:$0xff]
        %v2775 = vld [vmem:[%s2759 + $0xb0] sm:$0xff]
        %v2776 = vld [vmem:[%s2759 + $0xc0] sm:$0xff]
        %v2777 = vld [vmem:[%s2759 + $0xc8] sm:$0xff]
        %v2778 = vld [vmem:[%s2759 + $0xd8] sm:$0xff]
        %v2779 = vld [vmem:[%s2759 + $0xe0] sm:$0xff]
        %v2780 = vld [vmem:[%s2759 + $0xf0] sm:$0xff]
        %v2781 = vld [vmem:[%s2759 + $0xf8] sm:$0xff]
        %v2782 = vld [vmem:[%s2759 + $0x108] sm:$0xff]
        %v2783 = vld [vmem:[%s2759 + $0x110] sm:$0xff]
        %v2784 = vld [vmem:[%s2759 + $0x120] sm:$0xff]
        %v2785 = vld [vmem:[%s2759 + $0x128] sm:$0xff]
        %v2786 = vld [vmem:[%s2759 + $0x138] sm:$0xff]
        %v2787 = vld [vmem:[%s2759 + $0x140] sm:$0xff]
        %v2788 = vld [vmem:[%s2759 + $0x150] sm:$0xff]
        %v2789 = vld [vmem:[%s2759 + $0x158] sm:$0xff]
        %v2790 = vld [vmem:[%s2759 + $0x168] sm:$0xff]
        %v2791 = vld [vmem:[%s2759 + $0x170] sm:$0xff]
        %v2792 = vld [vmem:[%s2759 + $0x1] sm:$0xff]
        %v2793 = vld [vmem:[%s2759 + $0x9] sm:$0xff]
        %v2794 = vld [vmem:[%s2759 + $0x19] sm:$0xff]
        %v2795 = vld [vmem:[%s2759 + $0x21] sm:$0xff]
        %v2796 = vld [vmem:[%s2759 + $0x31] sm:$0xff]
        %v2797 = vld [vmem:[%s2759 + $0x39] sm:$0xff]
        %v2798 = vld [vmem:[%s2759 + $0x49] sm:$0xff]
        %v2799 = vld [vmem:[%s2759 + $0x51] sm:$0xff]
        %v2800 = vld [vmem:[%s2759 + $0x61] sm:$0xff]
        %v2801 = vld [vmem:[%s2759 + $0x69] sm:$0xff]
        %v2802 = vld [vmem:[%s2759 + $0x79] sm:$0xff]
        %v2803 = vld [vmem:[%s2759 + $0x81] sm:$0xff]
        %v2804 = vld [vmem:[%s2759 + $0x91] sm:$0xff]
        %v2805 = vld [vmem:[%s2759 + $0x99] sm:$0xff]
        %v2806 = vld [vmem:[%s2759 + $0xa9] sm:$0xff]
        %v2807 = vld [vmem:[%s2759 + $0xb1] sm:$0xff]
        %v2808 = vld [vmem:[%s2759 + $0xc1] sm:$0xff]
        %v2809 = vld [vmem:[%s2759 + $0xc9] sm:$0xff]
        %v2810 = vld [vmem:[%s2759 + $0xd9] sm:$0xff]
        %v2811 = vld [vmem:[%s2759 + $0xe1] sm:$0xff]
        %v2812 = vld [vmem:[%s2759 + $0xf1] sm:$0xff]
        %v2813 = vld [vmem:[%s2759 + $0xf9] sm:$0xff]
        %v2814 = vld [vmem:[%s2759 + $0x109] sm:$0xff]
        %v2815 = vld [vmem:[%s2759 + $0x111] sm:$0xff]
        %v2816 = vld [vmem:[%s2759 + $0x121] sm:$0xff]
        %v2817 = vld [vmem:[%s2759 + $0x129] sm:$0xff]
        %v2818 = vld [vmem:[%s2759 + $0x139] sm:$0xff]
        %v2819 = vld [vmem:[%s2759 + $0x141] sm:$0xff]
        %v2820 = vld [vmem:[%s2759 + $0x151] sm:$0xff]
        %v2821 = vld [vmem:[%s2759 + $0x159] sm:$0xff]
        %v2822 = vld [vmem:[%s2759 + $0x169] sm:$0xff]
        %v2823 = vld [vmem:[%s2759 + $0x171] sm:$0xff]
        %v2824 = vld [vmem:[%s2759 + $0x2] sm:$0xff]
        %v2825 = vld [vmem:[%s2759 + $0xa] sm:$0xff]
        %v2826 = vld [vmem:[%s2759 + $0x1a] sm:$0xff]
        %v2827 = vld [vmem:[%s2759 + $0x22] sm:$0xff]
        %v2828 = vld [vmem:[%s2759 + $0x32] sm:$0xff]
        %v2829 = vld [vmem:[%s2759 + $0x3a] sm:$0xff]
        %v2830 = vld [vmem:[%s2759 + $0x4a] sm:$0xff]
        %v2831 = vld [vmem:[%s2759 + $0x52] sm:$0xff]
        %v2832 = vld [vmem:[%s2759 + $0x62] sm:$0xff]
        %v2833 = vld [vmem:[%s2759 + $0x6a] sm:$0xff]
        %v2834 = vld [vmem:[%s2759 + $0x7a] sm:$0xff]
        %v2835 = vld [vmem:[%s2759 + $0x82] sm:$0xff]
        %v2836 = vld [vmem:[%s2759 + $0x92] sm:$0xff]
        %v2837 = vld [vmem:[%s2759 + $0x9a] sm:$0xff]
        %v2838 = vld [vmem:[%s2759 + $0xaa] sm:$0xff]
        %v2839 = vld [vmem:[%s2759 + $0xb2] sm:$0xff]
        %v2840 = vld [vmem:[%s2759 + $0xc2] sm:$0xff]
        %v2841 = vld [vmem:[%s2759 + $0xca] sm:$0xff]
        %v2842 = vld [vmem:[%s2759 + $0xda] sm:$0xff]
        %v2843 = vld [vmem:[%s2759 + $0xe2] sm:$0xff]
        %v2844 = vld [vmem:[%s2759 + $0xf2] sm:$0xff]
        %v2845 = vld [vmem:[%s2759 + $0xfa] sm:$0xff]
        %v2846 = vld [vmem:[%s2759 + $0x10a] sm:$0xff]
        %v2847 = vld [vmem:[%s2759 + $0x112] sm:$0xff]
        %v2848 = vld [vmem:[%s2759 + $0x122] sm:$0xff]
        %v2849 = vld [vmem:[%s2759 + $0x12a] sm:$0xff]
        %v2850 = vld [vmem:[%s2759 + $0x13a] sm:$0xff]
        %v2851 = vld [vmem:[%s2759 + $0x142] sm:$0xff]
        %v2852 = vld [vmem:[%s2759 + $0x152] sm:$0xff]
        %v2853 = vld [vmem:[%s2759 + $0x15a] sm:$0xff]
        %v2854 = vld [vmem:[%s2759 + $0x16a] sm:$0xff]
        %v2855 = vld [vmem:[%s2759 + $0x172] sm:$0xff]
        %v2856 = vpack.c.bf16 %v2761, %v2760
        %v2857 = vpack.c.bf16 %v2793, %v2792
        %v2858 = vpack.c.bf16 %v2825, %v2824
        %v2859 = vpack.c.bf16 %v2763, %v2762
        %v2860 = vpack.c.bf16 %v2795, %v2794
        %v2861 = vpack.c.bf16 %v2827, %v2826
        %v2862 = vpack.c.bf16 %v2765, %v2764
        %v2863 = vpack.c.bf16 %v2797, %v2796
        %v2864 = vpack.c.bf16 %v2829, %v2828
        %v2865 = vpack.c.bf16 %v2767, %v2766
        %v2866 = vpack.c.bf16 %v2799, %v2798
        %v2867 = vpack.c.bf16 %v2831, %v2830
        %v2868 = vpack.c.bf16 %v2769, %v2768
        %v2869 = vpack.c.bf16 %v2801, %v2800
        %v2870 = vpack.c.bf16 %v2833, %v2832
        %v2871 = vpack.c.bf16 %v2771, %v2770
        %v2872 = vpack.c.bf16 %v2803, %v2802
        %v2873 = vpack.c.bf16 %v2835, %v2834
        %v2874 = vpack.c.bf16 %v2773, %v2772
        %v2875 = vpack.c.bf16 %v2805, %v2804
        %v2876 = vpack.c.bf16 %v2837, %v2836
        %v2877 = vpack.c.bf16 %v2775, %v2774
        %v2878 = vpack.c.bf16 %v2807, %v2806
        %v2879 = vpack.c.bf16 %v2839, %v2838
        %v2880 = vpack.c.bf16 %v2777, %v2776
        %v2881 = vpack.c.bf16 %v2809, %v2808
        %v2882 = vpack.c.bf16 %v2841, %v2840
        %v2883 = vpack.c.bf16 %v2779, %v2778
        %v2884 = vpack.c.bf16 %v2811, %v2810
        %v2885 = vpack.c.bf16 %v2843, %v2842
        %v2886 = vpack.c.bf16 %v2781, %v2780
        %v2887 = vpack.c.bf16 %v2813, %v2812
        %v2888 = vpack.c.bf16 %v2845, %v2844
        %v2889 = vpack.c.bf16 %v2783, %v2782
        %v2890 = vpack.c.bf16 %v2815, %v2814
        %v2891 = vpack.c.bf16 %v2847, %v2846
        %v2892 = vpack.c.bf16 %v2785, %v2784
        %v2893 = vpack.c.bf16 %v2817, %v2816
        %v2894 = vpack.c.bf16 %v2849, %v2848
        %v2895 = vpack.c.bf16 %v2787, %v2786
        %v2896 = vpack.c.bf16 %v2819, %v2818
        %v2897 = vpack.c.bf16 %v2851, %v2850
        %v2898 = vpack.c.bf16 %v2789, %v2788
        %v2899 = vpack.c.bf16 %v2821, %v2820
        %v2900 = vpack.c.bf16 %v2853, %v2852
        %v2901 = vpack.c.bf16 %v2791, %v2790
        %v2902 = vpack.c.bf16 %v2823, %v2822
        %v2903 = vpack.c.bf16 %v2855, %v2854
        %s2904 = scalar_lea.vmem [#allocation8], 384
        %v2905 = vld [vmem:[%s2904] sm:$0xf]
        %v2906 = vld [vmem:[%s2904 + $0x4] sm:$0xf]
        %v2907 = vld [vmem:[%s2904 + $0x8] sm:$0xf]
        %v2908 = vld [vmem:[%s2904 + $0xc] sm:$0xf]
        %v2909 = vld [vmem:[%s2904 + $0x10] sm:$0xf]
        %v2910 = vld [vmem:[%s2904 + $0x14] sm:$0xf]
        %v2911 = vld [vmem:[%s2904 + $0x18] sm:$0xf]
        %v2912 = vld [vmem:[%s2904 + $0x1c] sm:$0xf]
        %v2913 = vld [vmem:[%s2904 + $0x20] sm:$0xf]
        %v2914 = vld [vmem:[%s2904 + $0x24] sm:$0xf]
        %v2915 = vld [vmem:[%s2904 + $0x28] sm:$0xf]
        %v2916 = vld [vmem:[%s2904 + $0x2c] sm:$0xf]
        %v2917 = vld [vmem:[%s2904 + $0x30] sm:$0xf]
        %v2918 = vld [vmem:[%s2904 + $0x34] sm:$0xf]
        %v2919 = vld [vmem:[%s2904 + $0x38] sm:$0xf]
        %v2920 = vld [vmem:[%s2904 + $0x3c] sm:$0xf]
        %v2921 = vld [vmem:[%s2904 + $0x40] sm:$0xf]
        %v2922 = vld [vmem:[%s2904 + $0x44] sm:$0xf]
        %v2923 = vld [vmem:[%s2904 + $0x48] sm:$0xf]
        %v2924 = vld [vmem:[%s2904 + $0x4c] sm:$0xf]
        %v2925 = vld [vmem:[%s2904 + $0x50] sm:$0xf]
        %v2926 = vld [vmem:[%s2904 + $0x54] sm:$0xf]
        %v2927 = vld [vmem:[%s2904 + $0x58] sm:$0xf]
        %v2928 = vld [vmem:[%s2904 + $0x5c] sm:$0xf]
        %v2929 = vld [vmem:[%s2904 + $0x60] sm:$0xf]
        %v2930 = vld [vmem:[%s2904 + $0x64] sm:$0xf]
        %v2931 = vld [vmem:[%s2904 + $0x68] sm:$0xf]
        %v2932 = vld [vmem:[%s2904 + $0x6c] sm:$0xf]
        %v2933 = vld [vmem:[%s2904 + $0x70] sm:$0xf]
        %v2934 = vld [vmem:[%s2904 + $0x74] sm:$0xf]
        %v2935 = vld [vmem:[%s2904 + $0x78] sm:$0xf]
        %v2936 = vld [vmem:[%s2904 + $0x7c] sm:$0xf]
        %v2937 = vld [vmem:[%s2904 + $0x80] sm:$0xf]
        %v2938 = vld [vmem:[%s2904 + $0x84] sm:$0xf]
        %v2939 = vld [vmem:[%s2904 + $0x88] sm:$0xf]
        %v2940 = vld [vmem:[%s2904 + $0x8c] sm:$0xf]
        %v2941 = vld [vmem:[%s2904 + $0x90] sm:$0xf]
        %v2942 = vld [vmem:[%s2904 + $0x94] sm:$0xf]
        %v2943 = vld [vmem:[%s2904 + $0x98] sm:$0xf]
        %v2944 = vld [vmem:[%s2904 + $0x9c] sm:$0xf]
        %v2945 = vld [vmem:[%s2904 + $0xa0] sm:$0xf]
        %v2946 = vld [vmem:[%s2904 + $0xa4] sm:$0xf]
        %v2947 = vld [vmem:[%s2904 + $0xa8] sm:$0xf]
        %v2948 = vld [vmem:[%s2904 + $0xac] sm:$0xf]
        %v2949 = vld [vmem:[%s2904 + $0xb0] sm:$0xf]
        %v2950 = vld [vmem:[%s2904 + $0xb4] sm:$0xf]
        %v2951 = vld [vmem:[%s2904 + $0xb8] sm:$0xf]
        %v2952 = vld [vmem:[%s2904 + $0xbc] sm:$0xf]
        %v3001 = vunpack.c.l.b16 %v2905
        %v3002 = vunpack.c.l.b16 %v2906
        %v3003 = vunpack.c.l.b16 %v2907
        %v3004 = vunpack.c.l.b16 %v2908
        %v3005 = vunpack.c.l.b16 %v2909
        %v3006 = vunpack.c.l.b16 %v2910
        %v3007 = vunpack.c.l.b16 %v2911
        %v3008 = vunpack.c.l.b16 %v2912
        %v3009 = vunpack.c.l.b16 %v2913
        %v3010 = vunpack.c.l.b16 %v2914
        %v3011 = vunpack.c.l.b16 %v2915
        %v3012 = vunpack.c.l.b16 %v2916
        %v3013 = vunpack.c.l.b16 %v2917
        %v3014 = vunpack.c.l.b16 %v2918
        %v3015 = vunpack.c.l.b16 %v2919
        %v3016 = vunpack.c.l.b16 %v2920
        %v3017 = vunpack.c.l.b16 %v2921
        %v3018 = vunpack.c.l.b16 %v2922
        %v3019 = vunpack.c.l.b16 %v2923
        %v3020 = vunpack.c.l.b16 %v2924
        %v3021 = vunpack.c.l.b16 %v2925
        %v3022 = vunpack.c.l.b16 %v2926
        %v3023 = vunpack.c.l.b16 %v2927
        %v3024 = vunpack.c.l.b16 %v2928
        %v3025 = vunpack.c.l.b16 %v2929
        %v3026 = vunpack.c.l.b16 %v2930
        %v3027 = vunpack.c.l.b16 %v2931
        %v3028 = vunpack.c.l.b16 %v2932
        %v3029 = vunpack.c.l.b16 %v2933
        %v3030 = vunpack.c.l.b16 %v2934
        %v3031 = vunpack.c.l.b16 %v2935
        %v3032 = vunpack.c.l.b16 %v2936
        %v3033 = vunpack.c.l.b16 %v2937
        %v3034 = vunpack.c.l.b16 %v2938
        %v3035 = vunpack.c.l.b16 %v2939
        %v3036 = vunpack.c.l.b16 %v2940
        %v3037 = vunpack.c.l.b16 %v2941
        %v3038 = vunpack.c.l.b16 %v2942
        %v3039 = vunpack.c.l.b16 %v2943
        %v3040 = vunpack.c.l.b16 %v2944
        %v3041 = vunpack.c.l.b16 %v2945
        %v3042 = vunpack.c.l.b16 %v2946
        %v3043 = vunpack.c.l.b16 %v2947
        %v3044 = vunpack.c.l.b16 %v2948
        %v3045 = vunpack.c.l.b16 %v2949
        %v3046 = vunpack.c.l.b16 %v2950
        %v3047 = vunpack.c.l.b16 %v2951
        %v3048 = vunpack.c.l.b16 %v2952
        %v3049 = vpack.c.b16 %v3002, %v3001
        %v3050 = vpack.c.b16 %v3004, %v3003
        %v3051 = vpack.c.b16 %v3006, %v3005
        %v3052 = vpack.c.b16 %v3008, %v3007
        %v3053 = vpack.c.b16 %v3010, %v3009
        %v3054 = vpack.c.b16 %v3012, %v3011
        %v3055 = vpack.c.b16 %v3014, %v3013
        %v3056 = vpack.c.b16 %v3016, %v3015
        %v3057 = vpack.c.b16 %v3018, %v3017
        %v3058 = vpack.c.b16 %v3020, %v3019
        %v3059 = vpack.c.b16 %v3022, %v3021
        %v3060 = vpack.c.b16 %v3024, %v3023
        %v3061 = vpack.c.b16 %v3026, %v3025
        %v3062 = vpack.c.b16 %v3028, %v3027
        %v3063 = vpack.c.b16 %v3030, %v3029
        %v3064 = vpack.c.b16 %v3032, %v3031
        %v3065 = vpack.c.b16 %v3034, %v3033
        %v3066 = vpack.c.b16 %v3036, %v3035
        %v3067 = vpack.c.b16 %v3038, %v3037
        %v3068 = vpack.c.b16 %v3040, %v3039
        %v3069 = vpack.c.b16 %v3042, %v3041
        %v3070 = vpack.c.b16 %v3044, %v3043
        %v3071 = vpack.c.b16 %v3046, %v3045
        %v3072 = vpack.c.b16 %v3048, %v3047
        %3097 = vmatpush.bf16.msra.mxu0 %v3056
        %3098 = vmatpush.bf16.msra.mxu0 %v3055
        %3099 = vmatpush.bf16.msra.mxu0 %v3054
        %3100 = vmatpush.bf16.msra.mxu0 %v3053
        %3101 = vmatpush.bf16.msra.mxu0 %v3052
        %3102 = vmatpush.bf16.msra.mxu0 %v3051
        %3103 = vmatpush.bf16.msra.mxu0 %v3050
        %3104 = vmatpush.bf16.msra.mxu0 %v3049
        %3105 = vmatmul.bf16.gmra.mxu0 %v2856
        %v3106 = vpop.f32.mrf.mxu0
        %v3107 = vadd.f32 0.0, %v3106
        %v3108 = vpop.f32.mrf.mxu0
        %v3109 = vadd.f32 0.0, %v3108
        %3110 = vmatmul.bf16.gmra.mxu0 %v2859
        %v3111 = vpop.f32.mrf.mxu0
        %v3112 = vadd.f32 0.0, %v3111
        %v3113 = vpop.f32.mrf.mxu0
        %v3114 = vadd.f32 0.0, %v3113
        %3115 = vmatmul.bf16.gmra.mxu0 %v2862
        %v3116 = vpop.f32.mrf.mxu0
        %v3117 = vadd.f32 0.0, %v3116
        %v3118 = vpop.f32.mrf.mxu0
        %v3119 = vadd.f32 0.0, %v3118
        %3120 = vmatmul.bf16.gmra.mxu0 %v2865
        %v3121 = vpop.f32.mrf.mxu0
        %v3122 = vadd.f32 0.0, %v3121
        %v3123 = vpop.f32.mrf.mxu0
        %v3124 = vadd.f32 0.0, %v3123
        %3125 = vmatmul.bf16.gmra.mxu0 %v2868
        %v3126 = vpop.f32.mrf.mxu0
        %v3127 = vadd.f32 0.0, %v3126
        %v3128 = vpop.f32.mrf.mxu0
        %v3129 = vadd.f32 0.0, %v3128
        %3130 = vmatmul.bf16.gmra.mxu0 %v2871
        %v3131 = vpop.f32.mrf.mxu0
        %v3132 = vadd.f32 0.0, %v3131
        %v3133 = vpop.f32.mrf.mxu0
        %v3134 = vadd.f32 0.0, %v3133
        %3135 = vmatmul.bf16.gmra.mxu0 %v2874
        %v3136 = vpop.f32.mrf.mxu0
        %v3137 = vadd.f32 0.0, %v3136
        %v3138 = vpop.f32.mrf.mxu0
        %v3139 = vadd.f32 0.0, %v3138
        %3140 = vmatmul.bf16.gmra.mxu0 %v2877
        %v3141 = vpop.f32.mrf.mxu0
        %v3142 = vadd.f32 0.0, %v3141
        %v3143 = vpop.f32.mrf.mxu0
        %v3144 = vadd.f32 0.0, %v3143
        %3145 = vmatmul.bf16.gmra.mxu0 %v2880
        %v3146 = vpop.f32.mrf.mxu0
        %v3147 = vadd.f32 0.0, %v3146
        %v3148 = vpop.f32.mrf.mxu0
        %v3149 = vadd.f32 0.0, %v3148
        %3150 = vmatmul.bf16.gmra.mxu0 %v2883
        %v3151 = vpop.f32.mrf.mxu0
        %v3152 = vadd.f32 0.0, %v3151
        %v3153 = vpop.f32.mrf.mxu0
        %v3154 = vadd.f32 0.0, %v3153
        %3155 = vmatmul.bf16.gmra.mxu0 %v2886
        %v3156 = vpop.f32.mrf.mxu0
        %v3157 = vadd.f32 0.0, %v3156
        %v3158 = vpop.f32.mrf.mxu0
        %v3159 = vadd.f32 0.0, %v3158
        %3160 = vmatmul.bf16.gmra.mxu0 %v2889
        %v3161 = vpop.f32.mrf.mxu0
        %v3162 = vadd.f32 0.0, %v3161
        %v3163 = vpop.f32.mrf.mxu0
        %v3164 = vadd.f32 0.0, %v3163
        %3165 = vmatmul.bf16.gmra.mxu0 %v2892
        %v3166 = vpop.f32.mrf.mxu0
        %v3167 = vadd.f32 0.0, %v3166
        %v3168 = vpop.f32.mrf.mxu0
        %v3169 = vadd.f32 0.0, %v3168
        %3170 = vmatmul.bf16.gmra.mxu0 %v2895
        %v3171 = vpop.f32.mrf.mxu0
        %v3172 = vadd.f32 0.0, %v3171
        %v3173 = vpop.f32.mrf.mxu0
        %v3174 = vadd.f32 0.0, %v3173
        %3175 = vmatmul.bf16.gmra.mxu0 %v2898
        %v3176 = vpop.f32.mrf.mxu0
        %v3177 = vadd.f32 0.0, %v3176
        %v3178 = vpop.f32.mrf.mxu0
        %v3179 = vadd.f32 0.0, %v3178
        %3180 = vmatmul.bf16.gmra.mxu0 %v2901
        %v3181 = vpop.f32.mrf.mxu0
        %v3182 = vadd.f32 0.0, %v3181
        %v3183 = vpop.f32.mrf.mxu0
        %v3184 = vadd.f32 0.0, %v3183
        %3185 = vdwg.mxu0
        %3186 = vmatpush.bf16.msra.mxu0 %v3064
        %3187 = vmatpush.bf16.msra.mxu0 %v3063
        %3188 = vmatpush.bf16.msra.mxu0 %v3062
        %3189 = vmatpush.bf16.msra.mxu0 %v3061
        %3190 = vmatpush.bf16.msra.mxu0 %v3060
        %3191 = vmatpush.bf16.msra.mxu0 %v3059
        %3192 = vmatpush.bf16.msra.mxu0 %v3058
        %3193 = vmatpush.bf16.msra.mxu0 %v3057
        %3194 = vmatmul.bf16.gmra.mxu0 %v2857
        %v3195 = vpop.f32.mrf.mxu0
        %v3196 = vadd.f32 %v3107, %v3195
        %v3197 = vpop.f32.mrf.mxu0
        %v3198 = vadd.f32 %v3109, %v3197
        %3199 = vmatmul.bf16.gmra.mxu0 %v2860
        %v3200 = vpop.f32.mrf.mxu0
        %v3201 = vadd.f32 %v3112, %v3200
        %v3202 = vpop.f32.mrf.mxu0
        %v3203 = vadd.f32 %v3114, %v3202
        %3204 = vmatmul.bf16.gmra.mxu0 %v2863
        %v3205 = vpop.f32.mrf.mxu0
        %v3206 = vadd.f32 %v3117, %v3205
        %v3207 = vpop.f32.mrf.mxu0
        %v3208 = vadd.f32 %v3119, %v3207
        %3209 = vmatmul.bf16.gmra.mxu0 %v2866
        %v3210 = vpop.f32.mrf.mxu0
        %v3211 = vadd.f32 %v3122, %v3210
        %v3212 = vpop.f32.mrf.mxu0
        %v3213 = vadd.f32 %v3124, %v3212
        %3214 = vmatmul.bf16.gmra.mxu0 %v2869
        %v3215 = vpop.f32.mrf.mxu0
        %v3216 = vadd.f32 %v3127, %v3215
        %v3217 = vpop.f32.mrf.mxu0
        %v3218 = vadd.f32 %v3129, %v3217
        %3219 = vmatmul.bf16.gmra.mxu0 %v2872
        %v3220 = vpop.f32.mrf.mxu0
        %v3221 = vadd.f32 %v3132, %v3220
        %v3222 = vpop.f32.mrf.mxu0
        %v3223 = vadd.f32 %v3134, %v3222
        %3224 = vmatmul.bf16.gmra.mxu0 %v2875
        %v3225 = vpop.f32.mrf.mxu0
        %v3226 = vadd.f32 %v3137, %v3225
        %v3227 = vpop.f32.mrf.mxu0
        %v3228 = vadd.f32 %v3139, %v3227
        %3229 = vmatmul.bf16.gmra.mxu0 %v2878
        %v3230 = vpop.f32.mrf.mxu0
        %v3231 = vadd.f32 %v3142, %v3230
        %v3232 = vpop.f32.mrf.mxu0
        %v3233 = vadd.f32 %v3144, %v3232
        %3234 = vmatmul.bf16.gmra.mxu0 %v2881
        %v3235 = vpop.f32.mrf.mxu0
        %v3236 = vadd.f32 %v3147, %v3235
        %v3237 = vpop.f32.mrf.mxu0
        %v3238 = vadd.f32 %v3149, %v3237
        %3239 = vmatmul.bf16.gmra.mxu0 %v2884
        %v3240 = vpop.f32.mrf.mxu0
        %v3241 = vadd.f32 %v3152, %v3240
        %v3242 = vpop.f32.mrf.mxu0
        %v3243 = vadd.f32 %v3154, %v3242
        %3244 = vmatmul.bf16.gmra.mxu0 %v2887
        %v3245 = vpop.f32.mrf.mxu0
        %v3246 = vadd.f32 %v3157, %v3245
        %v3247 = vpop.f32.mrf.mxu0
        %v3248 = vadd.f32 %v3159, %v3247
        %3249 = vmatmul.bf16.gmra.mxu0 %v2890
        %v3250 = vpop.f32.mrf.mxu0
        %v3251 = vadd.f32 %v3162, %v3250
        %v3252 = vpop.f32.mrf.mxu0
        %v3253 = vadd.f32 %v3164, %v3252
        %3254 = vmatmul.bf16.gmra.mxu0 %v2893
        %v3255 = vpop.f32.mrf.mxu0
        %v3256 = vadd.f32 %v3167, %v3255
        %v3257 = vpop.f32.mrf.mxu0
        %v3258 = vadd.f32 %v3169, %v3257
        %3259 = vmatmul.bf16.gmra.mxu0 %v2896
        %v3260 = vpop.f32.mrf.mxu0
        %v3261 = vadd.f32 %v3172, %v3260
        %v3262 = vpop.f32.mrf.mxu0
        %v3263 = vadd.f32 %v3174, %v3262
        %3264 = vmatmul.bf16.gmra.mxu0 %v2899
        %v3265 = vpop.f32.mrf.mxu0
        %v3266 = vadd.f32 %v3177, %v3265
        %v3267 = vpop.f32.mrf.mxu0
        %v3268 = vadd.f32 %v3179, %v3267
        %3269 = vmatmul.bf16.gmra.mxu0 %v2902
        %v3270 = vpop.f32.mrf.mxu0
        %v3271 = vadd.f32 %v3182, %v3270
        %v3272 = vpop.f32.mrf.mxu0
        %v3273 = vadd.f32 %v3184, %v3272
        %3274 = vdwg.mxu0
        %3275 = vmatpush.bf16.msra.mxu0 %v3072
        %3276 = vmatpush.bf16.msra.mxu0 %v3071
        %3277 = vmatpush.bf16.msra.mxu0 %v3070
        %3278 = vmatpush.bf16.msra.mxu0 %v3069
        %3279 = vmatpush.bf16.msra.mxu0 %v3068
        %3280 = vmatpush.bf16.msra.mxu0 %v3067
        %3281 = vmatpush.bf16.msra.mxu0 %v3066
        %3282 = vmatpush.bf16.msra.mxu0 %v3065
        %3283 = vmatmul.bf16.gmra.mxu0 %v2858
        %v3284 = vpop.f32.mrf.mxu0
        %v3285 = vadd.f32 %v3196, %v3284
        %v3286 = vpop.f32.mrf.mxu0
        %v3287 = vadd.f32 %v3198, %v3286
        %3288 = vmatmul.bf16.gmra.mxu0 %v2861
        %v3289 = vpop.f32.mrf.mxu0
        %v3290 = vadd.f32 %v3201, %v3289
        %v3291 = vpop.f32.mrf.mxu0
        %v3292 = vadd.f32 %v3203, %v3291
        %3293 = vmatmul.bf16.gmra.mxu0 %v2864
        %v3294 = vpop.f32.mrf.mxu0
        %v3295 = vadd.f32 %v3206, %v3294
        %v3296 = vpop.f32.mrf.mxu0
        %v3297 = vadd.f32 %v3208, %v3296
        %3298 = vmatmul.bf16.gmra.mxu0 %v2867
        %v3299 = vpop.f32.mrf.mxu0
        %v3300 = vadd.f32 %v3211, %v3299
        %v3301 = vpop.f32.mrf.mxu0
        %v3302 = vadd.f32 %v3213, %v3301
        %3303 = vmatmul.bf16.gmra.mxu0 %v2870
        %v3304 = vpop.f32.mrf.mxu0
        %v3305 = vadd.f32 %v3216, %v3304
        %v3306 = vpop.f32.mrf.mxu0
        %v3307 = vadd.f32 %v3218, %v3306
        %3308 = vmatmul.bf16.gmra.mxu0 %v2873
        %v3309 = vpop.f32.mrf.mxu0
        %v3310 = vadd.f32 %v3221, %v3309
        %v3311 = vpop.f32.mrf.mxu0
        %v3312 = vadd.f32 %v3223, %v3311
        %3313 = vmatmul.bf16.gmra.mxu0 %v2876
        %v3314 = vpop.f32.mrf.mxu0
        %v3315 = vadd.f32 %v3226, %v3314
        %v3316 = vpop.f32.mrf.mxu0
        %v3317 = vadd.f32 %v3228, %v3316
        %3318 = vmatmul.bf16.gmra.mxu0 %v2879
        %v3319 = vpop.f32.mrf.mxu0
        %v3320 = vadd.f32 %v3231, %v3319
        %v3321 = vpop.f32.mrf.mxu0
        %v3322 = vadd.f32 %v3233, %v3321
        %3323 = vmatmul.bf16.gmra.mxu0 %v2882
        %v3324 = vpop.f32.mrf.mxu0
        %v3325 = vadd.f32 %v3236, %v3324
        %v3326 = vpop.f32.mrf.mxu0
        %v3327 = vadd.f32 %v3238, %v3326
        %3328 = vmatmul.bf16.gmra.mxu0 %v2885
        %v3329 = vpop.f32.mrf.mxu0
        %v3330 = vadd.f32 %v3241, %v3329
        %v3331 = vpop.f32.mrf.mxu0
        %v3332 = vadd.f32 %v3243, %v3331
        %3333 = vmatmul.bf16.gmra.mxu0 %v2888
        %v3334 = vpop.f32.mrf.mxu0
        %v3335 = vadd.f32 %v3246, %v3334
        %v3336 = vpop.f32.mrf.mxu0
        %v3337 = vadd.f32 %v3248, %v3336
        %3338 = vmatmul.bf16.gmra.mxu0 %v2891
        %v3339 = vpop.f32.mrf.mxu0
        %v3340 = vadd.f32 %v3251, %v3339
        %v3341 = vpop.f32.mrf.mxu0
        %v3342 = vadd.f32 %v3253, %v3341
        %3343 = vmatmul.bf16.gmra.mxu0 %v2894
        %v3344 = vpop.f32.mrf.mxu0
        %v3345 = vadd.f32 %v3256, %v3344
        %v3346 = vpop.f32.mrf.mxu0
        %v3347 = vadd.f32 %v3258, %v3346
        %3348 = vmatmul.bf16.gmra.mxu0 %v2897
        %v3349 = vpop.f32.mrf.mxu0
        %v3350 = vadd.f32 %v3261, %v3349
        %v3351 = vpop.f32.mrf.mxu0
        %v3352 = vadd.f32 %v3263, %v3351
        %3353 = vmatmul.bf16.gmra.mxu0 %v2900
        %v3354 = vpop.f32.mrf.mxu0
        %v3355 = vadd.f32 %v3266, %v3354
        %v3356 = vpop.f32.mrf.mxu0
        %v3357 = vadd.f32 %v3268, %v3356
        %3358 = vmatmul.bf16.gmra.mxu0 %v2903
        %v3359 = vpop.f32.mrf.mxu0
        %v3360 = vadd.f32 %v3271, %v3359
        %v3361 = vpop.f32.mrf.mxu0
        %v3362 = vadd.f32 %v3273, %v3361
        %3363 = vdwg.mxu0
        %v3364 = vadd.f32 %v2680, %v3285
        %v3365 = vadd.f32 %v2682, %v3287
        %v3366 = vadd.f32 %v2685, %v3290
        %v3367 = vadd.f32 %v2687, %v3292
        %v3368 = vadd.f32 %v2690, %v3295
        %v3369 = vadd.f32 %v2692, %v3297
        %v3370 = vadd.f32 %v2695, %v3300
        %v3371 = vadd.f32 %v2697, %v3302
        %v3372 = vadd.f32 %v2700, %v3305
        %v3373 = vadd.f32 %v2702, %v3307
        %v3374 = vadd.f32 %v2705, %v3310
        %v3375 = vadd.f32 %v2707, %v3312
        %v3376 = vadd.f32 %v2710, %v3315
        %v3377 = vadd.f32 %v2712, %v3317
        %v3378 = vadd.f32 %v2715, %v3320
        %v3379 = vadd.f32 %v2717, %v3322
        %v3380 = vadd.f32 %v2720, %v3325
        %v3381 = vadd.f32 %v2722, %v3327
        %v3382 = vadd.f32 %v2725, %v3330
        %v3383 = vadd.f32 %v2727, %v3332
        %v3384 = vadd.f32 %v2730, %v3335
        %v3385 = vadd.f32 %v2732, %v3337
        %v3386 = vadd.f32 %v2735, %v3340
        %v3387 = vadd.f32 %v2737, %v3342
        %v3388 = vadd.f32 %v2740, %v3345
        %v3389 = vadd.f32 %v2742, %v3347
        %v3390 = vadd.f32 %v2745, %v3350
        %v3391 = vadd.f32 %v2747, %v3352
        %v3392 = vadd.f32 %v2750, %v3355
        %v3393 = vadd.f32 %v2752, %v3357
        %v3394 = vadd.f32 %v2755, %v3360
        %v3395 = vadd.f32 %v2757, %v3362
        %v3396 = vld [vmem:[%s3] sm:$0x1]
        %v3398 = vperm.slane %v3396, 0
        %v3400 = vadd.f32 %v3364, %v3398
        %v3401 = vadd.f32 %v3365, %v3398
        %v3402 = vadd.f32 %v3366, %v3398
        %v3403 = vadd.f32 %v3367, %v3398
        %v3404 = vadd.f32 %v3368, %v3398
        %v3405 = vadd.f32 %v3369, %v3398
        %v3406 = vadd.f32 %v3370, %v3398
        %v3407 = vadd.f32 %v3371, %v3398
        %v3408 = vadd.f32 %v3372, %v3398
        %v3409 = vadd.f32 %v3373, %v3398
        %v3410 = vadd.f32 %v3374, %v3398
        %v3411 = vadd.f32 %v3375, %v3398
        %v3412 = vadd.f32 %v3376, %v3398
        %v3413 = vadd.f32 %v3377, %v3398
        %v3414 = vadd.f32 %v3378, %v3398
        %v3415 = vadd.f32 %v3379, %v3398
        %v3416 = vadd.f32 %v3380, %v3398
        %v3417 = vadd.f32 %v3381, %v3398
        %v3418 = vadd.f32 %v3382, %v3398
        %v3419 = vadd.f32 %v3383, %v3398
        %v3420 = vadd.f32 %v3384, %v3398
        %v3421 = vadd.f32 %v3385, %v3398
        %v3422 = vadd.f32 %v3386, %v3398
        %v3423 = vadd.f32 %v3387, %v3398
        %v3424 = vadd.f32 %v3388, %v3398
        %v3425 = vadd.f32 %v3389, %v3398
        %v3426 = vadd.f32 %v3390, %v3398
        %v3427 = vadd.f32 %v3391, %v3398
        %v3428 = vadd.f32 %v3392, %v3398
        %v3429 = vadd.f32 %v3393, %v3398
        %v3430 = vadd.f32 %v3394, %v3398
        %v3431 = vadd.f32 %v3395, %v3398
        %v3432 = vmax.f32 %v3400, 0.0
        %v3433 = vmax.f32 %v3401, 0.0
        %v3434 = vmax.f32 %v3402, 0.0
        %v3435 = vmax.f32 %v3403, 0.0
        %v3436 = vmax.f32 %v3404, 0.0
        %v3437 = vmax.f32 %v3405, 0.0
        %v3438 = vmax.f32 %v3406, 0.0
        %v3439 = vmax.f32 %v3407, 0.0
        %v3440 = vmax.f32 %v3408, 0.0
        %v3441 = vmax.f32 %v3409, 0.0
        %v3442 = vmax.f32 %v3410, 0.0
        %v3443 = vmax.f32 %v3411, 0.0
        %v3444 = vmax.f32 %v3412, 0.0
        %v3445 = vmax.f32 %v3413, 0.0
        %v3446 = vmax.f32 %v3414, 0.0
        %v3447 = vmax.f32 %v3415, 0.0
        %v3448 = vmax.f32 %v3416, 0.0
        %v3449 = vmax.f32 %v3417, 0.0
        %v3450 = vmax.f32 %v3418, 0.0
        %v3451 = vmax.f32 %v3419, 0.0
        %v3452 = vmax.f32 %v3420, 0.0
        %v3453 = vmax.f32 %v3421, 0.0
        %v3454 = vmax.f32 %v3422, 0.0
        %v3455 = vmax.f32 %v3423, 0.0
        %v3456 = vmax.f32 %v3424, 0.0
        %v3457 = vmax.f32 %v3425, 0.0
        %v3458 = vmax.f32 %v3426, 0.0
        %v3459 = vmax.f32 %v3427, 0.0
        %v3460 = vmax.f32 %v3428, 0.0
        %v3461 = vmax.f32 %v3429, 0.0
        %v3462 = vmax.f32 %v3430, 0.0
        %v3463 = vmax.f32 %v3431, 0.0
        %3464 = vst [vmem:[%s275] sm:$0xff] %v3432
        %3465 = vst [vmem:[%s275 + $0x8] sm:$0xff] %v3433
        %3466 = vst [vmem:[%s275 + $0x10] sm:$0xff] %v3434
        %3467 = vst [vmem:[%s275 + $0x18] sm:$0xff] %v3435
        %3468 = vst [vmem:[%s275 + $0x20] sm:$0xff] %v3436
        %3469 = vst [vmem:[%s275 + $0x28] sm:$0xff] %v3437
        %3470 = vst [vmem:[%s275 + $0x30] sm:$0xff] %v3438
        %3471 = vst [vmem:[%s275 + $0x38] sm:$0xff] %v3439
        %3472 = vst [vmem:[%s275 + $0x40] sm:$0xff] %v3440
        %3473 = vst [vmem:[%s275 + $0x48] sm:$0xff] %v3441
        %3474 = vst [vmem:[%s275 + $0x50] sm:$0xff] %v3442
        %3475 = vst [vmem:[%s275 + $0x58] sm:$0xff] %v3443
        %3476 = vst [vmem:[%s275 + $0x60] sm:$0xff] %v3444
        %3477 = vst [vmem:[%s275 + $0x68] sm:$0xff] %v3445
        %3478 = vst [vmem:[%s275 + $0x70] sm:$0xff] %v3446
        %3479 = vst [vmem:[%s275 + $0x78] sm:$0xff] %v3447
        %3480 = vst [vmem:[%s275 + $0x80] sm:$0xff] %v3448
        %3481 = vst [vmem:[%s275 + $0x88] sm:$0xff] %v3449
        %3482 = vst [vmem:[%s275 + $0x90] sm:$0xff] %v3450
        %3483 = vst [vmem:[%s275 + $0x98] sm:$0xff] %v3451
        %3484 = vst [vmem:[%s275 + $0xa0] sm:$0xff] %v3452
        %3485 = vst [vmem:[%s275 + $0xa8] sm:$0xff] %v3453
        %3486 = vst [vmem:[%s275 + $0xb0] sm:$0xff] %v3454
        %3487 = vst [vmem:[%s275 + $0xb8] sm:$0xff] %v3455
        %3488 = vst [vmem:[%s275 + $0xc0] sm:$0xff] %v3456
        %3489 = vst [vmem:[%s275 + $0xc8] sm:$0xff] %v3457
        %3490 = vst [vmem:[%s275 + $0xd0] sm:$0xff] %v3458
        %3491 = vst [vmem:[%s275 + $0xd8] sm:$0xff] %v3459
        %3492 = vst [vmem:[%s275 + $0xe0] sm:$0xff] %v3460
        %3493 = vst [vmem:[%s275 + $0xe8] sm:$0xff] %v3461
        %3494 = vst [vmem:[%s275 + $0xf0] sm:$0xff] %v3462
        %3495 = vst [vmem:[%s275 + $0xf8] sm:$0xff] %v3463
        %s3496 = sand.u32 %s126, 1
        %s3497 = scalar_lea.sflag [#allocation5], %s3496
        %s3498 = sand.u32 %s126, 1
        %s3499 = smul.addr %s3498, 256
        %s3500 = scalar_lea.vmem [#allocation9], %s3499
        // Predicated region
        $region49: #{tpu_custom_call.1} parent=35 // pred_check
          %p3501 = pneg %p136
        $region50: #{tpu_custom_call.1} parent=35 // pred_check_branch
          %3503 = sbr.rel (%p3501) target = $region52
        $region51: #{tpu_custom_call.1} parent=35 // pred_region
          %3505 = vsyncadd %s3497, 0
          %s3506 = smul.addr %s24, 32
          %s3507 = smul.addr %s3506, 8
          %s3508 = scalar_lea.hbm %s4, %s3507
          %s3509 = sshll.u32 %s3500, 4
          %s3510 = int_to_ptr.vmem [resolvable:$true] %s3509
          %s3511 = sshll.u32 %s3508, 4
          %s3512 = int_to_ptr.hbm [resolvable:$true] %s3511
          %3517 = dma.vmem_to_hbm [thread:$0]  %s3510, 4096, %s3512, %s3497, 128, 128, 8
        $region52: #{tpu_custom_call.1} parent=35 // pred_fallthru
          _
      $region36: #{tpu_custom_call.1} parent=5 // pred_fallthru
        _
      %p3518 = scmp.le.s32.totalorder 2, %s19
      // Predicated region
      $region53: #{tpu_custom_call.1} parent=5 // pred_check
        %p3519 = pneg %p3518
      $region54: #{tpu_custom_call.1} parent=5 // pred_check_branch
        %3521 = sbr.rel (%p3519) target = $region56
      $region55: #{tpu_custom_call.1} parent=5 // pred_region
        %s3522 = ssub.s32 %s19, 2
        // Predicated region
        $region57: #{tpu_custom_call.1} parent=55 // pred_check
          %p3523 = pneg %p142
        $region58: #{tpu_custom_call.1} parent=55 // pred_check_branch
          %3525 = sbr.rel (%p3523) target = $region60
        $region59: #{tpu_custom_call.1} parent=55 // pred_region
          %s3526 = sand.u32 %s127, 1
          %s3527 = scalar_lea.sflag [#allocation5], %s3526
          %s3528 = sand.u32 %s127, 1
          %s3529 = smul.addr %s3528, 256
          %s3530 = scalar_lea.vmem [#allocation9], %s3529
          %3532 = dma.done %s3527, 4096
        $region60: #{tpu_custom_call.1} parent=55 // pred_fallthru
          _
      $region56: #{tpu_custom_call.1} parent=5 // pred_fallthru
        _
    $region6: #{tpu_custom_call.1} parent=1 // loop_footer
      %s23 = sadd.s32 1, %s19
    $region7: #{tpu_custom_call.1} parent=1 // loop_footer_branch
      %18 = sbr.rel target = $region3
    $region8: #{tpu_custom_call.1} parent=1 // loop_exit
      _
    %3533 = vsyncpa [#allocation4], 1
    %s3534 = scalar_lea.sflag [#allocation4], 1
    %3535 = vsyncpa %s3534, 1
    %3536 = vsyncpa [#allocation7], 1
    %s3537 = scalar_lea.sflag [#allocation7], 1
    %3538 = vsyncpa %s3537, 1
    %3539 = vsyncpa [#allocation5], 1
    %s3540 = scalar_lea.sflag [#allocation5], 1
    %3541 = vsyncpa %s3540, 1

</llo_original>
